<compile_context>
chip_gen: v7x
topology: tpu7x:2x2x1
jax: 0.10.0
libtpu: 0.0.40
codegen_flags: <defaults>
</compile_context>

<pallas_src>
import functools

import jax
import jax.numpy as jnp
from jax.experimental import pallas as pl
from jax.experimental.pallas import tpu as pltpu

OMEGA_0 = 30.0
DELTA_OMEGA_0 = 10.0

_MiB = 1024 * 1024


def _round_up(x, m):
    return ((x + m - 1) // m) * m


def _tpu_vmem_and_cores():
    """(physical VMEM bytes per TensorCore, #TensorCores/chip); safe defaults off-TPU."""
    try:
        info = pltpu.get_tpu_info()
        vmem = int(getattr(info, "vmem_capacity_bytes", 128 * _MiB))
    except Exception:  # not on a TPU device / interpret mode
        vmem = 128 * _MiB
    # v7x exposes 64 MiB VMEM per core and has 2 TensorCores; v5e/v6e: 128 MiB, 1 TC.
    num_tc = 2 if vmem <= 64 * _MiB else 1
    return vmem, num_tc


def chirp_kernel(x_ref, w_ref, b_ref, o_ref, *, omega_0, delta_omega_0, mxu_dtype):
    x = x_ref[...]
    w = w_ref[...]
    if x.dtype != mxu_dtype:
        x = x.astype(mxu_dtype)
    if w.dtype != mxu_dtype:
        w = w.astype(mxu_dtype)
    # y = x @ W + b  (MXU, f32 accumulate; bias is kept f32 in the wrapper)
    y = jnp.dot(x, w, preferred_element_type=jnp.float32) + b_ref[...]
    # chirp nonlinearity (tanh/sin use the EUP slot): sin((w0 + dw0*tanh(w0*y)) * y)
    phase = (omega_0 + delta_omega_0 * jnp.tanh(omega_0 * y)) * y
    o_ref[...] = jnp.sin(phase).astype(o_ref.dtype)


def chirp_layer(x, w, b=None, *, omega_0=OMEGA_0, delta_omega_0=DELTA_OMEGA_0,
                tm_max=2048, matmul_dtype=None):
    """x: (N, K) float, w: (K, D), b: (D,) or None. Returns (N, D) in x.dtype."""
    N, K = x.shape
    Kw, D = w.shape
    assert Kw == K, "weight shape mismatch"

    if not jnp.issubdtype(x.dtype, jnp.floating):
        x = x.astype(jnp.float32)
    out_dtype = x.dtype
    b = jnp.zeros((D,), jnp.float32) if b is None else b.astype(jnp.float32)

    # MXU operand dtype: bf16 for wide hidden layers (MXU-bound in f32 on v6e/v7x),
    # f32 otherwise (omega_0=30 amplifies operand error into the phase).
    if matmul_dtype is None:
        matmul_dtype = jnp.bfloat16 if (K >= 256 and D >= 256) else jnp.float32
    matmul_dtype = jnp.dtype(matmul_dtype)

    # ---- lane-dense output: pad feature dim to a multiple of 128 -------------
    # Padded columns have zero weight/bias -> sin(0) == 0; sliced off at the end.
    D_pad = _round_up(D, 128)
    if D_pad != D:
        w = jnp.pad(w, ((0, 0), (0, D_pad - D)))
        b = jnp.pad(b, (0, D_pad - D))
    b2 = b.reshape(1, D_pad)

    # ---- generation-aware VMEM budget and row-tile selection -----------------
    phys_vmem, num_tc = _tpu_vmem_and_cores()
    vmem_budget = max(8 * _MiB, int(0.4 * phys_vmem))   # ~25 MiB v7x, ~51 MiB v5e/v6e

    x_item = x.dtype.itemsize
    o_item = jnp.dtype(out_dtype).itemsize
    w_item = w.dtype.itemsize
    K_lane = _round_up(K, 128)   # x tile pads its lane dim to 128 in VMEM
    K_sub = _round_up(K, 8)      # weight tile pads its sublane dim to 8

    def vmem_bytes(t):
        t8 = _round_up(t, 8)
        # x/out double-buffered, weight/bias single-buffered (constant index map)
        return (2 * (x_item * t8 * K_lane + o_item * t8 * D_pad)
                + w_item * K_sub * D_pad + 4 * 8 * D_pad)

    # Largest row tile that fits the budget (big tiles amortize ~0.35 us/step
    # overhead and push the x/out DMAs toward the HBM roofline).
    tm = min(tm_max, _round_up(N, 8))
    while tm > 8 and vmem_bytes(tm) > vmem_budget:
        tm = max(8, _round_up(tm // 2, 8))

    # Megacore (v7x): give each TensorCore >= 2 grid steps when N is large
    # enough that split tiles stay >= 256 rows; for smaller N still give each
    # core one tile. Single-TC chips (v5e/v6e) keep the single big tile.
    if num_tc > 1:
        min_steps = 2 * num_tc
        if N >= min_steps * 256:
            tm = min(tm, _round_up(pl.cdiv(N, min_steps), 8))
        elif N >= num_tc * 128:
            tm = min(tm, _round_up(pl.cdiv(N, num_tc), 8))

    # Rebalance: fix the grid, then shrink tm so row padding is < 8 rows.
    grid = pl.cdiv(N, tm)
    tm = _round_up(pl.cdiv(N, grid), 8)
    N_pad = grid * tm
    if N_pad != N:
        x = jnp.pad(x, ((0, N_pad - N), (0, 0)))

    limit_cap = 48 * _MiB if phys_vmem <= 64 * _MiB else 96 * _MiB
    vmem_limit = int(min(limit_cap, max(32 * _MiB, 2 * vmem_bytes(tm))))

    cost = pl.CostEstimate(
        flops=2 * N_pad * K * D_pad,
        transcendentals=2 * N_pad * D_pad,           # tanh + sin per output element
        bytes_accessed=(x_item * N_pad * K + w_item * K * D_pad
                        + 4 * D_pad + o_item * N_pad * D_pad),
    )

    kernel = functools.partial(
        chirp_kernel, omega_0=float(omega_0),
        delta_omega_0=float(delta_omega_0), mxu_dtype=matmul_dtype)

    compiler_params = pltpu.CompilerParams(
        dimension_semantics=("parallel",),
        vmem_limit_bytes=vmem_limit,
    )
    out_shape = jax.ShapeDtypeStruct((N_pad, D_pad), out_dtype)
    out_spec = pl.BlockSpec((tm, D_pad), lambda i: (i, 0))

    def run(tuned_buffers):
        if tuned_buffers:
            # Constant weight/bias blocks: one resident buffer. Narrow x rows
            # on long grids: 3-deep input pipeline to hide low-efficiency DMAs.
            x_pm = (dict(pipeline_mode=pl.Buffered(3))
                    if (K < 128 and grid >= 8) else {})
            in_specs = [
                pl.BlockSpec((tm, K), lambda i: (i, 0), **x_pm),
                pl.BlockSpec((K, D_pad), lambda i: (0, 0),
                             pipeline_mode=pl.Buffered(1)),
                pl.BlockSpec((1, D_pad), lambda i: (0, 0),
                             pipeline_mode=pl.Buffered(1)),
            ]
        else:
            in_specs = [
                pl.BlockSpec((tm, K), lambda i: (i, 0)),
                pl.BlockSpec((K, D_pad), lambda i: (0, 0)),
                pl.BlockSpec((1, D_pad), lambda i: (0, 0)),
            ]
        return pl.pallas_call(
            kernel,
            out_shape=out_shape,
            grid_spec=pltpu.PrefetchScalarGridSpec(
                num_scalar_prefetch=0,
                grid=(grid,),
                in_specs=in_specs,
                out_specs=out_spec,
            ),
            compiler_params=compiler_params,
            cost_estimate=cost,
        )(x, w, b2)

    try:
        out = run(tuned_buffers=True)
    except (TypeError, ValueError, NotImplementedError, pltpu.LoweringException):
        # Narrow fallback for jax builds that reject pipeline_mode buffer tuning;
        # identical semantics with default double-buffering of the constants.
        # NOTE: if this wrapper is traced under an outer jax.jit the compile
        # error surfaces outside this try — call with tuned buffers disabled
        # there, or keep the call un-jitted.
        out = run(tuned_buffers=False)

    return out[:N, :D]


def init_params(key, input_dim, output_dim, is_first_layer=False, omega_0=OMEGA_0):
    """Mirror the PyTorch module's init_weights(); bias keeps torch default init."""
    k_w, k_b = jax.random.split(key)
    if is_first_layer:
        bound_w = 1.0 / input_dim
    else:
        bound_w = (6.0 / input_dim) ** 0.5 / omega_0
    w = jax.random.uniform(k_w, (input_dim, output_dim), jnp.float32,
                           minval=-bound_w, maxval=bound_w)
    bound_b = input_dim ** -0.5
    b = jax.random.uniform(k_b, (output_dim,), jnp.float32,
                           minval=-bound_b, maxval=bound_b)
    return w, b


def reference(x, w, b, omega_0, delta_omega_0):
    y = jnp.dot(x.astype(jnp.float32), w.astype(jnp.float32)) + b
    return jnp.sin((omega_0 + delta_omega_0 * jnp.tanh(omega_0 * y)) * y)


if __name__ == "__main__":
    # Ragged small shapes: exercise both the row padding/rebalancing (N=250)
    # and the lane-dense feature padding (64 -> 128) in the wrapper.
    N, input_dim, output_dim = 250, 32, 64
    key = jax.random.PRNGKey(0)
    k_x, k_p = jax.random.split(key)
    x = jax.random.uniform(k_x, (N, input_dim), jnp.float32, minval=-1.0, maxval=1.0)
    w, b = init_params(k_p, input_dim, output_dim, is_first_layer=True)

    out = chirp_layer(x, w, b, omega_0=OMEGA_0, delta_omega_0=DELTA_OMEGA_0)
    out = jax.block_until_ready(out)

    ref = reference(x, w, b, OMEGA_0, DELTA_OMEGA_0)
    assert out.shape == (N, output_dim)
    assert jnp.allclose(out, ref, atol=2e-5, rtol=2e-5), float(jnp.max(jnp.abs(out - ref)))
    print("KERNEL_OK")
</pallas_src>

<mosaic_0001>
module attributes {stable_mosaic.version = 11 : i64} {
  func.func @chirp_kernel(%arg0: i32, %arg1: memref<256x32xf32, #tpu.memory_space<vmem>>, %arg2: memref<32x128xf32, #tpu.memory_space<vmem>>, %arg3: memref<1x128xf32, #tpu.memory_space<vmem>>, %arg4: memref<256x128xf32, #tpu.memory_space<vmem>>) attributes {dimension_semantics = [#tpu.dimension_semantics<parallel>], iteration_bounds = array<i64: 1>, scalar_prefetch = 0 : i64, scratch_operands = 0 : i64, tpu.core_type = #tpu.core_type<tc>, window_params = [{transform_indices = @transform_0, window_bounds = array<i64: 256, 32>}, {pipeline_mode = #tpu.pipeline_mode<synchronous>, transform_indices = @transform_1, window_bounds = array<i64: 32, 128>}, {pipeline_mode = #tpu.pipeline_mode<synchronous>, transform_indices = @transform_2, window_bounds = array<i64: 1, 128>}, {transform_indices = @transform_3, window_bounds = array<i64: 256, 128>}]} {
    %c0 = arith.constant 0 : index
    %c0_0 = arith.constant 0 : index
    %0 = vector.load %arg1[%c0, %c0_0] : memref<256x32xf32, #tpu.memory_space<vmem>>, vector<256x32xf32>
    %c0_1 = arith.constant 0 : index
    %c0_2 = arith.constant 0 : index
    %1 = vector.load %arg2[%c0_1, %c0_2] : memref<32x128xf32, #tpu.memory_space<vmem>>, vector<32x128xf32>
    %cst = arith.constant dense<0.000000e+00> : vector<256x128xf32>
    %2 = tpu.matmul %0, %1, %cst {dimension_numbers = #tpu.dot_dimension_numbers<[1], [0], [0], [1], [0, 0, 1, 1], [], []>} : vector<256x32xf32>, vector<32x128xf32>, vector<256x128xf32> -> vector<256x128xf32>
    %c0_3 = arith.constant 0 : index
    %c0_4 = arith.constant 0 : index
    %3 = vector.load %arg3[%c0_3, %c0_4] : memref<1x128xf32, #tpu.memory_space<vmem>>, vector<1x128xf32>
    %4 = vector.broadcast %3 : vector<1x128xf32> to vector<256x128xf32>
    %5 = arith.addf %2, %4 : vector<256x128xf32>
    %cst_5 = arith.constant 3.000000e+01 : f32
    %6 = vector.broadcast %cst_5 : f32 to vector<256x128xf32>
    %7 = arith.mulf %6, %5 : vector<256x128xf32>
    %8 = math.tanh %7 : vector<256x128xf32>
    %cst_6 = arith.constant 1.000000e+01 : f32
    %9 = vector.broadcast %cst_6 : f32 to vector<256x128xf32>
    %10 = arith.mulf %9, %8 : vector<256x128xf32>
    %cst_7 = arith.constant 3.000000e+01 : f32
    %11 = vector.broadcast %cst_7 : f32 to vector<256x128xf32>
    %12 = arith.addf %11, %10 : vector<256x128xf32>
    %13 = arith.mulf %12, %5 : vector<256x128xf32>
    %14 = math.sin %13 : vector<256x128xf32>
    %c0_8 = arith.constant 0 : index
    %c0_9 = arith.constant 0 : index
    %15 = vector.load %arg4[%c0_8, %c0_9] : memref<256x128xf32, #tpu.memory_space<vmem>>, vector<256x128xf32>
    tpu.vector_store %arg4[%c0_8, %c0_9], %14 {strides = array<i32>} : memref<256x128xf32, #tpu.memory_space<vmem>>, vector<256x128xf32>,
    return
  }
  func.func @transform_0(%arg0: i32) -> (i32, i32) {
    %c0_i32 = arith.constant 0 : i32
    %c0_i32_0 = arith.constant 0 : i32
    return %arg0, %c0_i32 : i32, i32
  }
  func.func @transform_1(%arg0: i32) -> (i32, i32) {
    %c0_i32 = arith.constant 0 : i32
    %c0_i32_0 = arith.constant 0 : i32
    %c0_i32_1 = arith.constant 0 : i32
    return %c0_i32, %c0_i32_0 : i32, i32
  }
  func.func @transform_2(%arg0: i32) -> (i32, i32) {
    %c0_i32 = arith.constant 0 : i32
    %c0_i32_0 = arith.constant 0 : i32
    %c0_i32_1 = arith.constant 0 : i32
    return %c0_i32, %c0_i32_0 : i32, i32
  }
  func.func @transform_3(%arg0: i32) -> (i32, i32) {
    %c0_i32 = arith.constant 0 : i32
    %c0_i32_0 = arith.constant 0 : i32
    return %arg0, %c0_i32 : i32, i32
  }
}

</mosaic_0001>

<llo_original>
// kernel: tpu_custom_call.1
$region0: #{tpu_custom_call.1}
  #allocation0 [shape = 'u32[]', space=smem, size = 0x4, offset = 0x4, fixed_abs, tag = 'smem constant byte address 0x4 - core index']
  #allocation1 [shape = 'u32[144,128]{1,0:T(1,128)}', space=vmem, size = 0x12000, scoped, tag = 'internal scratch']
  %s0 = inlined_call_operand.vmem [shape: f32[256,32], index: 0, kind: input, shape index: {}]
  %s1 = inlined_call_operand.vmem [shape: f32[32,128], index: 1, kind: input, shape index: {}]
  %s2 = inlined_call_operand.vmem [shape: f32[1,128], index: 2, kind: input, shape index: {}]
  %s3 = inlined_call_operand.hbm [shape: f32[256,128], index: 3, kind: output, shape index: {}]
  %s4 = sld [smem:[#allocation0]]
  $region22: #{tpu_custom_call.1} parent=0
    _
  %s6 = ssub.s32 1, %s4
  %s7 = scalar_select 0, %s6, %s4
  $region1: #{tpu_custom_call.1} parent=0
    #allocation2 [shape = 'u8[131072]{0}', space=vmem, size = 0x20000, scoped, tag = 'output window, operand 0, single buffered']
    #allocation3 [shape = 's32[1]{0}', space=sflag, size = 0x4, scoped, tag = 'scoped memory for tpu_custom_call.1']
    %8 = vsyncpa [#allocation3], 0
    // Predicated region
    $region2: #{tpu_custom_call.1} parent=1 // pred_check
      _
    $region3: #{tpu_custom_call.1} parent=1 // pred_check_branch
      %10 = sbr.rel (0) target = $region5
    $region4: #{tpu_custom_call.1} parent=1 // pred_region
      _
    $region5: #{tpu_custom_call.1} parent=1 // pred_fallthru
      _
    // Predicated region
    $region6: #{tpu_custom_call.1} parent=1 // pred_check
      _
    $region7: #{tpu_custom_call.1} parent=1 // pred_check_branch
      %12 = sbr.rel (0) target = $region9
    $region8: #{tpu_custom_call.1} parent=1 // pred_region
      _
    $region9: #{tpu_custom_call.1} parent=1 // pred_fallthru
      _
    // Predicated region
    $region10: #{tpu_custom_call.1} parent=1 // pred_check
      _
    $region11: #{tpu_custom_call.1} parent=1 // pred_check_branch
      %14 = sbr.rel (0) target = $region13
    $region12: #{tpu_custom_call.1} parent=1 // pred_region
      _
    $region13: #{tpu_custom_call.1} parent=1 // pred_fallthru
      _
    %v15 = vld [vmem:[%s0] sm:$0xff]
    %v16 = vld [vmem:[%s0 + $0x8] sm:$0xff]
    %v17 = vld [vmem:[%s0 + $0x10] sm:$0xff]
    %v18 = vld [vmem:[%s0 + $0x18] sm:$0xff]
    %v19 = vld [vmem:[%s0 + $0x20] sm:$0xff]
    %v20 = vld [vmem:[%s0 + $0x28] sm:$0xff]
    %v21 = vld [vmem:[%s0 + $0x30] sm:$0xff]
    %v22 = vld [vmem:[%s0 + $0x38] sm:$0xff]
    %v23 = vld [vmem:[%s0 + $0x40] sm:$0xff]
    %v24 = vld [vmem:[%s0 + $0x48] sm:$0xff]
    %v25 = vld [vmem:[%s0 + $0x50] sm:$0xff]
    %v26 = vld [vmem:[%s0 + $0x58] sm:$0xff]
    %v27 = vld [vmem:[%s0 + $0x60] sm:$0xff]
    %v28 = vld [vmem:[%s0 + $0x68] sm:$0xff]
    %v29 = vld [vmem:[%s0 + $0x70] sm:$0xff]
    %v30 = vld [vmem:[%s0 + $0x78] sm:$0xff]
    %v31 = vld [vmem:[%s0 + $0x80] sm:$0xff]
    %v32 = vld [vmem:[%s0 + $0x88] sm:$0xff]
    %v33 = vld [vmem:[%s0 + $0x90] sm:$0xff]
    %v34 = vld [vmem:[%s0 + $0x98] sm:$0xff]
    %v35 = vld [vmem:[%s0 + $0xa0] sm:$0xff]
    %v36 = vld [vmem:[%s0 + $0xa8] sm:$0xff]
    %v37 = vld [vmem:[%s0 + $0xb0] sm:$0xff]
    %v38 = vld [vmem:[%s0 + $0xb8] sm:$0xff]
    %v39 = vld [vmem:[%s0 + $0xc0] sm:$0xff]
    %v40 = vld [vmem:[%s0 + $0xc8] sm:$0xff]
    %v41 = vld [vmem:[%s0 + $0xd0] sm:$0xff]
    %v42 = vld [vmem:[%s0 + $0xd8] sm:$0xff]
    %v43 = vld [vmem:[%s0 + $0xe0] sm:$0xff]
    %v44 = vld [vmem:[%s0 + $0xe8] sm:$0xff]
    %v45 = vld [vmem:[%s0 + $0xf0] sm:$0xff]
    %v46 = vld [vmem:[%s0 + $0xf8] sm:$0xff]
    %v47 = vld [vmem:[%s1] sm:$0xff]
    %v48 = vld [vmem:[%s1 + $0x8] sm:$0xff]
    %v49 = vld [vmem:[%s1 + $0x10] sm:$0xff]
    %v50 = vld [vmem:[%s1 + $0x18] sm:$0xff]
    %v51 = vld [vmem:[%s2] sm:$0x1]
    %v53 = vlaneseq
    %v54 = vshrl.u32 %v53, 7
    %v55 = vsub.s32 0, %v54
    %v56 = vrot.slane %v51, %v55
    %vm58 = vcmask 261120
    %v60 = vsel %vm58, %v15, 0
    %v63 = vsel %vm58, %v16, 0
    %v66 = vsel %vm58, %v17, 0
    %v69 = vsel %vm58, %v18, 0
    %v72 = vsel %vm58, %v19, 0
    %v75 = vsel %vm58, %v20, 0
    %v78 = vsel %vm58, %v21, 0
    %v81 = vsel %vm58, %v22, 0
    %v84 = vsel %vm58, %v23, 0
    %v87 = vsel %vm58, %v24, 0
    %v90 = vsel %vm58, %v25, 0
    %v93 = vsel %vm58, %v26, 0
    %v96 = vsel %vm58, %v27, 0
    %v99 = vsel %vm58, %v28, 0
    %v102 = vsel %vm58, %v29, 0
    %v105 = vsel %vm58, %v30, 0
    %v108 = vsel %vm58, %v31, 0
    %v111 = vsel %vm58, %v32, 0
    %v114 = vsel %vm58, %v33, 0
    %v117 = vsel %vm58, %v34, 0
    %v120 = vsel %vm58, %v35, 0
    %v123 = vsel %vm58, %v36, 0
    %v126 = vsel %vm58, %v37, 0
    %v129 = vsel %vm58, %v38, 0
    %v132 = vsel %vm58, %v39, 0
    %v135 = vsel %vm58, %v40, 0
    %v138 = vsel %vm58, %v41, 0
    %v141 = vsel %vm58, %v42, 0
    %v144 = vsel %vm58, %v43, 0
    %v147 = vsel %vm58, %v44, 0
    %v150 = vsel %vm58, %v45, 0
    %v153 = vsel %vm58, %v46, 0
    %155 = vmatprep.subr.mxu0 0.0
    %156 = vmatpush1.msra.mxu0 %v47
    %157 = vmatprep.subr.mxu0 0.0
    %158 = vmatpush1.msra.mxu0 %v48
    %159 = vmatprep.subr.mxu0 0.0
    %160 = vmatpush1.msra.mxu0 %v49
    %161 = vmatprep.subr.mxu0 0.0
    %162 = vmatpush1.msra.mxu0 %v50
    %163 = vmatprep.subr.mxu0 0.0
    %164 = vmatpush1.msra.mxu0 0.0
    %165 = vmatprep.subr.mxu0 0.0
    %166 = vmatpush1.msra.mxu0 0.0
    %167 = vmatprep.subr.mxu0 0.0
    %168 = vmatpush1.msra.mxu0 0.0
    %169 = vmatprep.subr.mxu0 0.0
    %170 = vmatpush1.msra.mxu0 0.0
    %171 = vmatprep.subr.mxu0 0.0
    %172 = vmatpush1.msra.mxu0 0.0
    %173 = vmatprep.subr.mxu0 0.0
    %174 = vmatpush1.msra.mxu0 0.0
    %175 = vmatprep.subr.mxu0 0.0
    %176 = vmatpush1.msra.mxu0 0.0
    %177 = vmatprep.subr.mxu0 0.0
    %178 = vmatpush1.msra.mxu0 0.0
    %179 = vmatprep.subr.mxu0 0.0
    %180 = vmatpush1.msra.mxu0 0.0
    %181 = vmatprep.subr.mxu0 0.0
    %182 = vmatpush1.msra.mxu0 0.0
    %183 = vmatprep.subr.mxu0 0.0
    %184 = vmatpush1.msra.mxu0 0.0
    %185 = vmatprep.subr.mxu0 0.0
    %186 = vmatpush1.msra.mxu0 0.0
    %187 = vmatprep.subr.mxu0 0.0
    %188 = vmatpush1.msra.mxu0 0.0
    %189 = vmatprep.subr.mxu0 0.0
    %190 = vmatpush1.msra.mxu0 0.0
    %191 = vmatprep.subr.mxu0 0.0
    %192 = vmatpush1.msra.mxu0 0.0
    %193 = vmatprep.subr.mxu0 0.0
    %194 = vmatpush1.msra.mxu0 0.0
    %195 = vmatprep.subr.mxu0 0.0
    %196 = vmatpush1.msra.mxu0 0.0
    %197 = vmatprep.subr.mxu0 0.0
    %198 = vmatpush1.msra.mxu0 0.0
    %199 = vmatprep.subr.mxu0 0.0
    %200 = vmatpush1.msra.mxu0 0.0
    %201 = vmatprep.subr.mxu0 0.0
    %202 = vmatpush1.msra.mxu0 0.0
    %203 = vmatprep.subr.mxu0 0.0
    %204 = vmatpush1.msra.mxu0 0.0
    %205 = vmatprep.subr.mxu0 0.0
    %206 = vmatpush1.msra.mxu0 0.0
    %207 = vmatprep.subr.mxu0 0.0
    %208 = vmatpush1.msra.mxu0 0.0
    %209 = vmatprep.subr.mxu0 0.0
    %210 = vmatpush1.msra.mxu0 0.0
    %211 = vmatprep.subr.mxu0 0.0
    %212 = vmatpush1.msra.mxu0 0.0
    %213 = vmatprep.subr.mxu0 0.0
    %214 = vmatpush1.msra.mxu0 0.0
    %215 = vmatprep.subr.mxu0 0.0
    %216 = vmatpush1.msra.mxu0 0.0
    %217 = vmatprep.subr.mxu0 0.0
    %218 = vmatpush1.msra.mxu0 0.0
    %219 = vmatprep.mubr.f32.mxu0 0.0
    %220 = vmatmul.mubr.f32.gmra.mrb[0].mxu0 %v60
    %v221 = vpop.f32.mrb[0].mxu0
    %v222 = vadd.f32 %v56, %v221
    %v223 = vpop.f32.mrb[0].mxu0
    %224 = vmatprep.mubr.f32.mxu0 0.0
    %225 = vmatmul.mubr.f32.gmra.mrb[0].mxu0 %v63
    %v226 = vpop.f32.mrb[0].mxu0
    %v227 = vadd.f32 %v56, %v226
    %v228 = vpop.f32.mrb[0].mxu0
    %229 = vmatprep.mubr.f32.mxu0 0.0
    %230 = vmatmul.mubr.f32.gmra.mrb[0].mxu0 %v66
    %v231 = vpop.f32.mrb[0].mxu0
    %v232 = vadd.f32 %v56, %v231
    %v233 = vpop.f32.mrb[0].mxu0
    %234 = vmatprep.mubr.f32.mxu0 0.0
    %235 = vmatmul.mubr.f32.gmra.mrb[0].mxu0 %v69
    %v236 = vpop.f32.mrb[0].mxu0
    %v237 = vadd.f32 %v56, %v236
    %v238 = vpop.f32.mrb[0].mxu0
    %239 = vmatprep.mubr.f32.mxu0 0.0
    %240 = vmatmul.mubr.f32.gmra.mrb[0].mxu0 %v72
    %v241 = vpop.f32.mrb[0].mxu0
    %v242 = vadd.f32 %v56, %v241
    %v243 = vpop.f32.mrb[0].mxu0
    %244 = vmatprep.mubr.f32.mxu0 0.0
    %245 = vmatmul.mubr.f32.gmra.mrb[0].mxu0 %v75
    %v246 = vpop.f32.mrb[0].mxu0
    %v247 = vadd.f32 %v56, %v246
    %v248 = vpop.f32.mrb[0].mxu0
    %249 = vmatprep.mubr.f32.mxu0 0.0
    %250 = vmatmul.mubr.f32.gmra.mrb[0].mxu0 %v78
    %v251 = vpop.f32.mrb[0].mxu0
    %v252 = vadd.f32 %v56, %v251
    %v253 = vpop.f32.mrb[0].mxu0
    %254 = vmatprep.mubr.f32.mxu0 0.0
    %255 = vmatmul.mubr.f32.gmra.mrb[0].mxu0 %v81
    %v256 = vpop.f32.mrb[0].mxu0
    %v257 = vadd.f32 %v56, %v256
    %v258 = vpop.f32.mrb[0].mxu0
    %259 = vmatprep.mubr.f32.mxu0 0.0
    %260 = vmatmul.mubr.f32.gmra.mrb[0].mxu0 %v84
    %v261 = vpop.f32.mrb[0].mxu0
    %v262 = vadd.f32 %v56, %v261
    %v263 = vpop.f32.mrb[0].mxu0
    %264 = vmatprep.mubr.f32.mxu0 0.0
    %265 = vmatmul.mubr.f32.gmra.mrb[0].mxu0 %v87
    %v266 = vpop.f32.mrb[0].mxu0
    %v267 = vadd.f32 %v56, %v266
    %v268 = vpop.f32.mrb[0].mxu0
    %269 = vmatprep.mubr.f32.mxu0 0.0
    %270 = vmatmul.mubr.f32.gmra.mrb[0].mxu0 %v90
    %v271 = vpop.f32.mrb[0].mxu0
    %v272 = vadd.f32 %v56, %v271
    %v273 = vpop.f32.mrb[0].mxu0
    %274 = vmatprep.mubr.f32.mxu0 0.0
    %275 = vmatmul.mubr.f32.gmra.mrb[0].mxu0 %v93
    %v276 = vpop.f32.mrb[0].mxu0
    %v277 = vadd.f32 %v56, %v276
    %v278 = vpop.f32.mrb[0].mxu0
    %279 = vmatprep.mubr.f32.mxu0 0.0
    %280 = vmatmul.mubr.f32.gmra.mrb[0].mxu0 %v96
    %v281 = vpop.f32.mrb[0].mxu0
    %v282 = vadd.f32 %v56, %v281
    %v283 = vpop.f32.mrb[0].mxu0
    %284 = vmatprep.mubr.f32.mxu0 0.0
    %285 = vmatmul.mubr.f32.gmra.mrb[0].mxu0 %v99
    %v286 = vpop.f32.mrb[0].mxu0
    %v287 = vadd.f32 %v56, %v286
    %v288 = vpop.f32.mrb[0].mxu0
    %289 = vmatprep.mubr.f32.mxu0 0.0
    %290 = vmatmul.mubr.f32.gmra.mrb[0].mxu0 %v102
    %v291 = vpop.f32.mrb[0].mxu0
    %v292 = vadd.f32 %v56, %v291
    %v293 = vpop.f32.mrb[0].mxu0
    %294 = vmatprep.mubr.f32.mxu0 0.0
    %295 = vmatmul.mubr.f32.gmra.mrb[0].mxu0 %v105
    %v296 = vpop.f32.mrb[0].mxu0
    %v297 = vadd.f32 %v56, %v296
    %v298 = vpop.f32.mrb[0].mxu0
    %299 = vmatprep.mubr.f32.mxu0 0.0
    %300 = vmatmul.mubr.f32.gmra.mrb[0].mxu0 %v108
    %v301 = vpop.f32.mrb[0].mxu0
    %v302 = vadd.f32 %v56, %v301
    %v303 = vpop.f32.mrb[0].mxu0
    %304 = vmatprep.mubr.f32.mxu0 0.0
    %305 = vmatmul.mubr.f32.gmra.mrb[0].mxu0 %v111
    %v306 = vpop.f32.mrb[0].mxu0
    %v307 = vadd.f32 %v56, %v306
    %v308 = vpop.f32.mrb[0].mxu0
    %309 = vmatprep.mubr.f32.mxu0 0.0
    %310 = vmatmul.mubr.f32.gmra.mrb[0].mxu0 %v114
    %v311 = vpop.f32.mrb[0].mxu0
    %v312 = vadd.f32 %v56, %v311
    %v313 = vpop.f32.mrb[0].mxu0
    %314 = vmatprep.mubr.f32.mxu0 0.0
    %315 = vmatmul.mubr.f32.gmra.mrb[0].mxu0 %v117
    %v316 = vpop.f32.mrb[0].mxu0
    %v317 = vadd.f32 %v56, %v316
    %v318 = vpop.f32.mrb[0].mxu0
    %319 = vmatprep.mubr.f32.mxu0 0.0
    %320 = vmatmul.mubr.f32.gmra.mrb[0].mxu0 %v120
    %v321 = vpop.f32.mrb[0].mxu0
    %v322 = vadd.f32 %v56, %v321
    %v323 = vpop.f32.mrb[0].mxu0
    %324 = vmatprep.mubr.f32.mxu0 0.0
    %325 = vmatmul.mubr.f32.gmra.mrb[0].mxu0 %v123
    %v326 = vpop.f32.mrb[0].mxu0
    %v327 = vadd.f32 %v56, %v326
    %v328 = vpop.f32.mrb[0].mxu0
    %329 = vmatprep.mubr.f32.mxu0 0.0
    %330 = vmatmul.mubr.f32.gmra.mrb[0].mxu0 %v126
    %v331 = vpop.f32.mrb[0].mxu0
    %v332 = vadd.f32 %v56, %v331
    %v333 = vpop.f32.mrb[0].mxu0
    %334 = vmatprep.mubr.f32.mxu0 0.0
    %335 = vmatmul.mubr.f32.gmra.mrb[0].mxu0 %v129
    %v336 = vpop.f32.mrb[0].mxu0
    %v337 = vadd.f32 %v56, %v336
    %v338 = vpop.f32.mrb[0].mxu0
    %339 = vmatprep.mubr.f32.mxu0 0.0
    %340 = vmatmul.mubr.f32.gmra.mrb[0].mxu0 %v132
    %v341 = vpop.f32.mrb[0].mxu0
    %v342 = vadd.f32 %v56, %v341
    %v343 = vpop.f32.mrb[0].mxu0
    %344 = vmatprep.mubr.f32.mxu0 0.0
    %345 = vmatmul.mubr.f32.gmra.mrb[0].mxu0 %v135
    %v346 = vpop.f32.mrb[0].mxu0
    %v347 = vadd.f32 %v56, %v346
    %v348 = vpop.f32.mrb[0].mxu0
    %349 = vmatprep.mubr.f32.mxu0 0.0
    %350 = vmatmul.mubr.f32.gmra.mrb[0].mxu0 %v138
    %v351 = vpop.f32.mrb[0].mxu0
    %v352 = vadd.f32 %v56, %v351
    %v353 = vpop.f32.mrb[0].mxu0
    %354 = vmatprep.mubr.f32.mxu0 0.0
    %355 = vmatmul.mubr.f32.gmra.mrb[0].mxu0 %v141
    %v356 = vpop.f32.mrb[0].mxu0
    %v357 = vadd.f32 %v56, %v356
    %v358 = vpop.f32.mrb[0].mxu0
    %359 = vmatprep.mubr.f32.mxu0 0.0
    %360 = vmatmul.mubr.f32.gmra.mrb[0].mxu0 %v144
    %v361 = vpop.f32.mrb[0].mxu0
    %v362 = vadd.f32 %v56, %v361
    %v363 = vpop.f32.mrb[0].mxu0
    %364 = vmatprep.mubr.f32.mxu0 0.0
    %365 = vmatmul.mubr.f32.gmra.mrb[0].mxu0 %v147
    %v366 = vpop.f32.mrb[0].mxu0
    %v367 = vadd.f32 %v56, %v366
    %v368 = vpop.f32.mrb[0].mxu0
    %369 = vmatprep.mubr.f32.mxu0 0.0
    %370 = vmatmul.mubr.f32.gmra.mrb[0].mxu0 %v150
    %v371 = vpop.f32.mrb[0].mxu0
    %v372 = vadd.f32 %v56, %v371
    %v373 = vpop.f32.mrb[0].mxu0
    %374 = vmatprep.mubr.f32.mxu0 0.0
    %375 = vmatmul.mubr.f32.gmra.mrb[0].mxu0 %v153
    %v376 = vpop.f32.mrb[0].mxu0
    %v377 = vadd.f32 %v56, %v376
    %v378 = vpop.f32.mrb[0].mxu0
    %379 = vdwg.mxu0
    %v380 = vmul.f32 %v222, 30.0
    %v381 = vmul.f32 %v227, 30.0
    %v382 = vmul.f32 %v232, 30.0
    %v383 = vmul.f32 %v237, 30.0
    %v384 = vmul.f32 %v242, 30.0
    %v385 = vmul.f32 %v247, 30.0
    %v386 = vmul.f32 %v252, 30.0
    %v387 = vmul.f32 %v257, 30.0
    %v388 = vmul.f32 %v262, 30.0
    %v389 = vmul.f32 %v267, 30.0
    %v390 = vmul.f32 %v272, 30.0
    %v391 = vmul.f32 %v277, 30.0
    %v392 = vmul.f32 %v282, 30.0
    %v393 = vmul.f32 %v287, 30.0
    %v394 = vmul.f32 %v292, 30.0
    %v395 = vmul.f32 %v297, 30.0
    %v396 = vmul.f32 %v302, 30.0
    %v397 = vmul.f32 %v307, 30.0
    %v398 = vmul.f32 %v312, 30.0
    %v399 = vmul.f32 %v317, 30.0
    %v400 = vmul.f32 %v322, 30.0
    %v401 = vmul.f32 %v327, 30.0
    %v402 = vmul.f32 %v332, 30.0
    %v403 = vmul.f32 %v337, 30.0
    %v404 = vmul.f32 %v342, 30.0
    %v405 = vmul.f32 %v347, 30.0
    %v406 = vmul.f32 %v352, 30.0
    %v407 = vmul.f32 %v357, 30.0
    %v408 = vmul.f32 %v362, 30.0
    %v409 = vmul.f32 %v367, 30.0
    %v410 = vmul.f32 %v372, 30.0
    %v411 = vmul.f32 %v377, 30.0
    %v412 = vtanh.pop %v380
    %v413 = vtanh.pop %v381
    %v414 = vtanh.pop %v382
    %v415 = vtanh.pop %v383
    %v416 = vtanh.pop %v384
    %v417 = vtanh.pop %v385
    %v418 = vtanh.pop %v386
    %v419 = vtanh.pop %v387
    %v420 = vtanh.pop %v388
    %v421 = vtanh.pop %v389
    %v422 = vtanh.pop %v390
    %v423 = vtanh.pop %v391
    %v424 = vtanh.pop %v392
    %v425 = vtanh.pop %v393
    %v426 = vtanh.pop %v394
    %v427 = vtanh.pop %v395
    %v428 = vtanh.pop %v396
    %v429 = vtanh.pop %v397
    %v430 = vtanh.pop %v398
    %v431 = vtanh.pop %v399
    %v432 = vtanh.pop %v400
    %v433 = vtanh.pop %v401
    %v434 = vtanh.pop %v402
    %v435 = vtanh.pop %v403
    %v436 = vtanh.pop %v404
    %v437 = vtanh.pop %v405
    %v438 = vtanh.pop %v406
    %v439 = vtanh.pop %v407
    %v440 = vtanh.pop %v408
    %v441 = vtanh.pop %v409
    %v442 = vtanh.pop %v410
    %v443 = vtanh.pop %v411
    %v444 = vmul.f32 %v412, 10.0
    %v445 = vmul.f32 %v413, 10.0
    %v446 = vmul.f32 %v414, 10.0
    %v447 = vmul.f32 %v415, 10.0
    %v448 = vmul.f32 %v416, 10.0
    %v449 = vmul.f32 %v417, 10.0
    %v450 = vmul.f32 %v418, 10.0
    %v451 = vmul.f32 %v419, 10.0
    %v452 = vmul.f32 %v420, 10.0
    %v453 = vmul.f32 %v421, 10.0
    %v454 = vmul.f32 %v422, 10.0
    %v455 = vmul.f32 %v423, 10.0
    %v456 = vmul.f32 %v424, 10.0
    %v457 = vmul.f32 %v425, 10.0
    %v458 = vmul.f32 %v426, 10.0
    %v459 = vmul.f32 %v427, 10.0
    %v460 = vmul.f32 %v428, 10.0
    %v461 = vmul.f32 %v429, 10.0
    %v462 = vmul.f32 %v430, 10.0
    %v463 = vmul.f32 %v431, 10.0
    %v464 = vmul.f32 %v432, 10.0
    %v465 = vmul.f32 %v433, 10.0
    %v466 = vmul.f32 %v434, 10.0
    %v467 = vmul.f32 %v435, 10.0
    %v468 = vmul.f32 %v436, 10.0
    %v469 = vmul.f32 %v437, 10.0
    %v470 = vmul.f32 %v438, 10.0
    %v471 = vmul.f32 %v439, 10.0
    %v472 = vmul.f32 %v440, 10.0
    %v473 = vmul.f32 %v441, 10.0
    %v474 = vmul.f32 %v442, 10.0
    %v475 = vmul.f32 %v443, 10.0
    %v476 = vadd.f32 %v444, 30.0
    %v477 = vadd.f32 %v445, 30.0
    %v478 = vadd.f32 %v446, 30.0
    %v479 = vadd.f32 %v447, 30.0
    %v480 = vadd.f32 %v448, 30.0
    %v481 = vadd.f32 %v449, 30.0
    %v482 = vadd.f32 %v450, 30.0
    %v483 = vadd.f32 %v451, 30.0
    %v484 = vadd.f32 %v452, 30.0
    %v485 = vadd.f32 %v453, 30.0
    %v486 = vadd.f32 %v454, 30.0
    %v487 = vadd.f32 %v455, 30.0
    %v488 = vadd.f32 %v456, 30.0
    %v489 = vadd.f32 %v457, 30.0
    %v490 = vadd.f32 %v458, 30.0
    %v491 = vadd.f32 %v459, 30.0
    %v492 = vadd.f32 %v460, 30.0
    %v493 = vadd.f32 %v461, 30.0
    %v494 = vadd.f32 %v462, 30.0
    %v495 = vadd.f32 %v463, 30.0
    %v496 = vadd.f32 %v464, 30.0
    %v497 = vadd.f32 %v465, 30.0
    %v498 = vadd.f32 %v466, 30.0
    %v499 = vadd.f32 %v467, 30.0
    %v500 = vadd.f32 %v468, 30.0
    %v501 = vadd.f32 %v469, 30.0
    %v502 = vadd.f32 %v470, 30.0
    %v503 = vadd.f32 %v471, 30.0
    %v504 = vadd.f32 %v472, 30.0
    %v505 = vadd.f32 %v473, 30.0
    %v506 = vadd.f32 %v474, 30.0
    %v507 = vadd.f32 %v475, 30.0
    %v508 = vmul.f32 %v476, %v222
    %v509 = vmul.f32 %v477, %v227
    %v510 = vmul.f32 %v478, %v232
    %v511 = vmul.f32 %v479, %v237
    %v512 = vmul.f32 %v480, %v242
    %v513 = vmul.f32 %v481, %v247
    %v514 = vmul.f32 %v482, %v252
    %v515 = vmul.f32 %v483, %v257
    %v516 = vmul.f32 %v484, %v262
    %v517 = vmul.f32 %v485, %v267
    %v518 = vmul.f32 %v486, %v272
    %v519 = vmul.f32 %v487, %v277
    %v520 = vmul.f32 %v488, %v282
    %v521 = vmul.f32 %v489, %v287
    %v522 = vmul.f32 %v490, %v292
    %v523 = vmul.f32 %v491, %v297
    %v524 = vmul.f32 %v492, %v302
    %v525 = vmul.f32 %v493, %v307
    %v526 = vmul.f32 %v494, %v312
    %v527 = vmul.f32 %v495, %v317
    %v528 = vmul.f32 %v496, %v322
    %v529 = vmul.f32 %v497, %v327
    %v530 = vmul.f32 %v498, %v332
    %v531 = vmul.f32 %v499, %v337
    %v532 = vmul.f32 %v500, %v342
    %v533 = vmul.f32 %v501, %v347
    %v534 = vmul.f32 %v502, %v352
    %v535 = vmul.f32 %v503, %v357
    %v536 = vmul.f32 %v504, %v362
    %v537 = vmul.f32 %v505, %v367
    %v538 = vmul.f32 %v506, %v372
    %v539 = vmul.f32 %v507, %v377
    %v540 = vand.u32 2147483647, %v508
    %vm541 = vcmp.le.f32.partialorder %v540, 0.7853982
    %vm542 = vcmp.lt.s32.totalorder %v508, 0
    %v543 = vand.u32 %v508, 2139095040
    %v544 = vshrl.u32 %v543, 23
    %v545 = vsub.s32 %v544, 127
    %v546 = vand.u32 2147483647, %v508
    %v547 = vand.u32 %v546, 8388607
    %v548 = vor.u32 %v547, 8388608
    %v549 = vsub.s32 0, %v548
    %v550 = vadd.s32 %v545, 1
    %vm551 = vcmp.gt.s32.totalorder %v550, 0
    %v552 = vsel %vm551, %v550, 0
    %v553 = vshrl.u32 %v552, 5
    %v554 = vand.u32 %v552, 31
    %v555 = vsub.s32 32, %v554
    %v556 = vshrl.u32 683565275, %v555
    %v557 = vshll.u32 683565275, %v554
    %v558 = vshrl.u32 2475754826, %v555
    %v559 = vor.u32 %v557, %v558
    %v560 = vshll.u32 2475754826, %v554
    %v561 = vshrl.u32 2131351028, %v555
    %v562 = vor.u32 %v560, %v561
    %v563 = vshll.u32 2131351028, %v554
    %v564 = vshrl.u32 2102212464, %v555
    %v565 = vor.u32 %v563, %v564
    %v566 = vshll.u32 2102212464, %v554
    %v567 = vshrl.u32 920167782, %v555
    %v568 = vor.u32 %v566, %v567
    %v569 = vshll.u32 920167782, %v554
    %v570 = vshrl.u32 1326507024, %v555
    %v571 = vor.u32 %v569, %v570
    %vm572 = vcmp.lt.s32.totalorder %v553, 1
    %vm573 = vcmp.lt.s32.totalorder %v553, 2
    %vm574 = vcmp.lt.s32.totalorder %v553, 3
    %vm575 = vcmp.lt.s32.totalorder %v553, 4
    %v576 = vsel %vm572, %v556, %v559
    %v577 = vsel %vm575, %v565, 2102212464
    %v578 = vsel %vm574, %v562, %v577
    %v579 = vsel %vm573, %v576, %v578
    %v580 = vsel %vm572, %v559, %v562
    %v581 = vsel %vm575, %v568, 920167782
    %v582 = vsel %vm574, %v565, %v581
    %v583 = vsel %vm573, %v580, %v582
    %v584 = vsel %vm572, %v562, %v565
    %v585 = vsel %vm575, %v571, 1326507024
    %v586 = vsel %vm574, %v568, %v585
    %v587 = vsel %vm573, %v584, %v586
    %v588 = vshll.u32 %v548, 8
    %v589 = vmul.u32.u64.compose %v588, %v587
    %v590 = vextract.low.u32 %v589
    %v591 = vextract.high.u32 %v589
    %v592 = vmul.u32.u64.compose %v588, %v583
    %v593 = vextract.low.u32 %v592
    %v594 = vextract.high.u32 %v592
    %v595 = vmul.u32 %v588, %v579
    %v596 = vadd.s32 %v591, %v593
    %vm597 = vc.u32 %v591, %v593
    %v598 = vadd.s32 %v594, 1
    %v599 = vsel %vm597, %v598, %v594
    %v600 = vadd.s32 %v595, %v599
    %v601 = vadd.s32 %v600, 536870912
    %v602 = vshrl.u32 %v601, 30
    %v603 = vshll.u32 %v602, 30
    %v604 = vsub.s32 %v600, %v603
    %vm605 = vcmp.lt.s32.totalorder %v604, 0
    %v606 = vsub.s32 0, %v604
    %v607 = vsel %vm605, %v606, %v604
    %v608 = vclz %v607
    %v609 = vsub.s32 %v608, 2
    %vm610 = vcmp.gt.s32.totalorder 0, %v609
    %v611 = vsel %vm610, 0, %v609
    %v612 = vsub.s32 32, %v611
    %v613 = vshll.u32 %v604, %v611
    %v614 = vshrl.u32 %v596, %v612
    %v615 = vor.u32 %v613, %v614
    %v616 = vsub.s32 4294967266, %v611
    %v617 = vadd.s32 %v616, 127
    %v618 = vshll.u32 %v617, 23
    %v619 = vor.u32 4788187, %v618
    %v620 = vand.u32 2147483647, %v619
    %v622 = vcvt.s32.f32 %v615
    %v623 = vmul.f32 %v622, %v620
    %v624 = vxor.u32 %v623, 2147483648
    %v625 = vsel %vm542, %v624, %v623
    %v626 = vsub.s32 4, %v602
    %v627 = vsel %vm542, %v626, %v602
    %v628 = vsel %vm541, %v508, %v625
    %v629 = vsel %vm541, 0, %v627
    %v630 = vcosq.f32.pop %v628
    %v631 = vsinq.f32.pop %v628
    %vm632 = vweird.f32 %v508
    %v633 = vadd.s32 %v629, 3
    %v634 = vand.u32 %v633, 3
    %vm635 = vcmp.lt.s32.totalorder %v634, 2
    %vm636 = vcmp.eq.s32.totalorder %v634, 0
    %v637 = vxor.u32 %v631, 2147483648
    %v638 = vsel %vm636, %v630, %v637
    %vm639 = vcmp.eq.s32.totalorder %v634, 2
    %v640 = vxor.u32 %v630, 2147483648
    %v641 = vsel %vm639, %v640, %v631
    %v642 = vsel %vm635, %v638, %v641
    %v643 = vsel %vm632, nan, %v642
    %v644 = vand.u32 2147483647, %v509
    %vm645 = vcmp.le.f32.partialorder %v644, 0.7853982
    %vm646 = vcmp.lt.s32.totalorder %v509, 0
    %v647 = vand.u32 %v509, 2139095040
    %v648 = vshrl.u32 %v647, 23
    %v649 = vsub.s32 %v648, 127
    %v650 = vand.u32 2147483647, %v509
    %v651 = vand.u32 %v650, 8388607
    %v652 = vor.u32 %v651, 8388608
    %v653 = vsub.s32 0, %v652
    %v654 = vadd.s32 %v649, 1
    %vm655 = vcmp.gt.s32.totalorder %v654, 0
    %v656 = vsel %vm655, %v654, 0
    %v657 = vshrl.u32 %v656, 5
    %v658 = vand.u32 %v656, 31
    %v659 = vsub.s32 32, %v658
    %v660 = vshrl.u32 683565275, %v659
    %v661 = vshll.u32 683565275, %v658
    %v662 = vshrl.u32 2475754826, %v659
    %v663 = vor.u32 %v661, %v662
    %v664 = vshll.u32 2475754826, %v658
    %v665 = vshrl.u32 2131351028, %v659
    %v666 = vor.u32 %v664, %v665
    %v667 = vshll.u32 2131351028, %v658
    %v668 = vshrl.u32 2102212464, %v659
    %v669 = vor.u32 %v667, %v668
    %v670 = vshll.u32 2102212464, %v658
    %v671 = vshrl.u32 920167782, %v659
    %v672 = vor.u32 %v670, %v671
    %v673 = vshll.u32 920167782, %v658
    %v674 = vshrl.u32 1326507024, %v659
    %v675 = vor.u32 %v673, %v674
    %vm676 = vcmp.lt.s32.totalorder %v657, 1
    %vm677 = vcmp.lt.s32.totalorder %v657, 2
    %vm678 = vcmp.lt.s32.totalorder %v657, 3
    %vm679 = vcmp.lt.s32.totalorder %v657, 4
    %v680 = vsel %vm676, %v660, %v663
    %v681 = vsel %vm679, %v669, 2102212464
    %v682 = vsel %vm678, %v666, %v681
    %v683 = vsel %vm677, %v680, %v682
    %v684 = vsel %vm676, %v663, %v666
    %v685 = vsel %vm679, %v672, 920167782
    %v686 = vsel %vm678, %v669, %v685
    %v687 = vsel %vm677, %v684, %v686
    %v688 = vsel %vm676, %v666, %v669
    %v689 = vsel %vm679, %v675, 1326507024
    %v690 = vsel %vm678, %v672, %v689
    %v691 = vsel %vm677, %v688, %v690
    %v692 = vshll.u32 %v652, 8
    %v693 = vmul.u32.u64.compose %v692, %v691
    %v694 = vextract.low.u32 %v693
    %v695 = vextract.high.u32 %v693
    %v696 = vmul.u32.u64.compose %v692, %v687
    %v697 = vextract.low.u32 %v696
    %v698 = vextract.high.u32 %v696
    %v699 = vmul.u32 %v692, %v683
    %v700 = vadd.s32 %v695, %v697
    %vm701 = vc.u32 %v695, %v697
    %v702 = vadd.s32 %v698, 1
    %v703 = vsel %vm701, %v702, %v698
    %v704 = vadd.s32 %v699, %v703
    %v705 = vadd.s32 %v704, 536870912
    %v706 = vshrl.u32 %v705, 30
    %v707 = vshll.u32 %v706, 30
    %v708 = vsub.s32 %v704, %v707
    %vm709 = vcmp.lt.s32.totalorder %v708, 0
    %v710 = vsub.s32 0, %v708
    %v711 = vsel %vm709, %v710, %v708
    %v712 = vclz %v711
    %v713 = vsub.s32 %v712, 2
    %vm714 = vcmp.gt.s32.totalorder 0, %v713
    %v715 = vsel %vm714, 0, %v713
    %v716 = vsub.s32 32, %v715
    %v717 = vshll.u32 %v708, %v715
    %v718 = vshrl.u32 %v700, %v716
    %v719 = vor.u32 %v717, %v718
    %v720 = vsub.s32 4294967266, %v715
    %v721 = vadd.s32 %v720, 127
    %v722 = vshll.u32 %v721, 23
    %v723 = vor.u32 4788187, %v722
    %v724 = vand.u32 2147483647, %v723
    %v726 = vcvt.s32.f32 %v719
    %v727 = vmul.f32 %v726, %v724
    %v728 = vxor.u32 %v727, 2147483648
    %v729 = vsel %vm646, %v728, %v727
    %v730 = vsub.s32 4, %v706
    %v731 = vsel %vm646, %v730, %v706
    %v732 = vsel %vm645, %v509, %v729
    %v733 = vsel %vm645, 0, %v731
    %v734 = vcosq.f32.pop %v732
    %v735 = vsinq.f32.pop %v732
    %vm736 = vweird.f32 %v509
    %v737 = vadd.s32 %v733, 3
    %v738 = vand.u32 %v737, 3
    %vm739 = vcmp.lt.s32.totalorder %v738, 2
    %vm740 = vcmp.eq.s32.totalorder %v738, 0
    %v741 = vxor.u32 %v735, 2147483648
    %v742 = vsel %vm740, %v734, %v741
    %vm743 = vcmp.eq.s32.totalorder %v738, 2
    %v744 = vxor.u32 %v734, 2147483648
    %v745 = vsel %vm743, %v744, %v735
    %v746 = vsel %vm739, %v742, %v745
    %v747 = vsel %vm736, nan, %v746
    %v748 = vand.u32 2147483647, %v510
    %vm749 = vcmp.le.f32.partialorder %v748, 0.7853982
    %vm750 = vcmp.lt.s32.totalorder %v510, 0
    %v751 = vand.u32 %v510, 2139095040
    %v752 = vshrl.u32 %v751, 23
    %v753 = vsub.s32 %v752, 127
    %v754 = vand.u32 2147483647, %v510
    %v755 = vand.u32 %v754, 8388607
    %v756 = vor.u32 %v755, 8388608
    %v757 = vsub.s32 0, %v756
    %v758 = vadd.s32 %v753, 1
    %vm759 = vcmp.gt.s32.totalorder %v758, 0
    %v760 = vsel %vm759, %v758, 0
    %v761 = vshrl.u32 %v760, 5
    %v762 = vand.u32 %v760, 31
    %v763 = vsub.s32 32, %v762
    %v764 = vshrl.u32 683565275, %v763
    %v765 = vshll.u32 683565275, %v762
    %v766 = vshrl.u32 2475754826, %v763
    %v767 = vor.u32 %v765, %v766
    %v768 = vshll.u32 2475754826, %v762
    %v769 = vshrl.u32 2131351028, %v763
    %v770 = vor.u32 %v768, %v769
    %v771 = vshll.u32 2131351028, %v762
    %v772 = vshrl.u32 2102212464, %v763
    %v773 = vor.u32 %v771, %v772
    %v774 = vshll.u32 2102212464, %v762
    %v775 = vshrl.u32 920167782, %v763
    %v776 = vor.u32 %v774, %v775
    %v777 = vshll.u32 920167782, %v762
    %v778 = vshrl.u32 1326507024, %v763
    %v779 = vor.u32 %v777, %v778
    %vm780 = vcmp.lt.s32.totalorder %v761, 1
    %vm781 = vcmp.lt.s32.totalorder %v761, 2
    %vm782 = vcmp.lt.s32.totalorder %v761, 3
    %vm783 = vcmp.lt.s32.totalorder %v761, 4
    %v784 = vsel %vm780, %v764, %v767
    %v785 = vsel %vm783, %v773, 2102212464
    %v786 = vsel %vm782, %v770, %v785
    %v787 = vsel %vm781, %v784, %v786
    %v788 = vsel %vm780, %v767, %v770
    %v789 = vsel %vm783, %v776, 920167782
    %v790 = vsel %vm782, %v773, %v789
    %v791 = vsel %vm781, %v788, %v790
    %v792 = vsel %vm780, %v770, %v773
    %v793 = vsel %vm783, %v779, 1326507024
    %v794 = vsel %vm782, %v776, %v793
    %v795 = vsel %vm781, %v792, %v794
    %v796 = vshll.u32 %v756, 8
    %v797 = vmul.u32.u64.compose %v796, %v795
    %v798 = vextract.low.u32 %v797
    %v799 = vextract.high.u32 %v797
    %v800 = vmul.u32.u64.compose %v796, %v791
    %v801 = vextract.low.u32 %v800
    %v802 = vextract.high.u32 %v800
    %v803 = vmul.u32 %v796, %v787
    %v804 = vadd.s32 %v799, %v801
    %vm805 = vc.u32 %v799, %v801
    %v806 = vadd.s32 %v802, 1
    %v807 = vsel %vm805, %v806, %v802
    %v808 = vadd.s32 %v803, %v807
    %v809 = vadd.s32 %v808, 536870912
    %v810 = vshrl.u32 %v809, 30
    %v811 = vshll.u32 %v810, 30
    %v812 = vsub.s32 %v808, %v811
    %vm813 = vcmp.lt.s32.totalorder %v812, 0
    %v814 = vsub.s32 0, %v812
    %v815 = vsel %vm813, %v814, %v812
    %v816 = vclz %v815
    %v817 = vsub.s32 %v816, 2
    %vm818 = vcmp.gt.s32.totalorder 0, %v817
    %v819 = vsel %vm818, 0, %v817
    %v820 = vsub.s32 32, %v819
    %v821 = vshll.u32 %v812, %v819
    %v822 = vshrl.u32 %v804, %v820
    %v823 = vor.u32 %v821, %v822
    %v824 = vsub.s32 4294967266, %v819
    %v825 = vadd.s32 %v824, 127
    %v826 = vshll.u32 %v825, 23
    %v827 = vor.u32 4788187, %v826
    %v828 = vand.u32 2147483647, %v827
    %v830 = vcvt.s32.f32 %v823
    %v831 = vmul.f32 %v830, %v828
    %v832 = vxor.u32 %v831, 2147483648
    %v833 = vsel %vm750, %v832, %v831
    %v834 = vsub.s32 4, %v810
    %v835 = vsel %vm750, %v834, %v810
    %v836 = vsel %vm749, %v510, %v833
    %v837 = vsel %vm749, 0, %v835
    %v838 = vcosq.f32.pop %v836
    %v839 = vsinq.f32.pop %v836
    %vm840 = vweird.f32 %v510
    %v841 = vadd.s32 %v837, 3
    %v842 = vand.u32 %v841, 3
    %vm843 = vcmp.lt.s32.totalorder %v842, 2
    %vm844 = vcmp.eq.s32.totalorder %v842, 0
    %v845 = vxor.u32 %v839, 2147483648
    %v846 = vsel %vm844, %v838, %v845
    %vm847 = vcmp.eq.s32.totalorder %v842, 2
    %v848 = vxor.u32 %v838, 2147483648
    %v849 = vsel %vm847, %v848, %v839
    %v850 = vsel %vm843, %v846, %v849
    %v851 = vsel %vm840, nan, %v850
    %v852 = vand.u32 2147483647, %v511
    %vm853 = vcmp.le.f32.partialorder %v852, 0.7853982
    %vm854 = vcmp.lt.s32.totalorder %v511, 0
    %v855 = vand.u32 %v511, 2139095040
    %v856 = vshrl.u32 %v855, 23
    %v857 = vsub.s32 %v856, 127
    %v858 = vand.u32 2147483647, %v511
    %v859 = vand.u32 %v858, 8388607
    %v860 = vor.u32 %v859, 8388608
    %v861 = vsub.s32 0, %v860
    %v862 = vadd.s32 %v857, 1
    %vm863 = vcmp.gt.s32.totalorder %v862, 0
    %v864 = vsel %vm863, %v862, 0
    %v865 = vshrl.u32 %v864, 5
    %v866 = vand.u32 %v864, 31
    %v867 = vsub.s32 32, %v866
    %v868 = vshrl.u32 683565275, %v867
    %v869 = vshll.u32 683565275, %v866
    %v870 = vshrl.u32 2475754826, %v867
    %v871 = vor.u32 %v869, %v870
    %v872 = vshll.u32 2475754826, %v866
    %v873 = vshrl.u32 2131351028, %v867
    %v874 = vor.u32 %v872, %v873
    %v875 = vshll.u32 2131351028, %v866
    %v876 = vshrl.u32 2102212464, %v867
    %v877 = vor.u32 %v875, %v876
    %v878 = vshll.u32 2102212464, %v866
    %v879 = vshrl.u32 920167782, %v867
    %v880 = vor.u32 %v878, %v879
    %v881 = vshll.u32 920167782, %v866
    %v882 = vshrl.u32 1326507024, %v867
    %v883 = vor.u32 %v881, %v882
    %vm884 = vcmp.lt.s32.totalorder %v865, 1
    %vm885 = vcmp.lt.s32.totalorder %v865, 2
    %vm886 = vcmp.lt.s32.totalorder %v865, 3
    %vm887 = vcmp.lt.s32.totalorder %v865, 4
    %v888 = vsel %vm884, %v868, %v871
    %v889 = vsel %vm887, %v877, 2102212464
    %v890 = vsel %vm886, %v874, %v889
    %v891 = vsel %vm885, %v888, %v890
    %v892 = vsel %vm884, %v871, %v874
    %v893 = vsel %vm887, %v880, 920167782
    %v894 = vsel %vm886, %v877, %v893
    %v895 = vsel %vm885, %v892, %v894
    %v896 = vsel %vm884, %v874, %v877
    %v897 = vsel %vm887, %v883, 1326507024
    %v898 = vsel %vm886, %v880, %v897
    %v899 = vsel %vm885, %v896, %v898
    %v900 = vshll.u32 %v860, 8
    %v901 = vmul.u32.u64.compose %v900, %v899
    %v902 = vextract.low.u32 %v901
    %v903 = vextract.high.u32 %v901
    %v904 = vmul.u32.u64.compose %v900, %v895
    %v905 = vextract.low.u32 %v904
    %v906 = vextract.high.u32 %v904
    %v907 = vmul.u32 %v900, %v891
    %v908 = vadd.s32 %v903, %v905
    %vm909 = vc.u32 %v903, %v905
    %v910 = vadd.s32 %v906, 1
    %v911 = vsel %vm909, %v910, %v906
    %v912 = vadd.s32 %v907, %v911
    %v913 = vadd.s32 %v912, 536870912
    %v914 = vshrl.u32 %v913, 30
    %v915 = vshll.u32 %v914, 30
    %v916 = vsub.s32 %v912, %v915
    %vm917 = vcmp.lt.s32.totalorder %v916, 0
    %v918 = vsub.s32 0, %v916
    %v919 = vsel %vm917, %v918, %v916
    %v920 = vclz %v919
    %v921 = vsub.s32 %v920, 2
    %vm922 = vcmp.gt.s32.totalorder 0, %v921
    %v923 = vsel %vm922, 0, %v921
    %v924 = vsub.s32 32, %v923
    %v925 = vshll.u32 %v916, %v923
    %v926 = vshrl.u32 %v908, %v924
    %v927 = vor.u32 %v925, %v926
    %v928 = vsub.s32 4294967266, %v923
    %v929 = vadd.s32 %v928, 127
    %v930 = vshll.u32 %v929, 23
    %v931 = vor.u32 4788187, %v930
    %v932 = vand.u32 2147483647, %v931
    %v934 = vcvt.s32.f32 %v927
    %v935 = vmul.f32 %v934, %v932
    %v936 = vxor.u32 %v935, 2147483648
    %v937 = vsel %vm854, %v936, %v935
    %v938 = vsub.s32 4, %v914
    %v939 = vsel %vm854, %v938, %v914
    %v940 = vsel %vm853, %v511, %v937
    %v941 = vsel %vm853, 0, %v939
    %v942 = vcosq.f32.pop %v940
    %v943 = vsinq.f32.pop %v940
    %vm944 = vweird.f32 %v511
    %v945 = vadd.s32 %v941, 3
    %v946 = vand.u32 %v945, 3
    %vm947 = vcmp.lt.s32.totalorder %v946, 2
    %vm948 = vcmp.eq.s32.totalorder %v946, 0
    %v949 = vxor.u32 %v943, 2147483648
    %v950 = vsel %vm948, %v942, %v949
    %vm951 = vcmp.eq.s32.totalorder %v946, 2
    %v952 = vxor.u32 %v942, 2147483648
    %v953 = vsel %vm951, %v952, %v943
    %v954 = vsel %vm947, %v950, %v953
    %v955 = vsel %vm944, nan, %v954
    %v956 = vand.u32 2147483647, %v512
    %vm957 = vcmp.le.f32.partialorder %v956, 0.7853982
    %vm958 = vcmp.lt.s32.totalorder %v512, 0
    %v959 = vand.u32 %v512, 2139095040
    %v960 = vshrl.u32 %v959, 23
    %v961 = vsub.s32 %v960, 127
    %v962 = vand.u32 2147483647, %v512
    %v963 = vand.u32 %v962, 8388607
    %v964 = vor.u32 %v963, 8388608
    %v965 = vsub.s32 0, %v964
    %v966 = vadd.s32 %v961, 1
    %vm967 = vcmp.gt.s32.totalorder %v966, 0
    %v968 = vsel %vm967, %v966, 0
    %v969 = vshrl.u32 %v968, 5
    %v970 = vand.u32 %v968, 31
    %v971 = vsub.s32 32, %v970
    %v972 = vshrl.u32 683565275, %v971
    %v973 = vshll.u32 683565275, %v970
    %v974 = vshrl.u32 2475754826, %v971
    %v975 = vor.u32 %v973, %v974
    %v976 = vshll.u32 2475754826, %v970
    %v977 = vshrl.u32 2131351028, %v971
    %v978 = vor.u32 %v976, %v977
    %v979 = vshll.u32 2131351028, %v970
    %v980 = vshrl.u32 2102212464, %v971
    %v981 = vor.u32 %v979, %v980
    %v982 = vshll.u32 2102212464, %v970
    %v983 = vshrl.u32 920167782, %v971
    %v984 = vor.u32 %v982, %v983
    %v985 = vshll.u32 920167782, %v970
    %v986 = vshrl.u32 1326507024, %v971
    %v987 = vor.u32 %v985, %v986
    %vm988 = vcmp.lt.s32.totalorder %v969, 1
    %vm989 = vcmp.lt.s32.totalorder %v969, 2
    %vm990 = vcmp.lt.s32.totalorder %v969, 3
    %vm991 = vcmp.lt.s32.totalorder %v969, 4
    %v992 = vsel %vm988, %v972, %v975
    %v993 = vsel %vm991, %v981, 2102212464
    %v994 = vsel %vm990, %v978, %v993
    %v995 = vsel %vm989, %v992, %v994
    %v996 = vsel %vm988, %v975, %v978
    %v997 = vsel %vm991, %v984, 920167782
    %v998 = vsel %vm990, %v981, %v997
    %v999 = vsel %vm989, %v996, %v998
    %v1000 = vsel %vm988, %v978, %v981
    %v1001 = vsel %vm991, %v987, 1326507024
    %v1002 = vsel %vm990, %v984, %v1001
    %v1003 = vsel %vm989, %v1000, %v1002
    %v1004 = vshll.u32 %v964, 8
    %v1005 = vmul.u32.u64.compose %v1004, %v1003
    %v1006 = vextract.low.u32 %v1005
    %v1007 = vextract.high.u32 %v1005
    %v1008 = vmul.u32.u64.compose %v1004, %v999
    %v1009 = vextract.low.u32 %v1008
    %v1010 = vextract.high.u32 %v1008
    %v1011 = vmul.u32 %v1004, %v995
    %v1012 = vadd.s32 %v1007, %v1009
    %vm1013 = vc.u32 %v1007, %v1009
    %v1014 = vadd.s32 %v1010, 1
    %v1015 = vsel %vm1013, %v1014, %v1010
    %v1016 = vadd.s32 %v1011, %v1015
    %v1017 = vadd.s32 %v1016, 536870912
    %v1018 = vshrl.u32 %v1017, 30
    %v1019 = vshll.u32 %v1018, 30
    %v1020 = vsub.s32 %v1016, %v1019
    %vm1021 = vcmp.lt.s32.totalorder %v1020, 0
    %v1022 = vsub.s32 0, %v1020
    %v1023 = vsel %vm1021, %v1022, %v1020
    %v1024 = vclz %v1023
    %v1025 = vsub.s32 %v1024, 2
    %vm1026 = vcmp.gt.s32.totalorder 0, %v1025
    %v1027 = vsel %vm1026, 0, %v1025
    %v1028 = vsub.s32 32, %v1027
    %v1029 = vshll.u32 %v1020, %v1027
    %v1030 = vshrl.u32 %v1012, %v1028
    %v1031 = vor.u32 %v1029, %v1030
    %v1032 = vsub.s32 4294967266, %v1027
    %v1033 = vadd.s32 %v1032, 127
    %v1034 = vshll.u32 %v1033, 23
    %v1035 = vor.u32 4788187, %v1034
    %v1036 = vand.u32 2147483647, %v1035
    %v1038 = vcvt.s32.f32 %v1031
    %v1039 = vmul.f32 %v1038, %v1036
    %v1040 = vxor.u32 %v1039, 2147483648
    %v1041 = vsel %vm958, %v1040, %v1039
    %v1042 = vsub.s32 4, %v1018
    %v1043 = vsel %vm958, %v1042, %v1018
    %v1044 = vsel %vm957, %v512, %v1041
    %v1045 = vsel %vm957, 0, %v1043
    %v1046 = vcosq.f32.pop %v1044
    %v1047 = vsinq.f32.pop %v1044
    %vm1048 = vweird.f32 %v512
    %v1049 = vadd.s32 %v1045, 3
    %v1050 = vand.u32 %v1049, 3
    %vm1051 = vcmp.lt.s32.totalorder %v1050, 2
    %vm1052 = vcmp.eq.s32.totalorder %v1050, 0
    %v1053 = vxor.u32 %v1047, 2147483648
    %v1054 = vsel %vm1052, %v1046, %v1053
    %vm1055 = vcmp.eq.s32.totalorder %v1050, 2
    %v1056 = vxor.u32 %v1046, 2147483648
    %v1057 = vsel %vm1055, %v1056, %v1047
    %v1058 = vsel %vm1051, %v1054, %v1057
    %v1059 = vsel %vm1048, nan, %v1058
    %v1060 = vand.u32 2147483647, %v513
    %vm1061 = vcmp.le.f32.partialorder %v1060, 0.7853982
    %vm1062 = vcmp.lt.s32.totalorder %v513, 0
    %v1063 = vand.u32 %v513, 2139095040
    %v1064 = vshrl.u32 %v1063, 23
    %v1065 = vsub.s32 %v1064, 127
    %v1066 = vand.u32 2147483647, %v513
    %v1067 = vand.u32 %v1066, 8388607
    %v1068 = vor.u32 %v1067, 8388608
    %v1069 = vsub.s32 0, %v1068
    %v1070 = vadd.s32 %v1065, 1
    %vm1071 = vcmp.gt.s32.totalorder %v1070, 0
    %v1072 = vsel %vm1071, %v1070, 0
    %v1073 = vshrl.u32 %v1072, 5
    %v1074 = vand.u32 %v1072, 31
    %v1075 = vsub.s32 32, %v1074
    %v1076 = vshrl.u32 683565275, %v1075
    %v1077 = vshll.u32 683565275, %v1074
    %v1078 = vshrl.u32 2475754826, %v1075
    %v1079 = vor.u32 %v1077, %v1078
    %v1080 = vshll.u32 2475754826, %v1074
    %v1081 = vshrl.u32 2131351028, %v1075
    %v1082 = vor.u32 %v1080, %v1081
    %v1083 = vshll.u32 2131351028, %v1074
    %v1084 = vshrl.u32 2102212464, %v1075
    %v1085 = vor.u32 %v1083, %v1084
    %v1086 = vshll.u32 2102212464, %v1074
    %v1087 = vshrl.u32 920167782, %v1075
    %v1088 = vor.u32 %v1086, %v1087
    %v1089 = vshll.u32 920167782, %v1074
    %v1090 = vshrl.u32 1326507024, %v1075
    %v1091 = vor.u32 %v1089, %v1090
    %vm1092 = vcmp.lt.s32.totalorder %v1073, 1
    %vm1093 = vcmp.lt.s32.totalorder %v1073, 2
    %vm1094 = vcmp.lt.s32.totalorder %v1073, 3
    %vm1095 = vcmp.lt.s32.totalorder %v1073, 4
    %v1096 = vsel %vm1092, %v1076, %v1079
    %v1097 = vsel %vm1095, %v1085, 2102212464
    %v1098 = vsel %vm1094, %v1082, %v1097
    %v1099 = vsel %vm1093, %v1096, %v1098
    %v1100 = vsel %vm1092, %v1079, %v1082
    %v1101 = vsel %vm1095, %v1088, 920167782
    %v1102 = vsel %vm1094, %v1085, %v1101
    %v1103 = vsel %vm1093, %v1100, %v1102
    %v1104 = vsel %vm1092, %v1082, %v1085
    %v1105 = vsel %vm1095, %v1091, 1326507024
    %v1106 = vsel %vm1094, %v1088, %v1105
    %v1107 = vsel %vm1093, %v1104, %v1106
    %v1108 = vshll.u32 %v1068, 8
    %v1109 = vmul.u32.u64.compose %v1108, %v1107
    %v1110 = vextract.low.u32 %v1109
    %v1111 = vextract.high.u32 %v1109
    %v1112 = vmul.u32.u64.compose %v1108, %v1103
    %v1113 = vextract.low.u32 %v1112
    %v1114 = vextract.high.u32 %v1112
    %v1115 = vmul.u32 %v1108, %v1099
    %v1116 = vadd.s32 %v1111, %v1113
    %vm1117 = vc.u32 %v1111, %v1113
    %v1118 = vadd.s32 %v1114, 1
    %v1119 = vsel %vm1117, %v1118, %v1114
    %v1120 = vadd.s32 %v1115, %v1119
    %v1121 = vadd.s32 %v1120, 536870912
    %v1122 = vshrl.u32 %v1121, 30
    %v1123 = vshll.u32 %v1122, 30
    %v1124 = vsub.s32 %v1120, %v1123
    %vm1125 = vcmp.lt.s32.totalorder %v1124, 0
    %v1126 = vsub.s32 0, %v1124
    %v1127 = vsel %vm1125, %v1126, %v1124
    %v1128 = vclz %v1127
    %v1129 = vsub.s32 %v1128, 2
    %vm1130 = vcmp.gt.s32.totalorder 0, %v1129
    %v1131 = vsel %vm1130, 0, %v1129
    %v1132 = vsub.s32 32, %v1131
    %v1133 = vshll.u32 %v1124, %v1131
    %v1134 = vshrl.u32 %v1116, %v1132
    %v1135 = vor.u32 %v1133, %v1134
    %v1136 = vsub.s32 4294967266, %v1131
    %v1137 = vadd.s32 %v1136, 127
    %v1138 = vshll.u32 %v1137, 23
    %v1139 = vor.u32 4788187, %v1138
    %v1140 = vand.u32 2147483647, %v1139
    %v1142 = vcvt.s32.f32 %v1135
    %v1143 = vmul.f32 %v1142, %v1140
    %v1144 = vxor.u32 %v1143, 2147483648
    %v1145 = vsel %vm1062, %v1144, %v1143
    %v1146 = vsub.s32 4, %v1122
    %v1147 = vsel %vm1062, %v1146, %v1122
    %v1148 = vsel %vm1061, %v513, %v1145
    %v1149 = vsel %vm1061, 0, %v1147
    %v1150 = vcosq.f32.pop %v1148
    %v1151 = vsinq.f32.pop %v1148
    %vm1152 = vweird.f32 %v513
    %v1153 = vadd.s32 %v1149, 3
    %v1154 = vand.u32 %v1153, 3
    %vm1155 = vcmp.lt.s32.totalorder %v1154, 2
    %vm1156 = vcmp.eq.s32.totalorder %v1154, 0
    %v1157 = vxor.u32 %v1151, 2147483648
    %v1158 = vsel %vm1156, %v1150, %v1157
    %vm1159 = vcmp.eq.s32.totalorder %v1154, 2
    %v1160 = vxor.u32 %v1150, 2147483648
    %v1161 = vsel %vm1159, %v1160, %v1151
    %v1162 = vsel %vm1155, %v1158, %v1161
    %v1163 = vsel %vm1152, nan, %v1162
    %v1164 = vand.u32 2147483647, %v514
    %vm1165 = vcmp.le.f32.partialorder %v1164, 0.7853982
    %vm1166 = vcmp.lt.s32.totalorder %v514, 0
    %v1167 = vand.u32 %v514, 2139095040
    %v1168 = vshrl.u32 %v1167, 23
    %v1169 = vsub.s32 %v1168, 127
    %v1170 = vand.u32 2147483647, %v514
    %v1171 = vand.u32 %v1170, 8388607
    %v1172 = vor.u32 %v1171, 8388608
    %v1173 = vsub.s32 0, %v1172
    %v1174 = vadd.s32 %v1169, 1
    %vm1175 = vcmp.gt.s32.totalorder %v1174, 0
    %v1176 = vsel %vm1175, %v1174, 0
    %v1177 = vshrl.u32 %v1176, 5
    %v1178 = vand.u32 %v1176, 31
    %v1179 = vsub.s32 32, %v1178
    %v1180 = vshrl.u32 683565275, %v1179
    %v1181 = vshll.u32 683565275, %v1178
    %v1182 = vshrl.u32 2475754826, %v1179
    %v1183 = vor.u32 %v1181, %v1182
    %v1184 = vshll.u32 2475754826, %v1178
    %v1185 = vshrl.u32 2131351028, %v1179
    %v1186 = vor.u32 %v1184, %v1185
    %v1187 = vshll.u32 2131351028, %v1178
    %v1188 = vshrl.u32 2102212464, %v1179
    %v1189 = vor.u32 %v1187, %v1188
    %v1190 = vshll.u32 2102212464, %v1178
    %v1191 = vshrl.u32 920167782, %v1179
    %v1192 = vor.u32 %v1190, %v1191
    %v1193 = vshll.u32 920167782, %v1178
    %v1194 = vshrl.u32 1326507024, %v1179
    %v1195 = vor.u32 %v1193, %v1194
    %vm1196 = vcmp.lt.s32.totalorder %v1177, 1
    %vm1197 = vcmp.lt.s32.totalorder %v1177, 2
    %vm1198 = vcmp.lt.s32.totalorder %v1177, 3
    %vm1199 = vcmp.lt.s32.totalorder %v1177, 4
    %v1200 = vsel %vm1196, %v1180, %v1183
    %v1201 = vsel %vm1199, %v1189, 2102212464
    %v1202 = vsel %vm1198, %v1186, %v1201
    %v1203 = vsel %vm1197, %v1200, %v1202
    %v1204 = vsel %vm1196, %v1183, %v1186
    %v1205 = vsel %vm1199, %v1192, 920167782
    %v1206 = vsel %vm1198, %v1189, %v1205
    %v1207 = vsel %vm1197, %v1204, %v1206
    %v1208 = vsel %vm1196, %v1186, %v1189
    %v1209 = vsel %vm1199, %v1195, 1326507024
    %v1210 = vsel %vm1198, %v1192, %v1209
    %v1211 = vsel %vm1197, %v1208, %v1210
    %v1212 = vshll.u32 %v1172, 8
    %v1213 = vmul.u32.u64.compose %v1212, %v1211
    %v1214 = vextract.low.u32 %v1213
    %v1215 = vextract.high.u32 %v1213
    %v1216 = vmul.u32.u64.compose %v1212, %v1207
    %v1217 = vextract.low.u32 %v1216
    %v1218 = vextract.high.u32 %v1216
    %v1219 = vmul.u32 %v1212, %v1203
    %v1220 = vadd.s32 %v1215, %v1217
    %vm1221 = vc.u32 %v1215, %v1217
    %v1222 = vadd.s32 %v1218, 1
    %v1223 = vsel %vm1221, %v1222, %v1218
    %v1224 = vadd.s32 %v1219, %v1223
    %v1225 = vadd.s32 %v1224, 536870912
    %v1226 = vshrl.u32 %v1225, 30
    %v1227 = vshll.u32 %v1226, 30
    %v1228 = vsub.s32 %v1224, %v1227
    %vm1229 = vcmp.lt.s32.totalorder %v1228, 0
    %v1230 = vsub.s32 0, %v1228
    %v1231 = vsel %vm1229, %v1230, %v1228
    %v1232 = vclz %v1231
    %v1233 = vsub.s32 %v1232, 2
    %vm1234 = vcmp.gt.s32.totalorder 0, %v1233
    %v1235 = vsel %vm1234, 0, %v1233
    %v1236 = vsub.s32 32, %v1235
    %v1237 = vshll.u32 %v1228, %v1235
    %v1238 = vshrl.u32 %v1220, %v1236
    %v1239 = vor.u32 %v1237, %v1238
    %v1240 = vsub.s32 4294967266, %v1235
    %v1241 = vadd.s32 %v1240, 127
    %v1242 = vshll.u32 %v1241, 23
    %v1243 = vor.u32 4788187, %v1242
    %v1244 = vand.u32 2147483647, %v1243
    %v1246 = vcvt.s32.f32 %v1239
    %v1247 = vmul.f32 %v1246, %v1244
    %v1248 = vxor.u32 %v1247, 2147483648
    %v1249 = vsel %vm1166, %v1248, %v1247
    %v1250 = vsub.s32 4, %v1226
    %v1251 = vsel %vm1166, %v1250, %v1226
    %v1252 = vsel %vm1165, %v514, %v1249
    %v1253 = vsel %vm1165, 0, %v1251
    %v1254 = vcosq.f32.pop %v1252
    %v1255 = vsinq.f32.pop %v1252
    %vm1256 = vweird.f32 %v514
    %v1257 = vadd.s32 %v1253, 3
    %v1258 = vand.u32 %v1257, 3
    %vm1259 = vcmp.lt.s32.totalorder %v1258, 2
    %vm1260 = vcmp.eq.s32.totalorder %v1258, 0
    %v1261 = vxor.u32 %v1255, 2147483648
    %v1262 = vsel %vm1260, %v1254, %v1261
    %vm1263 = vcmp.eq.s32.totalorder %v1258, 2
    %v1264 = vxor.u32 %v1254, 2147483648
    %v1265 = vsel %vm1263, %v1264, %v1255
    %v1266 = vsel %vm1259, %v1262, %v1265
    %v1267 = vsel %vm1256, nan, %v1266
    %v1268 = vand.u32 2147483647, %v515
    %vm1269 = vcmp.le.f32.partialorder %v1268, 0.7853982
    %vm1270 = vcmp.lt.s32.totalorder %v515, 0
    %v1271 = vand.u32 %v515, 2139095040
    %v1272 = vshrl.u32 %v1271, 23
    %v1273 = vsub.s32 %v1272, 127
    %v1274 = vand.u32 2147483647, %v515
    %v1275 = vand.u32 %v1274, 8388607
    %v1276 = vor.u32 %v1275, 8388608
    %v1277 = vsub.s32 0, %v1276
    %v1278 = vadd.s32 %v1273, 1
    %vm1279 = vcmp.gt.s32.totalorder %v1278, 0
    %v1280 = vsel %vm1279, %v1278, 0
    %v1281 = vshrl.u32 %v1280, 5
    %v1282 = vand.u32 %v1280, 31
    %v1283 = vsub.s32 32, %v1282
    %v1284 = vshrl.u32 683565275, %v1283
    %v1285 = vshll.u32 683565275, %v1282
    %v1286 = vshrl.u32 2475754826, %v1283
    %v1287 = vor.u32 %v1285, %v1286
    %v1288 = vshll.u32 2475754826, %v1282
    %v1289 = vshrl.u32 2131351028, %v1283
    %v1290 = vor.u32 %v1288, %v1289
    %v1291 = vshll.u32 2131351028, %v1282
    %v1292 = vshrl.u32 2102212464, %v1283
    %v1293 = vor.u32 %v1291, %v1292
    %v1294 = vshll.u32 2102212464, %v1282
    %v1295 = vshrl.u32 920167782, %v1283
    %v1296 = vor.u32 %v1294, %v1295
    %v1297 = vshll.u32 920167782, %v1282
    %v1298 = vshrl.u32 1326507024, %v1283
    %v1299 = vor.u32 %v1297, %v1298
    %vm1300 = vcmp.lt.s32.totalorder %v1281, 1
    %vm1301 = vcmp.lt.s32.totalorder %v1281, 2
    %vm1302 = vcmp.lt.s32.totalorder %v1281, 3
    %vm1303 = vcmp.lt.s32.totalorder %v1281, 4
    %v1304 = vsel %vm1300, %v1284, %v1287
    %v1305 = vsel %vm1303, %v1293, 2102212464
    %v1306 = vsel %vm1302, %v1290, %v1305
    %v1307 = vsel %vm1301, %v1304, %v1306
    %v1308 = vsel %vm1300, %v1287, %v1290
    %v1309 = vsel %vm1303, %v1296, 920167782
    %v1310 = vsel %vm1302, %v1293, %v1309
    %v1311 = vsel %vm1301, %v1308, %v1310
    %v1312 = vsel %vm1300, %v1290, %v1293
    %v1313 = vsel %vm1303, %v1299, 1326507024
    %v1314 = vsel %vm1302, %v1296, %v1313
    %v1315 = vsel %vm1301, %v1312, %v1314
    %v1316 = vshll.u32 %v1276, 8
    %v1317 = vmul.u32.u64.compose %v1316, %v1315
    %v1318 = vextract.low.u32 %v1317
    %v1319 = vextract.high.u32 %v1317
    %v1320 = vmul.u32.u64.compose %v1316, %v1311
    %v1321 = vextract.low.u32 %v1320
    %v1322 = vextract.high.u32 %v1320
    %v1323 = vmul.u32 %v1316, %v1307
    %v1324 = vadd.s32 %v1319, %v1321
    %vm1325 = vc.u32 %v1319, %v1321
    %v1326 = vadd.s32 %v1322, 1
    %v1327 = vsel %vm1325, %v1326, %v1322
    %v1328 = vadd.s32 %v1323, %v1327
    %v1329 = vadd.s32 %v1328, 536870912
    %v1330 = vshrl.u32 %v1329, 30
    %v1331 = vshll.u32 %v1330, 30
    %v1332 = vsub.s32 %v1328, %v1331
    %vm1333 = vcmp.lt.s32.totalorder %v1332, 0
    %v1334 = vsub.s32 0, %v1332
    %v1335 = vsel %vm1333, %v1334, %v1332
    %v1336 = vclz %v1335
    %v1337 = vsub.s32 %v1336, 2
    %vm1338 = vcmp.gt.s32.totalorder 0, %v1337
    %v1339 = vsel %vm1338, 0, %v1337
    %v1340 = vsub.s32 32, %v1339
    %v1341 = vshll.u32 %v1332, %v1339
    %v1342 = vshrl.u32 %v1324, %v1340
    %v1343 = vor.u32 %v1341, %v1342
    %v1344 = vsub.s32 4294967266, %v1339
    %v1345 = vadd.s32 %v1344, 127
    %v1346 = vshll.u32 %v1345, 23
    %v1347 = vor.u32 4788187, %v1346
    %v1348 = vand.u32 2147483647, %v1347
    %v1350 = vcvt.s32.f32 %v1343
    %v1351 = vmul.f32 %v1350, %v1348
    %v1352 = vxor.u32 %v1351, 2147483648
    %v1353 = vsel %vm1270, %v1352, %v1351
    %v1354 = vsub.s32 4, %v1330
    %v1355 = vsel %vm1270, %v1354, %v1330
    %v1356 = vsel %vm1269, %v515, %v1353
    %v1357 = vsel %vm1269, 0, %v1355
    %v1358 = vcosq.f32.pop %v1356
    %v1359 = vsinq.f32.pop %v1356
    %vm1360 = vweird.f32 %v515
    %v1361 = vadd.s32 %v1357, 3
    %v1362 = vand.u32 %v1361, 3
    %vm1363 = vcmp.lt.s32.totalorder %v1362, 2
    %vm1364 = vcmp.eq.s32.totalorder %v1362, 0
    %v1365 = vxor.u32 %v1359, 2147483648
    %v1366 = vsel %vm1364, %v1358, %v1365
    %vm1367 = vcmp.eq.s32.totalorder %v1362, 2
    %v1368 = vxor.u32 %v1358, 2147483648
    %v1369 = vsel %vm1367, %v1368, %v1359
    %v1370 = vsel %vm1363, %v1366, %v1369
    %v1371 = vsel %vm1360, nan, %v1370
    %v1372 = vand.u32 2147483647, %v516
    %vm1373 = vcmp.le.f32.partialorder %v1372, 0.7853982
    %vm1374 = vcmp.lt.s32.totalorder %v516, 0
    %v1375 = vand.u32 %v516, 2139095040
    %v1376 = vshrl.u32 %v1375, 23
    %v1377 = vsub.s32 %v1376, 127
    %v1378 = vand.u32 2147483647, %v516
    %v1379 = vand.u32 %v1378, 8388607
    %v1380 = vor.u32 %v1379, 8388608
    %v1381 = vsub.s32 0, %v1380
    %v1382 = vadd.s32 %v1377, 1
    %vm1383 = vcmp.gt.s32.totalorder %v1382, 0
    %v1384 = vsel %vm1383, %v1382, 0
    %v1385 = vshrl.u32 %v1384, 5
    %v1386 = vand.u32 %v1384, 31
    %v1387 = vsub.s32 32, %v1386
    %v1388 = vshrl.u32 683565275, %v1387
    %v1389 = vshll.u32 683565275, %v1386
    %v1390 = vshrl.u32 2475754826, %v1387
    %v1391 = vor.u32 %v1389, %v1390
    %v1392 = vshll.u32 2475754826, %v1386
    %v1393 = vshrl.u32 2131351028, %v1387
    %v1394 = vor.u32 %v1392, %v1393
    %v1395 = vshll.u32 2131351028, %v1386
    %v1396 = vshrl.u32 2102212464, %v1387
    %v1397 = vor.u32 %v1395, %v1396
    %v1398 = vshll.u32 2102212464, %v1386
    %v1399 = vshrl.u32 920167782, %v1387
    %v1400 = vor.u32 %v1398, %v1399
    %v1401 = vshll.u32 920167782, %v1386
    %v1402 = vshrl.u32 1326507024, %v1387
    %v1403 = vor.u32 %v1401, %v1402
    %vm1404 = vcmp.lt.s32.totalorder %v1385, 1
    %vm1405 = vcmp.lt.s32.totalorder %v1385, 2
    %vm1406 = vcmp.lt.s32.totalorder %v1385, 3
    %vm1407 = vcmp.lt.s32.totalorder %v1385, 4
    %v1408 = vsel %vm1404, %v1388, %v1391
    %v1409 = vsel %vm1407, %v1397, 2102212464
    %v1410 = vsel %vm1406, %v1394, %v1409
    %v1411 = vsel %vm1405, %v1408, %v1410
    %v1412 = vsel %vm1404, %v1391, %v1394
    %v1413 = vsel %vm1407, %v1400, 920167782
    %v1414 = vsel %vm1406, %v1397, %v1413
    %v1415 = vsel %vm1405, %v1412, %v1414
    %v1416 = vsel %vm1404, %v1394, %v1397
    %v1417 = vsel %vm1407, %v1403, 1326507024
    %v1418 = vsel %vm1406, %v1400, %v1417
    %v1419 = vsel %vm1405, %v1416, %v1418
    %v1420 = vshll.u32 %v1380, 8
    %v1421 = vmul.u32.u64.compose %v1420, %v1419
    %v1422 = vextract.low.u32 %v1421
    %v1423 = vextract.high.u32 %v1421
    %v1424 = vmul.u32.u64.compose %v1420, %v1415
    %v1425 = vextract.low.u32 %v1424
    %v1426 = vextract.high.u32 %v1424
    %v1427 = vmul.u32 %v1420, %v1411
    %v1428 = vadd.s32 %v1423, %v1425
    %vm1429 = vc.u32 %v1423, %v1425
    %v1430 = vadd.s32 %v1426, 1
    %v1431 = vsel %vm1429, %v1430, %v1426
    %v1432 = vadd.s32 %v1427, %v1431
    %v1433 = vadd.s32 %v1432, 536870912
    %v1434 = vshrl.u32 %v1433, 30
    %v1435 = vshll.u32 %v1434, 30
    %v1436 = vsub.s32 %v1432, %v1435
    %vm1437 = vcmp.lt.s32.totalorder %v1436, 0
    %v1438 = vsub.s32 0, %v1436
    %v1439 = vsel %vm1437, %v1438, %v1436
    %v1440 = vclz %v1439
    %v1441 = vsub.s32 %v1440, 2
    %vm1442 = vcmp.gt.s32.totalorder 0, %v1441
    %v1443 = vsel %vm1442, 0, %v1441
    %v1444 = vsub.s32 32, %v1443
    %v1445 = vshll.u32 %v1436, %v1443
    %v1446 = vshrl.u32 %v1428, %v1444
    %v1447 = vor.u32 %v1445, %v1446
    %v1448 = vsub.s32 4294967266, %v1443
    %v1449 = vadd.s32 %v1448, 127
    %v1450 = vshll.u32 %v1449, 23
    %v1451 = vor.u32 4788187, %v1450
    %v1452 = vand.u32 2147483647, %v1451
    %v1454 = vcvt.s32.f32 %v1447
    %v1455 = vmul.f32 %v1454, %v1452
    %v1456 = vxor.u32 %v1455, 2147483648
    %v1457 = vsel %vm1374, %v1456, %v1455
    %v1458 = vsub.s32 4, %v1434
    %v1459 = vsel %vm1374, %v1458, %v1434
    %v1460 = vsel %vm1373, %v516, %v1457
    %v1461 = vsel %vm1373, 0, %v1459
    %v1462 = vcosq.f32.pop %v1460
    %v1463 = vsinq.f32.pop %v1460
    %vm1464 = vweird.f32 %v516
    %v1465 = vadd.s32 %v1461, 3
    %v1466 = vand.u32 %v1465, 3
    %vm1467 = vcmp.lt.s32.totalorder %v1466, 2
    %vm1468 = vcmp.eq.s32.totalorder %v1466, 0
    %v1469 = vxor.u32 %v1463, 2147483648
    %v1470 = vsel %vm1468, %v1462, %v1469
    %vm1471 = vcmp.eq.s32.totalorder %v1466, 2
    %v1472 = vxor.u32 %v1462, 2147483648
    %v1473 = vsel %vm1471, %v1472, %v1463
    %v1474 = vsel %vm1467, %v1470, %v1473
    %v1475 = vsel %vm1464, nan, %v1474
    %v1476 = vand.u32 2147483647, %v517
    %vm1477 = vcmp.le.f32.partialorder %v1476, 0.7853982
    %vm1478 = vcmp.lt.s32.totalorder %v517, 0
    %v1479 = vand.u32 %v517, 2139095040
    %v1480 = vshrl.u32 %v1479, 23
    %v1481 = vsub.s32 %v1480, 127
    %v1482 = vand.u32 2147483647, %v517
    %v1483 = vand.u32 %v1482, 8388607
    %v1484 = vor.u32 %v1483, 8388608
    %v1485 = vsub.s32 0, %v1484
    %v1486 = vadd.s32 %v1481, 1
    %vm1487 = vcmp.gt.s32.totalorder %v1486, 0
    %v1488 = vsel %vm1487, %v1486, 0
    %v1489 = vshrl.u32 %v1488, 5
    %v1490 = vand.u32 %v1488, 31
    %v1491 = vsub.s32 32, %v1490
    %v1492 = vshrl.u32 683565275, %v1491
    %v1493 = vshll.u32 683565275, %v1490
    %v1494 = vshrl.u32 2475754826, %v1491
    %v1495 = vor.u32 %v1493, %v1494
    %v1496 = vshll.u32 2475754826, %v1490
    %v1497 = vshrl.u32 2131351028, %v1491
    %v1498 = vor.u32 %v1496, %v1497
    %v1499 = vshll.u32 2131351028, %v1490
    %v1500 = vshrl.u32 2102212464, %v1491
    %v1501 = vor.u32 %v1499, %v1500
    %v1502 = vshll.u32 2102212464, %v1490
    %v1503 = vshrl.u32 920167782, %v1491
    %v1504 = vor.u32 %v1502, %v1503
    %v1505 = vshll.u32 920167782, %v1490
    %v1506 = vshrl.u32 1326507024, %v1491
    %v1507 = vor.u32 %v1505, %v1506
    %vm1508 = vcmp.lt.s32.totalorder %v1489, 1
    %vm1509 = vcmp.lt.s32.totalorder %v1489, 2
    %vm1510 = vcmp.lt.s32.totalorder %v1489, 3
    %vm1511 = vcmp.lt.s32.totalorder %v1489, 4
    %v1512 = vsel %vm1508, %v1492, %v1495
    %v1513 = vsel %vm1511, %v1501, 2102212464
    %v1514 = vsel %vm1510, %v1498, %v1513
    %v1515 = vsel %vm1509, %v1512, %v1514
    %v1516 = vsel %vm1508, %v1495, %v1498
    %v1517 = vsel %vm1511, %v1504, 920167782
    %v1518 = vsel %vm1510, %v1501, %v1517
    %v1519 = vsel %vm1509, %v1516, %v1518
    %v1520 = vsel %vm1508, %v1498, %v1501
    %v1521 = vsel %vm1511, %v1507, 1326507024
    %v1522 = vsel %vm1510, %v1504, %v1521
    %v1523 = vsel %vm1509, %v1520, %v1522
    %v1524 = vshll.u32 %v1484, 8
    %v1525 = vmul.u32.u64.compose %v1524, %v1523
    %v1526 = vextract.low.u32 %v1525
    %v1527 = vextract.high.u32 %v1525
    %v1528 = vmul.u32.u64.compose %v1524, %v1519
    %v1529 = vextract.low.u32 %v1528
    %v1530 = vextract.high.u32 %v1528
    %v1531 = vmul.u32 %v1524, %v1515
    %v1532 = vadd.s32 %v1527, %v1529
    %vm1533 = vc.u32 %v1527, %v1529
    %v1534 = vadd.s32 %v1530, 1
    %v1535 = vsel %vm1533, %v1534, %v1530
    %v1536 = vadd.s32 %v1531, %v1535
    %v1537 = vadd.s32 %v1536, 536870912
    %v1538 = vshrl.u32 %v1537, 30
    %v1539 = vshll.u32 %v1538, 30
    %v1540 = vsub.s32 %v1536, %v1539
    %vm1541 = vcmp.lt.s32.totalorder %v1540, 0
    %v1542 = vsub.s32 0, %v1540
    %v1543 = vsel %vm1541, %v1542, %v1540
    %v1544 = vclz %v1543
    %v1545 = vsub.s32 %v1544, 2
    %vm1546 = vcmp.gt.s32.totalorder 0, %v1545
    %v1547 = vsel %vm1546, 0, %v1545
    %v1548 = vsub.s32 32, %v1547
    %v1549 = vshll.u32 %v1540, %v1547
    %v1550 = vshrl.u32 %v1532, %v1548
    %v1551 = vor.u32 %v1549, %v1550
    %v1552 = vsub.s32 4294967266, %v1547
    %v1553 = vadd.s32 %v1552, 127
    %v1554 = vshll.u32 %v1553, 23
    %v1555 = vor.u32 4788187, %v1554
    %v1556 = vand.u32 2147483647, %v1555
    %v1558 = vcvt.s32.f32 %v1551
    %v1559 = vmul.f32 %v1558, %v1556
    %v1560 = vxor.u32 %v1559, 2147483648
    %v1561 = vsel %vm1478, %v1560, %v1559
    %v1562 = vsub.s32 4, %v1538
    %v1563 = vsel %vm1478, %v1562, %v1538
    %v1564 = vsel %vm1477, %v517, %v1561
    %v1565 = vsel %vm1477, 0, %v1563
    %v1566 = vcosq.f32.pop %v1564
    %v1567 = vsinq.f32.pop %v1564
    %vm1568 = vweird.f32 %v517
    %v1569 = vadd.s32 %v1565, 3
    %v1570 = vand.u32 %v1569, 3
    %vm1571 = vcmp.lt.s32.totalorder %v1570, 2
    %vm1572 = vcmp.eq.s32.totalorder %v1570, 0
    %v1573 = vxor.u32 %v1567, 2147483648
    %v1574 = vsel %vm1572, %v1566, %v1573
    %vm1575 = vcmp.eq.s32.totalorder %v1570, 2
    %v1576 = vxor.u32 %v1566, 2147483648
    %v1577 = vsel %vm1575, %v1576, %v1567
    %v1578 = vsel %vm1571, %v1574, %v1577
    %v1579 = vsel %vm1568, nan, %v1578
    %v1580 = vand.u32 2147483647, %v518
    %vm1581 = vcmp.le.f32.partialorder %v1580, 0.7853982
    %vm1582 = vcmp.lt.s32.totalorder %v518, 0
    %v1583 = vand.u32 %v518, 2139095040
    %v1584 = vshrl.u32 %v1583, 23
    %v1585 = vsub.s32 %v1584, 127
    %v1586 = vand.u32 2147483647, %v518
    %v1587 = vand.u32 %v1586, 8388607
    %v1588 = vor.u32 %v1587, 8388608
    %v1589 = vsub.s32 0, %v1588
    %v1590 = vadd.s32 %v1585, 1
    %vm1591 = vcmp.gt.s32.totalorder %v1590, 0
    %v1592 = vsel %vm1591, %v1590, 0
    %v1593 = vshrl.u32 %v1592, 5
    %v1594 = vand.u32 %v1592, 31
    %v1595 = vsub.s32 32, %v1594
    %v1596 = vshrl.u32 683565275, %v1595
    %v1597 = vshll.u32 683565275, %v1594
    %v1598 = vshrl.u32 2475754826, %v1595
    %v1599 = vor.u32 %v1597, %v1598
    %v1600 = vshll.u32 2475754826, %v1594
    %v1601 = vshrl.u32 2131351028, %v1595
    %v1602 = vor.u32 %v1600, %v1601
    %v1603 = vshll.u32 2131351028, %v1594
    %v1604 = vshrl.u32 2102212464, %v1595
    %v1605 = vor.u32 %v1603, %v1604
    %v1606 = vshll.u32 2102212464, %v1594
    %v1607 = vshrl.u32 920167782, %v1595
    %v1608 = vor.u32 %v1606, %v1607
    %v1609 = vshll.u32 920167782, %v1594
    %v1610 = vshrl.u32 1326507024, %v1595
    %v1611 = vor.u32 %v1609, %v1610
    %vm1612 = vcmp.lt.s32.totalorder %v1593, 1
    %vm1613 = vcmp.lt.s32.totalorder %v1593, 2
    %vm1614 = vcmp.lt.s32.totalorder %v1593, 3
    %vm1615 = vcmp.lt.s32.totalorder %v1593, 4
    %v1616 = vsel %vm1612, %v1596, %v1599
    %v1617 = vsel %vm1615, %v1605, 2102212464
    %v1618 = vsel %vm1614, %v1602, %v1617
    %v1619 = vsel %vm1613, %v1616, %v1618
    %v1620 = vsel %vm1612, %v1599, %v1602
    %v1621 = vsel %vm1615, %v1608, 920167782
    %v1622 = vsel %vm1614, %v1605, %v1621
    %v1623 = vsel %vm1613, %v1620, %v1622
    %v1624 = vsel %vm1612, %v1602, %v1605
    %v1625 = vsel %vm1615, %v1611, 1326507024
    %v1626 = vsel %vm1614, %v1608, %v1625
    %v1627 = vsel %vm1613, %v1624, %v1626
    %v1628 = vshll.u32 %v1588, 8
    %v1629 = vmul.u32.u64.compose %v1628, %v1627
    %v1630 = vextract.low.u32 %v1629
    %v1631 = vextract.high.u32 %v1629
    %v1632 = vmul.u32.u64.compose %v1628, %v1623
    %v1633 = vextract.low.u32 %v1632
    %v1634 = vextract.high.u32 %v1632
    %v1635 = vmul.u32 %v1628, %v1619
    %v1636 = vadd.s32 %v1631, %v1633
    %vm1637 = vc.u32 %v1631, %v1633
    %v1638 = vadd.s32 %v1634, 1
    %v1639 = vsel %vm1637, %v1638, %v1634
    %v1640 = vadd.s32 %v1635, %v1639
    %v1641 = vadd.s32 %v1640, 536870912
    %v1642 = vshrl.u32 %v1641, 30
    %v1643 = vshll.u32 %v1642, 30
    %v1644 = vsub.s32 %v1640, %v1643
    %vm1645 = vcmp.lt.s32.totalorder %v1644, 0
    %v1646 = vsub.s32 0, %v1644
    %v1647 = vsel %vm1645, %v1646, %v1644
    %v1648 = vclz %v1647
    %v1649 = vsub.s32 %v1648, 2
    %vm1650 = vcmp.gt.s32.totalorder 0, %v1649
    %v1651 = vsel %vm1650, 0, %v1649
    %v1652 = vsub.s32 32, %v1651
    %v1653 = vshll.u32 %v1644, %v1651
    %v1654 = vshrl.u32 %v1636, %v1652
    %v1655 = vor.u32 %v1653, %v1654
    %v1656 = vsub.s32 4294967266, %v1651
    %v1657 = vadd.s32 %v1656, 127
    %v1658 = vshll.u32 %v1657, 23
    %v1659 = vor.u32 4788187, %v1658
    %v1660 = vand.u32 2147483647, %v1659
    %v1662 = vcvt.s32.f32 %v1655
    %v1663 = vmul.f32 %v1662, %v1660
    %v1664 = vxor.u32 %v1663, 2147483648
    %v1665 = vsel %vm1582, %v1664, %v1663
    %v1666 = vsub.s32 4, %v1642
    %v1667 = vsel %vm1582, %v1666, %v1642
    %v1668 = vsel %vm1581, %v518, %v1665
    %v1669 = vsel %vm1581, 0, %v1667
    %v1670 = vcosq.f32.pop %v1668
    %v1671 = vsinq.f32.pop %v1668
    %vm1672 = vweird.f32 %v518
    %v1673 = vadd.s32 %v1669, 3
    %v1674 = vand.u32 %v1673, 3
    %vm1675 = vcmp.lt.s32.totalorder %v1674, 2
    %vm1676 = vcmp.eq.s32.totalorder %v1674, 0
    %v1677 = vxor.u32 %v1671, 2147483648
    %v1678 = vsel %vm1676, %v1670, %v1677
    %vm1679 = vcmp.eq.s32.totalorder %v1674, 2
    %v1680 = vxor.u32 %v1670, 2147483648
    %v1681 = vsel %vm1679, %v1680, %v1671
    %v1682 = vsel %vm1675, %v1678, %v1681
    %v1683 = vsel %vm1672, nan, %v1682
    %v1684 = vand.u32 2147483647, %v519
    %vm1685 = vcmp.le.f32.partialorder %v1684, 0.7853982
    %vm1686 = vcmp.lt.s32.totalorder %v519, 0
    %v1687 = vand.u32 %v519, 2139095040
    %v1688 = vshrl.u32 %v1687, 23
    %v1689 = vsub.s32 %v1688, 127
    %v1690 = vand.u32 2147483647, %v519
    %v1691 = vand.u32 %v1690, 8388607
    %v1692 = vor.u32 %v1691, 8388608
    %v1693 = vsub.s32 0, %v1692
    %v1694 = vadd.s32 %v1689, 1
    %vm1695 = vcmp.gt.s32.totalorder %v1694, 0
    %v1696 = vsel %vm1695, %v1694, 0
    %v1697 = vshrl.u32 %v1696, 5
    %v1698 = vand.u32 %v1696, 31
    %v1699 = vsub.s32 32, %v1698
    %v1700 = vshrl.u32 683565275, %v1699
    %v1701 = vshll.u32 683565275, %v1698
    %v1702 = vshrl.u32 2475754826, %v1699
    %v1703 = vor.u32 %v1701, %v1702
    %v1704 = vshll.u32 2475754826, %v1698
    %v1705 = vshrl.u32 2131351028, %v1699
    %v1706 = vor.u32 %v1704, %v1705
    %v1707 = vshll.u32 2131351028, %v1698
    %v1708 = vshrl.u32 2102212464, %v1699
    %v1709 = vor.u32 %v1707, %v1708
    %v1710 = vshll.u32 2102212464, %v1698
    %v1711 = vshrl.u32 920167782, %v1699
    %v1712 = vor.u32 %v1710, %v1711
    %v1713 = vshll.u32 920167782, %v1698
    %v1714 = vshrl.u32 1326507024, %v1699
    %v1715 = vor.u32 %v1713, %v1714
    %vm1716 = vcmp.lt.s32.totalorder %v1697, 1
    %vm1717 = vcmp.lt.s32.totalorder %v1697, 2
    %vm1718 = vcmp.lt.s32.totalorder %v1697, 3
    %vm1719 = vcmp.lt.s32.totalorder %v1697, 4
    %v1720 = vsel %vm1716, %v1700, %v1703
    %v1721 = vsel %vm1719, %v1709, 2102212464
    %v1722 = vsel %vm1718, %v1706, %v1721
    %v1723 = vsel %vm1717, %v1720, %v1722
    %v1724 = vsel %vm1716, %v1703, %v1706
    %v1725 = vsel %vm1719, %v1712, 920167782
    %v1726 = vsel %vm1718, %v1709, %v1725
    %v1727 = vsel %vm1717, %v1724, %v1726
    %v1728 = vsel %vm1716, %v1706, %v1709
    %v1729 = vsel %vm1719, %v1715, 1326507024
    %v1730 = vsel %vm1718, %v1712, %v1729
    %v1731 = vsel %vm1717, %v1728, %v1730
    %v1732 = vshll.u32 %v1692, 8
    %v1733 = vmul.u32.u64.compose %v1732, %v1731
    %v1734 = vextract.low.u32 %v1733
    %v1735 = vextract.high.u32 %v1733
    %v1736 = vmul.u32.u64.compose %v1732, %v1727
    %v1737 = vextract.low.u32 %v1736
    %v1738 = vextract.high.u32 %v1736
    %v1739 = vmul.u32 %v1732, %v1723
    %v1740 = vadd.s32 %v1735, %v1737
    %vm1741 = vc.u32 %v1735, %v1737
    %v1742 = vadd.s32 %v1738, 1
    %v1743 = vsel %vm1741, %v1742, %v1738
    %v1744 = vadd.s32 %v1739, %v1743
    %v1745 = vadd.s32 %v1744, 536870912
    %v1746 = vshrl.u32 %v1745, 30
    %v1747 = vshll.u32 %v1746, 30
    %v1748 = vsub.s32 %v1744, %v1747
    %vm1749 = vcmp.lt.s32.totalorder %v1748, 0
    %v1750 = vsub.s32 0, %v1748
    %v1751 = vsel %vm1749, %v1750, %v1748
    %v1752 = vclz %v1751
    %v1753 = vsub.s32 %v1752, 2
    %vm1754 = vcmp.gt.s32.totalorder 0, %v1753
    %v1755 = vsel %vm1754, 0, %v1753
    %v1756 = vsub.s32 32, %v1755
    %v1757 = vshll.u32 %v1748, %v1755
    %v1758 = vshrl.u32 %v1740, %v1756
    %v1759 = vor.u32 %v1757, %v1758
    %v1760 = vsub.s32 4294967266, %v1755
    %v1761 = vadd.s32 %v1760, 127
    %v1762 = vshll.u32 %v1761, 23
    %v1763 = vor.u32 4788187, %v1762
    %v1764 = vand.u32 2147483647, %v1763
    %v1766 = vcvt.s32.f32 %v1759
    %v1767 = vmul.f32 %v1766, %v1764
    %v1768 = vxor.u32 %v1767, 2147483648
    %v1769 = vsel %vm1686, %v1768, %v1767
    %v1770 = vsub.s32 4, %v1746
    %v1771 = vsel %vm1686, %v1770, %v1746
    %v1772 = vsel %vm1685, %v519, %v1769
    %v1773 = vsel %vm1685, 0, %v1771
    %v1774 = vcosq.f32.pop %v1772
    %v1775 = vsinq.f32.pop %v1772
    %vm1776 = vweird.f32 %v519
    %v1777 = vadd.s32 %v1773, 3
    %v1778 = vand.u32 %v1777, 3
    %vm1779 = vcmp.lt.s32.totalorder %v1778, 2
    %vm1780 = vcmp.eq.s32.totalorder %v1778, 0
    %v1781 = vxor.u32 %v1775, 2147483648
    %v1782 = vsel %vm1780, %v1774, %v1781
    %vm1783 = vcmp.eq.s32.totalorder %v1778, 2
    %v1784 = vxor.u32 %v1774, 2147483648
    %v1785 = vsel %vm1783, %v1784, %v1775
    %v1786 = vsel %vm1779, %v1782, %v1785
    %v1787 = vsel %vm1776, nan, %v1786
    %v1788 = vand.u32 2147483647, %v520
    %vm1789 = vcmp.le.f32.partialorder %v1788, 0.7853982
    %vm1790 = vcmp.lt.s32.totalorder %v520, 0
    %v1791 = vand.u32 %v520, 2139095040
    %v1792 = vshrl.u32 %v1791, 23
    %v1793 = vsub.s32 %v1792, 127
    %v1794 = vand.u32 2147483647, %v520
    %v1795 = vand.u32 %v1794, 8388607
    %v1796 = vor.u32 %v1795, 8388608
    %v1797 = vsub.s32 0, %v1796
    %v1798 = vadd.s32 %v1793, 1
    %vm1799 = vcmp.gt.s32.totalorder %v1798, 0
    %v1800 = vsel %vm1799, %v1798, 0
    %v1801 = vshrl.u32 %v1800, 5
    %v1802 = vand.u32 %v1800, 31
    %v1803 = vsub.s32 32, %v1802
    %v1804 = vshrl.u32 683565275, %v1803
    %v1805 = vshll.u32 683565275, %v1802
    %v1806 = vshrl.u32 2475754826, %v1803
    %v1807 = vor.u32 %v1805, %v1806
    %v1808 = vshll.u32 2475754826, %v1802
    %v1809 = vshrl.u32 2131351028, %v1803
    %v1810 = vor.u32 %v1808, %v1809
    %v1811 = vshll.u32 2131351028, %v1802
    %v1812 = vshrl.u32 2102212464, %v1803
    %v1813 = vor.u32 %v1811, %v1812
    %v1814 = vshll.u32 2102212464, %v1802
    %v1815 = vshrl.u32 920167782, %v1803
    %v1816 = vor.u32 %v1814, %v1815
    %v1817 = vshll.u32 920167782, %v1802
    %v1818 = vshrl.u32 1326507024, %v1803
    %v1819 = vor.u32 %v1817, %v1818
    %vm1820 = vcmp.lt.s32.totalorder %v1801, 1
    %vm1821 = vcmp.lt.s32.totalorder %v1801, 2
    %vm1822 = vcmp.lt.s32.totalorder %v1801, 3
    %vm1823 = vcmp.lt.s32.totalorder %v1801, 4
    %v1824 = vsel %vm1820, %v1804, %v1807
    %v1825 = vsel %vm1823, %v1813, 2102212464
    %v1826 = vsel %vm1822, %v1810, %v1825
    %v1827 = vsel %vm1821, %v1824, %v1826
    %v1828 = vsel %vm1820, %v1807, %v1810
    %v1829 = vsel %vm1823, %v1816, 920167782
    %v1830 = vsel %vm1822, %v1813, %v1829
    %v1831 = vsel %vm1821, %v1828, %v1830
    %v1832 = vsel %vm1820, %v1810, %v1813
    %v1833 = vsel %vm1823, %v1819, 1326507024
    %v1834 = vsel %vm1822, %v1816, %v1833
    %v1835 = vsel %vm1821, %v1832, %v1834
    %v1836 = vshll.u32 %v1796, 8
    %v1837 = vmul.u32.u64.compose %v1836, %v1835
    %v1838 = vextract.low.u32 %v1837
    %v1839 = vextract.high.u32 %v1837
    %v1840 = vmul.u32.u64.compose %v1836, %v1831
    %v1841 = vextract.low.u32 %v1840
    %v1842 = vextract.high.u32 %v1840
    %v1843 = vmul.u32 %v1836, %v1827
    %v1844 = vadd.s32 %v1839, %v1841
    %vm1845 = vc.u32 %v1839, %v1841
    %v1846 = vadd.s32 %v1842, 1
    %v1847 = vsel %vm1845, %v1846, %v1842
    %v1848 = vadd.s32 %v1843, %v1847
    %v1849 = vadd.s32 %v1848, 536870912
    %v1850 = vshrl.u32 %v1849, 30
    %v1851 = vshll.u32 %v1850, 30
    %v1852 = vsub.s32 %v1848, %v1851
    %vm1853 = vcmp.lt.s32.totalorder %v1852, 0
    %v1854 = vsub.s32 0, %v1852
    %v1855 = vsel %vm1853, %v1854, %v1852
    %v1856 = vclz %v1855
    %v1857 = vsub.s32 %v1856, 2
    %vm1858 = vcmp.gt.s32.totalorder 0, %v1857
    %v1859 = vsel %vm1858, 0, %v1857
    %v1860 = vsub.s32 32, %v1859
    %v1861 = vshll.u32 %v1852, %v1859
    %v1862 = vshrl.u32 %v1844, %v1860
    %v1863 = vor.u32 %v1861, %v1862
    %v1864 = vsub.s32 4294967266, %v1859
    %v1865 = vadd.s32 %v1864, 127
    %v1866 = vshll.u32 %v1865, 23
    %v1867 = vor.u32 4788187, %v1866
    %v1868 = vand.u32 2147483647, %v1867
    %v1870 = vcvt.s32.f32 %v1863
    %v1871 = vmul.f32 %v1870, %v1868
    %v1872 = vxor.u32 %v1871, 2147483648
    %v1873 = vsel %vm1790, %v1872, %v1871
    %v1874 = vsub.s32 4, %v1850
    %v1875 = vsel %vm1790, %v1874, %v1850
    %v1876 = vsel %vm1789, %v520, %v1873
    %v1877 = vsel %vm1789, 0, %v1875
    %v1878 = vcosq.f32.pop %v1876
    %v1879 = vsinq.f32.pop %v1876
    %vm1880 = vweird.f32 %v520
    %v1881 = vadd.s32 %v1877, 3
    %v1882 = vand.u32 %v1881, 3
    %vm1883 = vcmp.lt.s32.totalorder %v1882, 2
    %vm1884 = vcmp.eq.s32.totalorder %v1882, 0
    %v1885 = vxor.u32 %v1879, 2147483648
    %v1886 = vsel %vm1884, %v1878, %v1885
    %vm1887 = vcmp.eq.s32.totalorder %v1882, 2
    %v1888 = vxor.u32 %v1878, 2147483648
    %v1889 = vsel %vm1887, %v1888, %v1879
    %v1890 = vsel %vm1883, %v1886, %v1889
    %v1891 = vsel %vm1880, nan, %v1890
    %v1892 = vand.u32 2147483647, %v521
    %vm1893 = vcmp.le.f32.partialorder %v1892, 0.7853982
    %vm1894 = vcmp.lt.s32.totalorder %v521, 0
    %v1895 = vand.u32 %v521, 2139095040
    %v1896 = vshrl.u32 %v1895, 23
    %v1897 = vsub.s32 %v1896, 127
    %v1898 = vand.u32 2147483647, %v521
    %v1899 = vand.u32 %v1898, 8388607
    %v1900 = vor.u32 %v1899, 8388608
    %v1901 = vsub.s32 0, %v1900
    %v1902 = vadd.s32 %v1897, 1
    %vm1903 = vcmp.gt.s32.totalorder %v1902, 0
    %v1904 = vsel %vm1903, %v1902, 0
    %v1905 = vshrl.u32 %v1904, 5
    %v1906 = vand.u32 %v1904, 31
    %v1907 = vsub.s32 32, %v1906
    %v1908 = vshrl.u32 683565275, %v1907
    %v1909 = vshll.u32 683565275, %v1906
    %v1910 = vshrl.u32 2475754826, %v1907
    %v1911 = vor.u32 %v1909, %v1910
    %v1912 = vshll.u32 2475754826, %v1906
    %v1913 = vshrl.u32 2131351028, %v1907
    %v1914 = vor.u32 %v1912, %v1913
    %v1915 = vshll.u32 2131351028, %v1906
    %v1916 = vshrl.u32 2102212464, %v1907
    %v1917 = vor.u32 %v1915, %v1916
    %v1918 = vshll.u32 2102212464, %v1906
    %v1919 = vshrl.u32 920167782, %v1907
    %v1920 = vor.u32 %v1918, %v1919
    %v1921 = vshll.u32 920167782, %v1906
    %v1922 = vshrl.u32 1326507024, %v1907
    %v1923 = vor.u32 %v1921, %v1922
    %vm1924 = vcmp.lt.s32.totalorder %v1905, 1
    %vm1925 = vcmp.lt.s32.totalorder %v1905, 2
    %vm1926 = vcmp.lt.s32.totalorder %v1905, 3
    %vm1927 = vcmp.lt.s32.totalorder %v1905, 4
    %v1928 = vsel %vm1924, %v1908, %v1911
    %v1929 = vsel %vm1927, %v1917, 2102212464
    %v1930 = vsel %vm1926, %v1914, %v1929
    %v1931 = vsel %vm1925, %v1928, %v1930
    %v1932 = vsel %vm1924, %v1911, %v1914
    %v1933 = vsel %vm1927, %v1920, 920167782
    %v1934 = vsel %vm1926, %v1917, %v1933
    %v1935 = vsel %vm1925, %v1932, %v1934
    %v1936 = vsel %vm1924, %v1914, %v1917
    %v1937 = vsel %vm1927, %v1923, 1326507024
    %v1938 = vsel %vm1926, %v1920, %v1937
    %v1939 = vsel %vm1925, %v1936, %v1938
    %v1940 = vshll.u32 %v1900, 8
    %v1941 = vmul.u32.u64.compose %v1940, %v1939
    %v1942 = vextract.low.u32 %v1941
    %v1943 = vextract.high.u32 %v1941
    %v1944 = vmul.u32.u64.compose %v1940, %v1935
    %v1945 = vextract.low.u32 %v1944
    %v1946 = vextract.high.u32 %v1944
    %v1947 = vmul.u32 %v1940, %v1931
    %v1948 = vadd.s32 %v1943, %v1945
    %vm1949 = vc.u32 %v1943, %v1945
    %v1950 = vadd.s32 %v1946, 1
    %v1951 = vsel %vm1949, %v1950, %v1946
    %v1952 = vadd.s32 %v1947, %v1951
    %v1953 = vadd.s32 %v1952, 536870912
    %v1954 = vshrl.u32 %v1953, 30
    %v1955 = vshll.u32 %v1954, 30
    %v1956 = vsub.s32 %v1952, %v1955
    %vm1957 = vcmp.lt.s32.totalorder %v1956, 0
    %v1958 = vsub.s32 0, %v1956
    %v1959 = vsel %vm1957, %v1958, %v1956
    %v1960 = vclz %v1959
    %v1961 = vsub.s32 %v1960, 2
    %vm1962 = vcmp.gt.s32.totalorder 0, %v1961
    %v1963 = vsel %vm1962, 0, %v1961
    %v1964 = vsub.s32 32, %v1963
    %v1965 = vshll.u32 %v1956, %v1963
    %v1966 = vshrl.u32 %v1948, %v1964
    %v1967 = vor.u32 %v1965, %v1966
    %v1968 = vsub.s32 4294967266, %v1963
    %v1969 = vadd.s32 %v1968, 127
    %v1970 = vshll.u32 %v1969, 23
    %v1971 = vor.u32 4788187, %v1970
    %v1972 = vand.u32 2147483647, %v1971
    %v1974 = vcvt.s32.f32 %v1967
    %v1975 = vmul.f32 %v1974, %v1972
    %v1976 = vxor.u32 %v1975, 2147483648
    %v1977 = vsel %vm1894, %v1976, %v1975
    %v1978 = vsub.s32 4, %v1954
    %v1979 = vsel %vm1894, %v1978, %v1954
    %v1980 = vsel %vm1893, %v521, %v1977
    %v1981 = vsel %vm1893, 0, %v1979
    %v1982 = vcosq.f32.pop %v1980
    %v1983 = vsinq.f32.pop %v1980
    %vm1984 = vweird.f32 %v521
    %v1985 = vadd.s32 %v1981, 3
    %v1986 = vand.u32 %v1985, 3
    %vm1987 = vcmp.lt.s32.totalorder %v1986, 2
    %vm1988 = vcmp.eq.s32.totalorder %v1986, 0
    %v1989 = vxor.u32 %v1983, 2147483648
    %v1990 = vsel %vm1988, %v1982, %v1989
    %vm1991 = vcmp.eq.s32.totalorder %v1986, 2
    %v1992 = vxor.u32 %v1982, 2147483648
    %v1993 = vsel %vm1991, %v1992, %v1983
    %v1994 = vsel %vm1987, %v1990, %v1993
    %v1995 = vsel %vm1984, nan, %v1994
    %v1996 = vand.u32 2147483647, %v522
    %vm1997 = vcmp.le.f32.partialorder %v1996, 0.7853982
    %vm1998 = vcmp.lt.s32.totalorder %v522, 0
    %v1999 = vand.u32 %v522, 2139095040
    %v2000 = vshrl.u32 %v1999, 23
    %v2001 = vsub.s32 %v2000, 127
    %v2002 = vand.u32 2147483647, %v522
    %v2003 = vand.u32 %v2002, 8388607
    %v2004 = vor.u32 %v2003, 8388608
    %v2005 = vsub.s32 0, %v2004
    %v2006 = vadd.s32 %v2001, 1
    %vm2007 = vcmp.gt.s32.totalorder %v2006, 0
    %v2008 = vsel %vm2007, %v2006, 0
    %v2009 = vshrl.u32 %v2008, 5
    %v2010 = vand.u32 %v2008, 31
    %v2011 = vsub.s32 32, %v2010
    %v2012 = vshrl.u32 683565275, %v2011
    %v2013 = vshll.u32 683565275, %v2010
    %v2014 = vshrl.u32 2475754826, %v2011
    %v2015 = vor.u32 %v2013, %v2014
    %v2016 = vshll.u32 2475754826, %v2010
    %v2017 = vshrl.u32 2131351028, %v2011
    %v2018 = vor.u32 %v2016, %v2017
    %v2019 = vshll.u32 2131351028, %v2010
    %v2020 = vshrl.u32 2102212464, %v2011
    %v2021 = vor.u32 %v2019, %v2020
    %v2022 = vshll.u32 2102212464, %v2010
    %v2023 = vshrl.u32 920167782, %v2011
    %v2024 = vor.u32 %v2022, %v2023
    %v2025 = vshll.u32 920167782, %v2010
    %v2026 = vshrl.u32 1326507024, %v2011
    %v2027 = vor.u32 %v2025, %v2026
    %vm2028 = vcmp.lt.s32.totalorder %v2009, 1
    %vm2029 = vcmp.lt.s32.totalorder %v2009, 2
    %vm2030 = vcmp.lt.s32.totalorder %v2009, 3
    %vm2031 = vcmp.lt.s32.totalorder %v2009, 4
    %v2032 = vsel %vm2028, %v2012, %v2015
    %v2033 = vsel %vm2031, %v2021, 2102212464
    %v2034 = vsel %vm2030, %v2018, %v2033
    %v2035 = vsel %vm2029, %v2032, %v2034
    %v2036 = vsel %vm2028, %v2015, %v2018
    %v2037 = vsel %vm2031, %v2024, 920167782
    %v2038 = vsel %vm2030, %v2021, %v2037
    %v2039 = vsel %vm2029, %v2036, %v2038
    %v2040 = vsel %vm2028, %v2018, %v2021
    %v2041 = vsel %vm2031, %v2027, 1326507024
    %v2042 = vsel %vm2030, %v2024, %v2041
    %v2043 = vsel %vm2029, %v2040, %v2042
    %v2044 = vshll.u32 %v2004, 8
    %v2045 = vmul.u32.u64.compose %v2044, %v2043
    %v2046 = vextract.low.u32 %v2045
    %v2047 = vextract.high.u32 %v2045
    %v2048 = vmul.u32.u64.compose %v2044, %v2039
    %v2049 = vextract.low.u32 %v2048
    %v2050 = vextract.high.u32 %v2048
    %v2051 = vmul.u32 %v2044, %v2035
    %v2052 = vadd.s32 %v2047, %v2049
    %vm2053 = vc.u32 %v2047, %v2049
    %v2054 = vadd.s32 %v2050, 1
    %v2055 = vsel %vm2053, %v2054, %v2050
    %v2056 = vadd.s32 %v2051, %v2055
    %v2057 = vadd.s32 %v2056, 536870912
    %v2058 = vshrl.u32 %v2057, 30
    %v2059 = vshll.u32 %v2058, 30
    %v2060 = vsub.s32 %v2056, %v2059
    %vm2061 = vcmp.lt.s32.totalorder %v2060, 0
    %v2062 = vsub.s32 0, %v2060
    %v2063 = vsel %vm2061, %v2062, %v2060
    %v2064 = vclz %v2063
    %v2065 = vsub.s32 %v2064, 2
    %vm2066 = vcmp.gt.s32.totalorder 0, %v2065
    %v2067 = vsel %vm2066, 0, %v2065
    %v2068 = vsub.s32 32, %v2067
    %v2069 = vshll.u32 %v2060, %v2067
    %v2070 = vshrl.u32 %v2052, %v2068
    %v2071 = vor.u32 %v2069, %v2070
    %v2072 = vsub.s32 4294967266, %v2067
    %v2073 = vadd.s32 %v2072, 127
    %v2074 = vshll.u32 %v2073, 23
    %v2075 = vor.u32 4788187, %v2074
    %v2076 = vand.u32 2147483647, %v2075
    %v2078 = vcvt.s32.f32 %v2071
    %v2079 = vmul.f32 %v2078, %v2076
    %v2080 = vxor.u32 %v2079, 2147483648
    %v2081 = vsel %vm1998, %v2080, %v2079
    %v2082 = vsub.s32 4, %v2058
    %v2083 = vsel %vm1998, %v2082, %v2058
    %v2084 = vsel %vm1997, %v522, %v2081
    %v2085 = vsel %vm1997, 0, %v2083
    %v2086 = vcosq.f32.pop %v2084
    %v2087 = vsinq.f32.pop %v2084
    %vm2088 = vweird.f32 %v522
    %v2089 = vadd.s32 %v2085, 3
    %v2090 = vand.u32 %v2089, 3
    %vm2091 = vcmp.lt.s32.totalorder %v2090, 2
    %vm2092 = vcmp.eq.s32.totalorder %v2090, 0
    %v2093 = vxor.u32 %v2087, 2147483648
    %v2094 = vsel %vm2092, %v2086, %v2093
    %vm2095 = vcmp.eq.s32.totalorder %v2090, 2
    %v2096 = vxor.u32 %v2086, 2147483648
    %v2097 = vsel %vm2095, %v2096, %v2087
    %v2098 = vsel %vm2091, %v2094, %v2097
    %v2099 = vsel %vm2088, nan, %v2098
    %v2100 = vand.u32 2147483647, %v523
    %vm2101 = vcmp.le.f32.partialorder %v2100, 0.7853982
    %vm2102 = vcmp.lt.s32.totalorder %v523, 0
    %v2103 = vand.u32 %v523, 2139095040
    %v2104 = vshrl.u32 %v2103, 23
    %v2105 = vsub.s32 %v2104, 127
    %v2106 = vand.u32 2147483647, %v523
    %v2107 = vand.u32 %v2106, 8388607
    %v2108 = vor.u32 %v2107, 8388608
    %v2109 = vsub.s32 0, %v2108
    %v2110 = vadd.s32 %v2105, 1
    %vm2111 = vcmp.gt.s32.totalorder %v2110, 0
    %v2112 = vsel %vm2111, %v2110, 0
    %v2113 = vshrl.u32 %v2112, 5
    %v2114 = vand.u32 %v2112, 31
    %v2115 = vsub.s32 32, %v2114
    %v2116 = vshrl.u32 683565275, %v2115
    %v2117 = vshll.u32 683565275, %v2114
    %v2118 = vshrl.u32 2475754826, %v2115
    %v2119 = vor.u32 %v2117, %v2118
    %v2120 = vshll.u32 2475754826, %v2114
    %v2121 = vshrl.u32 2131351028, %v2115
    %v2122 = vor.u32 %v2120, %v2121
    %v2123 = vshll.u32 2131351028, %v2114
    %v2124 = vshrl.u32 2102212464, %v2115
    %v2125 = vor.u32 %v2123, %v2124
    %v2126 = vshll.u32 2102212464, %v2114
    %v2127 = vshrl.u32 920167782, %v2115
    %v2128 = vor.u32 %v2126, %v2127
    %v2129 = vshll.u32 920167782, %v2114
    %v2130 = vshrl.u32 1326507024, %v2115
    %v2131 = vor.u32 %v2129, %v2130
    %vm2132 = vcmp.lt.s32.totalorder %v2113, 1
    %vm2133 = vcmp.lt.s32.totalorder %v2113, 2
    %vm2134 = vcmp.lt.s32.totalorder %v2113, 3
    %vm2135 = vcmp.lt.s32.totalorder %v2113, 4
    %v2136 = vsel %vm2132, %v2116, %v2119
    %v2137 = vsel %vm2135, %v2125, 2102212464
    %v2138 = vsel %vm2134, %v2122, %v2137
    %v2139 = vsel %vm2133, %v2136, %v2138
    %v2140 = vsel %vm2132, %v2119, %v2122
    %v2141 = vsel %vm2135, %v2128, 920167782
    %v2142 = vsel %vm2134, %v2125, %v2141
    %v2143 = vsel %vm2133, %v2140, %v2142
    %v2144 = vsel %vm2132, %v2122, %v2125
    %v2145 = vsel %vm2135, %v2131, 1326507024
    %v2146 = vsel %vm2134, %v2128, %v2145
    %v2147 = vsel %vm2133, %v2144, %v2146
    %v2148 = vshll.u32 %v2108, 8
    %v2149 = vmul.u32.u64.compose %v2148, %v2147
    %v2150 = vextract.low.u32 %v2149
    %v2151 = vextract.high.u32 %v2149
    %v2152 = vmul.u32.u64.compose %v2148, %v2143
    %v2153 = vextract.low.u32 %v2152
    %v2154 = vextract.high.u32 %v2152
    %v2155 = vmul.u32 %v2148, %v2139
    %v2156 = vadd.s32 %v2151, %v2153
    %vm2157 = vc.u32 %v2151, %v2153
    %v2158 = vadd.s32 %v2154, 1
    %v2159 = vsel %vm2157, %v2158, %v2154
    %v2160 = vadd.s32 %v2155, %v2159
    %v2161 = vadd.s32 %v2160, 536870912
    %v2162 = vshrl.u32 %v2161, 30
    %v2163 = vshll.u32 %v2162, 30
    %v2164 = vsub.s32 %v2160, %v2163
    %vm2165 = vcmp.lt.s32.totalorder %v2164, 0
    %v2166 = vsub.s32 0, %v2164
    %v2167 = vsel %vm2165, %v2166, %v2164
    %v2168 = vclz %v2167
    %v2169 = vsub.s32 %v2168, 2
    %vm2170 = vcmp.gt.s32.totalorder 0, %v2169
    %v2171 = vsel %vm2170, 0, %v2169
    %v2172 = vsub.s32 32, %v2171
    %v2173 = vshll.u32 %v2164, %v2171
    %v2174 = vshrl.u32 %v2156, %v2172
    %v2175 = vor.u32 %v2173, %v2174
    %v2176 = vsub.s32 4294967266, %v2171
    %v2177 = vadd.s32 %v2176, 127
    %v2178 = vshll.u32 %v2177, 23
    %v2179 = vor.u32 4788187, %v2178
    %v2180 = vand.u32 2147483647, %v2179
    %v2182 = vcvt.s32.f32 %v2175
    %v2183 = vmul.f32 %v2182, %v2180
    %v2184 = vxor.u32 %v2183, 2147483648
    %v2185 = vsel %vm2102, %v2184, %v2183
    %v2186 = vsub.s32 4, %v2162
    %v2187 = vsel %vm2102, %v2186, %v2162
    %v2188 = vsel %vm2101, %v523, %v2185
    %v2189 = vsel %vm2101, 0, %v2187
    %v2190 = vcosq.f32.pop %v2188
    %v2191 = vsinq.f32.pop %v2188
    %vm2192 = vweird.f32 %v523
    %v2193 = vadd.s32 %v2189, 3
    %v2194 = vand.u32 %v2193, 3
    %vm2195 = vcmp.lt.s32.totalorder %v2194, 2
    %vm2196 = vcmp.eq.s32.totalorder %v2194, 0
    %v2197 = vxor.u32 %v2191, 2147483648
    %v2198 = vsel %vm2196, %v2190, %v2197
    %vm2199 = vcmp.eq.s32.totalorder %v2194, 2
    %v2200 = vxor.u32 %v2190, 2147483648
    %v2201 = vsel %vm2199, %v2200, %v2191
    %v2202 = vsel %vm2195, %v2198, %v2201
    %v2203 = vsel %vm2192, nan, %v2202
    %v2204 = vand.u32 2147483647, %v524
    %vm2205 = vcmp.le.f32.partialorder %v2204, 0.7853982
    %vm2206 = vcmp.lt.s32.totalorder %v524, 0
    %v2207 = vand.u32 %v524, 2139095040
    %v2208 = vshrl.u32 %v2207, 23
    %v2209 = vsub.s32 %v2208, 127
    %v2210 = vand.u32 2147483647, %v524
    %v2211 = vand.u32 %v2210, 8388607
    %v2212 = vor.u32 %v2211, 8388608
    %v2213 = vsub.s32 0, %v2212
    %v2214 = vadd.s32 %v2209, 1
    %vm2215 = vcmp.gt.s32.totalorder %v2214, 0
    %v2216 = vsel %vm2215, %v2214, 0
    %v2217 = vshrl.u32 %v2216, 5
    %v2218 = vand.u32 %v2216, 31
    %v2219 = vsub.s32 32, %v2218
    %v2220 = vshrl.u32 683565275, %v2219
    %v2221 = vshll.u32 683565275, %v2218
    %v2222 = vshrl.u32 2475754826, %v2219
    %v2223 = vor.u32 %v2221, %v2222
    %v2224 = vshll.u32 2475754826, %v2218
    %v2225 = vshrl.u32 2131351028, %v2219
    %v2226 = vor.u32 %v2224, %v2225
    %v2227 = vshll.u32 2131351028, %v2218
    %v2228 = vshrl.u32 2102212464, %v2219
    %v2229 = vor.u32 %v2227, %v2228
    %v2230 = vshll.u32 2102212464, %v2218
    %v2231 = vshrl.u32 920167782, %v2219
    %v2232 = vor.u32 %v2230, %v2231
    %v2233 = vshll.u32 920167782, %v2218
    %v2234 = vshrl.u32 1326507024, %v2219
    %v2235 = vor.u32 %v2233, %v2234
    %vm2236 = vcmp.lt.s32.totalorder %v2217, 1
    %vm2237 = vcmp.lt.s32.totalorder %v2217, 2
    %vm2238 = vcmp.lt.s32.totalorder %v2217, 3
    %vm2239 = vcmp.lt.s32.totalorder %v2217, 4
    %v2240 = vsel %vm2236, %v2220, %v2223
    %v2241 = vsel %vm2239, %v2229, 2102212464
    %v2242 = vsel %vm2238, %v2226, %v2241
    %v2243 = vsel %vm2237, %v2240, %v2242
    %v2244 = vsel %vm2236, %v2223, %v2226
    %v2245 = vsel %vm2239, %v2232, 920167782
    %v2246 = vsel %vm2238, %v2229, %v2245
    %v2247 = vsel %vm2237, %v2244, %v2246
    %v2248 = vsel %vm2236, %v2226, %v2229
    %v2249 = vsel %vm2239, %v2235, 1326507024
    %v2250 = vsel %vm2238, %v2232, %v2249
    %v2251 = vsel %vm2237, %v2248, %v2250
    %v2252 = vshll.u32 %v2212, 8
    %v2253 = vmul.u32.u64.compose %v2252, %v2251
    %v2254 = vextract.low.u32 %v2253
    %v2255 = vextract.high.u32 %v2253
    %v2256 = vmul.u32.u64.compose %v2252, %v2247
    %v2257 = vextract.low.u32 %v2256
    %v2258 = vextract.high.u32 %v2256
    %v2259 = vmul.u32 %v2252, %v2243
    %v2260 = vadd.s32 %v2255, %v2257
    %vm2261 = vc.u32 %v2255, %v2257
    %v2262 = vadd.s32 %v2258, 1
    %v2263 = vsel %vm2261, %v2262, %v2258
    %v2264 = vadd.s32 %v2259, %v2263
    %v2265 = vadd.s32 %v2264, 536870912
    %v2266 = vshrl.u32 %v2265, 30
    %v2267 = vshll.u32 %v2266, 30
    %v2268 = vsub.s32 %v2264, %v2267
    %vm2269 = vcmp.lt.s32.totalorder %v2268, 0
    %v2270 = vsub.s32 0, %v2268
    %v2271 = vsel %vm2269, %v2270, %v2268
    %v2272 = vclz %v2271
    %v2273 = vsub.s32 %v2272, 2
    %vm2274 = vcmp.gt.s32.totalorder 0, %v2273
    %v2275 = vsel %vm2274, 0, %v2273
    %v2276 = vsub.s32 32, %v2275
    %v2277 = vshll.u32 %v2268, %v2275
    %v2278 = vshrl.u32 %v2260, %v2276
    %v2279 = vor.u32 %v2277, %v2278
    %v2280 = vsub.s32 4294967266, %v2275
    %v2281 = vadd.s32 %v2280, 127
    %v2282 = vshll.u32 %v2281, 23
    %v2283 = vor.u32 4788187, %v2282
    %v2284 = vand.u32 2147483647, %v2283
    %v2286 = vcvt.s32.f32 %v2279
    %v2287 = vmul.f32 %v2286, %v2284
    %v2288 = vxor.u32 %v2287, 2147483648
    %v2289 = vsel %vm2206, %v2288, %v2287
    %v2290 = vsub.s32 4, %v2266
    %v2291 = vsel %vm2206, %v2290, %v2266
    %v2292 = vsel %vm2205, %v524, %v2289
    %v2293 = vsel %vm2205, 0, %v2291
    %v2294 = vcosq.f32.pop %v2292
    %v2295 = vsinq.f32.pop %v2292
    %vm2296 = vweird.f32 %v524
    %v2297 = vadd.s32 %v2293, 3
    %v2298 = vand.u32 %v2297, 3
    %vm2299 = vcmp.lt.s32.totalorder %v2298, 2
    %vm2300 = vcmp.eq.s32.totalorder %v2298, 0
    %v2301 = vxor.u32 %v2295, 2147483648
    %v2302 = vsel %vm2300, %v2294, %v2301
    %vm2303 = vcmp.eq.s32.totalorder %v2298, 2
    %v2304 = vxor.u32 %v2294, 2147483648
    %v2305 = vsel %vm2303, %v2304, %v2295
    %v2306 = vsel %vm2299, %v2302, %v2305
    %v2307 = vsel %vm2296, nan, %v2306
    %v2308 = vand.u32 2147483647, %v525
    %vm2309 = vcmp.le.f32.partialorder %v2308, 0.7853982
    %vm2310 = vcmp.lt.s32.totalorder %v525, 0
    %v2311 = vand.u32 %v525, 2139095040
    %v2312 = vshrl.u32 %v2311, 23
    %v2313 = vsub.s32 %v2312, 127
    %v2314 = vand.u32 2147483647, %v525
    %v2315 = vand.u32 %v2314, 8388607
    %v2316 = vor.u32 %v2315, 8388608
    %v2317 = vsub.s32 0, %v2316
    %v2318 = vadd.s32 %v2313, 1
    %vm2319 = vcmp.gt.s32.totalorder %v2318, 0
    %v2320 = vsel %vm2319, %v2318, 0
    %v2321 = vshrl.u32 %v2320, 5
    %v2322 = vand.u32 %v2320, 31
    %v2323 = vsub.s32 32, %v2322
    %v2324 = vshrl.u32 683565275, %v2323
    %v2325 = vshll.u32 683565275, %v2322
    %v2326 = vshrl.u32 2475754826, %v2323
    %v2327 = vor.u32 %v2325, %v2326
    %v2328 = vshll.u32 2475754826, %v2322
    %v2329 = vshrl.u32 2131351028, %v2323
    %v2330 = vor.u32 %v2328, %v2329
    %v2331 = vshll.u32 2131351028, %v2322
    %v2332 = vshrl.u32 2102212464, %v2323
    %v2333 = vor.u32 %v2331, %v2332
    %v2334 = vshll.u32 2102212464, %v2322
    %v2335 = vshrl.u32 920167782, %v2323
    %v2336 = vor.u32 %v2334, %v2335
    %v2337 = vshll.u32 920167782, %v2322
    %v2338 = vshrl.u32 1326507024, %v2323
    %v2339 = vor.u32 %v2337, %v2338
    %vm2340 = vcmp.lt.s32.totalorder %v2321, 1
    %vm2341 = vcmp.lt.s32.totalorder %v2321, 2
    %vm2342 = vcmp.lt.s32.totalorder %v2321, 3
    %vm2343 = vcmp.lt.s32.totalorder %v2321, 4
    %v2344 = vsel %vm2340, %v2324, %v2327
    %v2345 = vsel %vm2343, %v2333, 2102212464
    %v2346 = vsel %vm2342, %v2330, %v2345
    %v2347 = vsel %vm2341, %v2344, %v2346
    %v2348 = vsel %vm2340, %v2327, %v2330
    %v2349 = vsel %vm2343, %v2336, 920167782
    %v2350 = vsel %vm2342, %v2333, %v2349
    %v2351 = vsel %vm2341, %v2348, %v2350
    %v2352 = vsel %vm2340, %v2330, %v2333
    %v2353 = vsel %vm2343, %v2339, 1326507024
    %v2354 = vsel %vm2342, %v2336, %v2353
    %v2355 = vsel %vm2341, %v2352, %v2354
    %v2356 = vshll.u32 %v2316, 8
    %v2357 = vmul.u32.u64.compose %v2356, %v2355
    %v2358 = vextract.low.u32 %v2357
    %v2359 = vextract.high.u32 %v2357
    %v2360 = vmul.u32.u64.compose %v2356, %v2351
    %v2361 = vextract.low.u32 %v2360
    %v2362 = vextract.high.u32 %v2360
    %v2363 = vmul.u32 %v2356, %v2347
    %v2364 = vadd.s32 %v2359, %v2361
    %vm2365 = vc.u32 %v2359, %v2361
    %v2366 = vadd.s32 %v2362, 1
    %v2367 = vsel %vm2365, %v2366, %v2362
    %v2368 = vadd.s32 %v2363, %v2367
    %v2369 = vadd.s32 %v2368, 536870912
    %v2370 = vshrl.u32 %v2369, 30
    %v2371 = vshll.u32 %v2370, 30
    %v2372 = vsub.s32 %v2368, %v2371
    %vm2373 = vcmp.lt.s32.totalorder %v2372, 0
    %v2374 = vsub.s32 0, %v2372
    %v2375 = vsel %vm2373, %v2374, %v2372
    %v2376 = vclz %v2375
    %v2377 = vsub.s32 %v2376, 2
    %vm2378 = vcmp.gt.s32.totalorder 0, %v2377
    %v2379 = vsel %vm2378, 0, %v2377
    %v2380 = vsub.s32 32, %v2379
    %v2381 = vshll.u32 %v2372, %v2379
    %v2382 = vshrl.u32 %v2364, %v2380
    %v2383 = vor.u32 %v2381, %v2382
    %v2384 = vsub.s32 4294967266, %v2379
    %v2385 = vadd.s32 %v2384, 127
    %v2386 = vshll.u32 %v2385, 23
    %v2387 = vor.u32 4788187, %v2386
    %v2388 = vand.u32 2147483647, %v2387
    %v2390 = vcvt.s32.f32 %v2383
    %v2391 = vmul.f32 %v2390, %v2388
    %v2392 = vxor.u32 %v2391, 2147483648
    %v2393 = vsel %vm2310, %v2392, %v2391
    %v2394 = vsub.s32 4, %v2370
    %v2395 = vsel %vm2310, %v2394, %v2370
    %v2396 = vsel %vm2309, %v525, %v2393
    %v2397 = vsel %vm2309, 0, %v2395
    %v2398 = vcosq.f32.pop %v2396
    %v2399 = vsinq.f32.pop %v2396
    %vm2400 = vweird.f32 %v525
    %v2401 = vadd.s32 %v2397, 3
    %v2402 = vand.u32 %v2401, 3
    %vm2403 = vcmp.lt.s32.totalorder %v2402, 2
    %vm2404 = vcmp.eq.s32.totalorder %v2402, 0
    %v2405 = vxor.u32 %v2399, 2147483648
    %v2406 = vsel %vm2404, %v2398, %v2405
    %vm2407 = vcmp.eq.s32.totalorder %v2402, 2
    %v2408 = vxor.u32 %v2398, 2147483648
    %v2409 = vsel %vm2407, %v2408, %v2399
    %v2410 = vsel %vm2403, %v2406, %v2409
    %v2411 = vsel %vm2400, nan, %v2410
    %v2412 = vand.u32 2147483647, %v526
    %vm2413 = vcmp.le.f32.partialorder %v2412, 0.7853982
    %vm2414 = vcmp.lt.s32.totalorder %v526, 0
    %v2415 = vand.u32 %v526, 2139095040
    %v2416 = vshrl.u32 %v2415, 23
    %v2417 = vsub.s32 %v2416, 127
    %v2418 = vand.u32 2147483647, %v526
    %v2419 = vand.u32 %v2418, 8388607
    %v2420 = vor.u32 %v2419, 8388608
    %v2421 = vsub.s32 0, %v2420
    %v2422 = vadd.s32 %v2417, 1
    %vm2423 = vcmp.gt.s32.totalorder %v2422, 0
    %v2424 = vsel %vm2423, %v2422, 0
    %v2425 = vshrl.u32 %v2424, 5
    %v2426 = vand.u32 %v2424, 31
    %v2427 = vsub.s32 32, %v2426
    %v2428 = vshrl.u32 683565275, %v2427
    %v2429 = vshll.u32 683565275, %v2426
    %v2430 = vshrl.u32 2475754826, %v2427
    %v2431 = vor.u32 %v2429, %v2430
    %v2432 = vshll.u32 2475754826, %v2426
    %v2433 = vshrl.u32 2131351028, %v2427
    %v2434 = vor.u32 %v2432, %v2433
    %v2435 = vshll.u32 2131351028, %v2426
    %v2436 = vshrl.u32 2102212464, %v2427
    %v2437 = vor.u32 %v2435, %v2436
    %v2438 = vshll.u32 2102212464, %v2426
    %v2439 = vshrl.u32 920167782, %v2427
    %v2440 = vor.u32 %v2438, %v2439
    %v2441 = vshll.u32 920167782, %v2426
    %v2442 = vshrl.u32 1326507024, %v2427
    %v2443 = vor.u32 %v2441, %v2442
    %vm2444 = vcmp.lt.s32.totalorder %v2425, 1
    %vm2445 = vcmp.lt.s32.totalorder %v2425, 2
    %vm2446 = vcmp.lt.s32.totalorder %v2425, 3
    %vm2447 = vcmp.lt.s32.totalorder %v2425, 4
    %v2448 = vsel %vm2444, %v2428, %v2431
    %v2449 = vsel %vm2447, %v2437, 2102212464
    %v2450 = vsel %vm2446, %v2434, %v2449
    %v2451 = vsel %vm2445, %v2448, %v2450
    %v2452 = vsel %vm2444, %v2431, %v2434
    %v2453 = vsel %vm2447, %v2440, 920167782
    %v2454 = vsel %vm2446, %v2437, %v2453
    %v2455 = vsel %vm2445, %v2452, %v2454
    %v2456 = vsel %vm2444, %v2434, %v2437
    %v2457 = vsel %vm2447, %v2443, 1326507024
    %v2458 = vsel %vm2446, %v2440, %v2457
    %v2459 = vsel %vm2445, %v2456, %v2458
    %v2460 = vshll.u32 %v2420, 8
    %v2461 = vmul.u32.u64.compose %v2460, %v2459
    %v2462 = vextract.low.u32 %v2461
    %v2463 = vextract.high.u32 %v2461
    %v2464 = vmul.u32.u64.compose %v2460, %v2455
    %v2465 = vextract.low.u32 %v2464
    %v2466 = vextract.high.u32 %v2464
    %v2467 = vmul.u32 %v2460, %v2451
    %v2468 = vadd.s32 %v2463, %v2465
    %vm2469 = vc.u32 %v2463, %v2465
    %v2470 = vadd.s32 %v2466, 1
    %v2471 = vsel %vm2469, %v2470, %v2466
    %v2472 = vadd.s32 %v2467, %v2471
    %v2473 = vadd.s32 %v2472, 536870912
    %v2474 = vshrl.u32 %v2473, 30
    %v2475 = vshll.u32 %v2474, 30
    %v2476 = vsub.s32 %v2472, %v2475
    %vm2477 = vcmp.lt.s32.totalorder %v2476, 0
    %v2478 = vsub.s32 0, %v2476
    %v2479 = vsel %vm2477, %v2478, %v2476
    %v2480 = vclz %v2479
    %v2481 = vsub.s32 %v2480, 2
    %vm2482 = vcmp.gt.s32.totalorder 0, %v2481
    %v2483 = vsel %vm2482, 0, %v2481
    %v2484 = vsub.s32 32, %v2483
    %v2485 = vshll.u32 %v2476, %v2483
    %v2486 = vshrl.u32 %v2468, %v2484
    %v2487 = vor.u32 %v2485, %v2486
    %v2488 = vsub.s32 4294967266, %v2483
    %v2489 = vadd.s32 %v2488, 127
    %v2490 = vshll.u32 %v2489, 23
    %v2491 = vor.u32 4788187, %v2490
    %v2492 = vand.u32 2147483647, %v2491
    %v2494 = vcvt.s32.f32 %v2487
    %v2495 = vmul.f32 %v2494, %v2492
    %v2496 = vxor.u32 %v2495, 2147483648
    %v2497 = vsel %vm2414, %v2496, %v2495
    %v2498 = vsub.s32 4, %v2474
    %v2499 = vsel %vm2414, %v2498, %v2474
    %v2500 = vsel %vm2413, %v526, %v2497
    %v2501 = vsel %vm2413, 0, %v2499
    %v2502 = vcosq.f32.pop %v2500
    %v2503 = vsinq.f32.pop %v2500
    %vm2504 = vweird.f32 %v526
    %v2505 = vadd.s32 %v2501, 3
    %v2506 = vand.u32 %v2505, 3
    %vm2507 = vcmp.lt.s32.totalorder %v2506, 2
    %vm2508 = vcmp.eq.s32.totalorder %v2506, 0
    %v2509 = vxor.u32 %v2503, 2147483648
    %v2510 = vsel %vm2508, %v2502, %v2509
    %vm2511 = vcmp.eq.s32.totalorder %v2506, 2
    %v2512 = vxor.u32 %v2502, 2147483648
    %v2513 = vsel %vm2511, %v2512, %v2503
    %v2514 = vsel %vm2507, %v2510, %v2513
    %v2515 = vsel %vm2504, nan, %v2514
    %v2516 = vand.u32 2147483647, %v527
    %vm2517 = vcmp.le.f32.partialorder %v2516, 0.7853982
    %vm2518 = vcmp.lt.s32.totalorder %v527, 0
    %v2519 = vand.u32 %v527, 2139095040
    %v2520 = vshrl.u32 %v2519, 23
    %v2521 = vsub.s32 %v2520, 127
    %v2522 = vand.u32 2147483647, %v527
    %v2523 = vand.u32 %v2522, 8388607
    %v2524 = vor.u32 %v2523, 8388608
    %v2525 = vsub.s32 0, %v2524
    %v2526 = vadd.s32 %v2521, 1
    %vm2527 = vcmp.gt.s32.totalorder %v2526, 0
    %v2528 = vsel %vm2527, %v2526, 0
    %v2529 = vshrl.u32 %v2528, 5
    %v2530 = vand.u32 %v2528, 31
    %v2531 = vsub.s32 32, %v2530
    %v2532 = vshrl.u32 683565275, %v2531
    %v2533 = vshll.u32 683565275, %v2530
    %v2534 = vshrl.u32 2475754826, %v2531
    %v2535 = vor.u32 %v2533, %v2534
    %v2536 = vshll.u32 2475754826, %v2530
    %v2537 = vshrl.u32 2131351028, %v2531
    %v2538 = vor.u32 %v2536, %v2537
    %v2539 = vshll.u32 2131351028, %v2530
    %v2540 = vshrl.u32 2102212464, %v2531
    %v2541 = vor.u32 %v2539, %v2540
    %v2542 = vshll.u32 2102212464, %v2530
    %v2543 = vshrl.u32 920167782, %v2531
    %v2544 = vor.u32 %v2542, %v2543
    %v2545 = vshll.u32 920167782, %v2530
    %v2546 = vshrl.u32 1326507024, %v2531
    %v2547 = vor.u32 %v2545, %v2546
    %vm2548 = vcmp.lt.s32.totalorder %v2529, 1
    %vm2549 = vcmp.lt.s32.totalorder %v2529, 2
    %vm2550 = vcmp.lt.s32.totalorder %v2529, 3
    %vm2551 = vcmp.lt.s32.totalorder %v2529, 4
    %v2552 = vsel %vm2548, %v2532, %v2535
    %v2553 = vsel %vm2551, %v2541, 2102212464
    %v2554 = vsel %vm2550, %v2538, %v2553
    %v2555 = vsel %vm2549, %v2552, %v2554
    %v2556 = vsel %vm2548, %v2535, %v2538
    %v2557 = vsel %vm2551, %v2544, 920167782
    %v2558 = vsel %vm2550, %v2541, %v2557
    %v2559 = vsel %vm2549, %v2556, %v2558
    %v2560 = vsel %vm2548, %v2538, %v2541
    %v2561 = vsel %vm2551, %v2547, 1326507024
    %v2562 = vsel %vm2550, %v2544, %v2561
    %v2563 = vsel %vm2549, %v2560, %v2562
    %v2564 = vshll.u32 %v2524, 8
    %v2565 = vmul.u32.u64.compose %v2564, %v2563
    %v2566 = vextract.low.u32 %v2565
    %v2567 = vextract.high.u32 %v2565
    %v2568 = vmul.u32.u64.compose %v2564, %v2559
    %v2569 = vextract.low.u32 %v2568
    %v2570 = vextract.high.u32 %v2568
    %v2571 = vmul.u32 %v2564, %v2555
    %v2572 = vadd.s32 %v2567, %v2569
    %vm2573 = vc.u32 %v2567, %v2569
    %v2574 = vadd.s32 %v2570, 1
    %v2575 = vsel %vm2573, %v2574, %v2570
    %v2576 = vadd.s32 %v2571, %v2575
    %v2577 = vadd.s32 %v2576, 536870912
    %v2578 = vshrl.u32 %v2577, 30
    %v2579 = vshll.u32 %v2578, 30
    %v2580 = vsub.s32 %v2576, %v2579
    %vm2581 = vcmp.lt.s32.totalorder %v2580, 0
    %v2582 = vsub.s32 0, %v2580
    %v2583 = vsel %vm2581, %v2582, %v2580
    %v2584 = vclz %v2583
    %v2585 = vsub.s32 %v2584, 2
    %vm2586 = vcmp.gt.s32.totalorder 0, %v2585
    %v2587 = vsel %vm2586, 0, %v2585
    %v2588 = vsub.s32 32, %v2587
    %v2589 = vshll.u32 %v2580, %v2587
    %v2590 = vshrl.u32 %v2572, %v2588
    %v2591 = vor.u32 %v2589, %v2590
    %v2592 = vsub.s32 4294967266, %v2587
    %v2593 = vadd.s32 %v2592, 127
    %v2594 = vshll.u32 %v2593, 23
    %v2595 = vor.u32 4788187, %v2594
    %v2596 = vand.u32 2147483647, %v2595
    %v2598 = vcvt.s32.f32 %v2591
    %v2599 = vmul.f32 %v2598, %v2596
    %v2600 = vxor.u32 %v2599, 2147483648
    %v2601 = vsel %vm2518, %v2600, %v2599
    %v2602 = vsub.s32 4, %v2578
    %v2603 = vsel %vm2518, %v2602, %v2578
    %v2604 = vsel %vm2517, %v527, %v2601
    %v2605 = vsel %vm2517, 0, %v2603
    %v2606 = vcosq.f32.pop %v2604
    %v2607 = vsinq.f32.pop %v2604
    %vm2608 = vweird.f32 %v527
    %v2609 = vadd.s32 %v2605, 3
    %v2610 = vand.u32 %v2609, 3
    %vm2611 = vcmp.lt.s32.totalorder %v2610, 2
    %vm2612 = vcmp.eq.s32.totalorder %v2610, 0
    %v2613 = vxor.u32 %v2607, 2147483648
    %v2614 = vsel %vm2612, %v2606, %v2613
    %vm2615 = vcmp.eq.s32.totalorder %v2610, 2
    %v2616 = vxor.u32 %v2606, 2147483648
    %v2617 = vsel %vm2615, %v2616, %v2607
    %v2618 = vsel %vm2611, %v2614, %v2617
    %v2619 = vsel %vm2608, nan, %v2618
    %v2620 = vand.u32 2147483647, %v528
    %vm2621 = vcmp.le.f32.partialorder %v2620, 0.7853982
    %vm2622 = vcmp.lt.s32.totalorder %v528, 0
    %v2623 = vand.u32 %v528, 2139095040
    %v2624 = vshrl.u32 %v2623, 23
    %v2625 = vsub.s32 %v2624, 127
    %v2626 = vand.u32 2147483647, %v528
    %v2627 = vand.u32 %v2626, 8388607
    %v2628 = vor.u32 %v2627, 8388608
    %v2629 = vsub.s32 0, %v2628
    %v2630 = vadd.s32 %v2625, 1
    %vm2631 = vcmp.gt.s32.totalorder %v2630, 0
    %v2632 = vsel %vm2631, %v2630, 0
    %v2633 = vshrl.u32 %v2632, 5
    %v2634 = vand.u32 %v2632, 31
    %v2635 = vsub.s32 32, %v2634
    %v2636 = vshrl.u32 683565275, %v2635
    %v2637 = vshll.u32 683565275, %v2634
    %v2638 = vshrl.u32 2475754826, %v2635
    %v2639 = vor.u32 %v2637, %v2638
    %v2640 = vshll.u32 2475754826, %v2634
    %v2641 = vshrl.u32 2131351028, %v2635
    %v2642 = vor.u32 %v2640, %v2641
    %v2643 = vshll.u32 2131351028, %v2634
    %v2644 = vshrl.u32 2102212464, %v2635
    %v2645 = vor.u32 %v2643, %v2644
    %v2646 = vshll.u32 2102212464, %v2634
    %v2647 = vshrl.u32 920167782, %v2635
    %v2648 = vor.u32 %v2646, %v2647
    %v2649 = vshll.u32 920167782, %v2634
    %v2650 = vshrl.u32 1326507024, %v2635
    %v2651 = vor.u32 %v2649, %v2650
    %vm2652 = vcmp.lt.s32.totalorder %v2633, 1
    %vm2653 = vcmp.lt.s32.totalorder %v2633, 2
    %vm2654 = vcmp.lt.s32.totalorder %v2633, 3
    %vm2655 = vcmp.lt.s32.totalorder %v2633, 4
    %v2656 = vsel %vm2652, %v2636, %v2639
    %v2657 = vsel %vm2655, %v2645, 2102212464
    %v2658 = vsel %vm2654, %v2642, %v2657
    %v2659 = vsel %vm2653, %v2656, %v2658
    %v2660 = vsel %vm2652, %v2639, %v2642
    %v2661 = vsel %vm2655, %v2648, 920167782
    %v2662 = vsel %vm2654, %v2645, %v2661
    %v2663 = vsel %vm2653, %v2660, %v2662
    %v2664 = vsel %vm2652, %v2642, %v2645
    %v2665 = vsel %vm2655, %v2651, 1326507024
    %v2666 = vsel %vm2654, %v2648, %v2665
    %v2667 = vsel %vm2653, %v2664, %v2666
    %v2668 = vshll.u32 %v2628, 8
    %v2669 = vmul.u32.u64.compose %v2668, %v2667
    %v2670 = vextract.low.u32 %v2669
    %v2671 = vextract.high.u32 %v2669
    %v2672 = vmul.u32.u64.compose %v2668, %v2663
    %v2673 = vextract.low.u32 %v2672
    %v2674 = vextract.high.u32 %v2672
    %v2675 = vmul.u32 %v2668, %v2659
    %v2676 = vadd.s32 %v2671, %v2673
    %vm2677 = vc.u32 %v2671, %v2673
    %v2678 = vadd.s32 %v2674, 1
    %v2679 = vsel %vm2677, %v2678, %v2674
    %v2680 = vadd.s32 %v2675, %v2679
    %v2681 = vadd.s32 %v2680, 536870912
    %v2682 = vshrl.u32 %v2681, 30
    %v2683 = vshll.u32 %v2682, 30
    %v2684 = vsub.s32 %v2680, %v2683
    %vm2685 = vcmp.lt.s32.totalorder %v2684, 0
    %v2686 = vsub.s32 0, %v2684
    %v2687 = vsel %vm2685, %v2686, %v2684
    %v2688 = vclz %v2687
    %v2689 = vsub.s32 %v2688, 2
    %vm2690 = vcmp.gt.s32.totalorder 0, %v2689
    %v2691 = vsel %vm2690, 0, %v2689
    %v2692 = vsub.s32 32, %v2691
    %v2693 = vshll.u32 %v2684, %v2691
    %v2694 = vshrl.u32 %v2676, %v2692
    %v2695 = vor.u32 %v2693, %v2694
    %v2696 = vsub.s32 4294967266, %v2691
    %v2697 = vadd.s32 %v2696, 127
    %v2698 = vshll.u32 %v2697, 23
    %v2699 = vor.u32 4788187, %v2698
    %v2700 = vand.u32 2147483647, %v2699
    %v2702 = vcvt.s32.f32 %v2695
    %v2703 = vmul.f32 %v2702, %v2700
    %v2704 = vxor.u32 %v2703, 2147483648
    %v2705 = vsel %vm2622, %v2704, %v2703
    %v2706 = vsub.s32 4, %v2682
    %v2707 = vsel %vm2622, %v2706, %v2682
    %v2708 = vsel %vm2621, %v528, %v2705
    %v2709 = vsel %vm2621, 0, %v2707
    %v2710 = vcosq.f32.pop %v2708
    %v2711 = vsinq.f32.pop %v2708
    %vm2712 = vweird.f32 %v528
    %v2713 = vadd.s32 %v2709, 3
    %v2714 = vand.u32 %v2713, 3
    %vm2715 = vcmp.lt.s32.totalorder %v2714, 2
    %vm2716 = vcmp.eq.s32.totalorder %v2714, 0
    %v2717 = vxor.u32 %v2711, 2147483648
    %v2718 = vsel %vm2716, %v2710, %v2717
    %vm2719 = vcmp.eq.s32.totalorder %v2714, 2
    %v2720 = vxor.u32 %v2710, 2147483648
    %v2721 = vsel %vm2719, %v2720, %v2711
    %v2722 = vsel %vm2715, %v2718, %v2721
    %v2723 = vsel %vm2712, nan, %v2722
    %v2724 = vand.u32 2147483647, %v529
    %vm2725 = vcmp.le.f32.partialorder %v2724, 0.7853982
    %vm2726 = vcmp.lt.s32.totalorder %v529, 0
    %v2727 = vand.u32 %v529, 2139095040
    %v2728 = vshrl.u32 %v2727, 23
    %v2729 = vsub.s32 %v2728, 127
    %v2730 = vand.u32 2147483647, %v529
    %v2731 = vand.u32 %v2730, 8388607
    %v2732 = vor.u32 %v2731, 8388608
    %v2733 = vsub.s32 0, %v2732
    %v2734 = vadd.s32 %v2729, 1
    %vm2735 = vcmp.gt.s32.totalorder %v2734, 0
    %v2736 = vsel %vm2735, %v2734, 0
    %v2737 = vshrl.u32 %v2736, 5
    %v2738 = vand.u32 %v2736, 31
    %v2739 = vsub.s32 32, %v2738
    %v2740 = vshrl.u32 683565275, %v2739
    %v2741 = vshll.u32 683565275, %v2738
    %v2742 = vshrl.u32 2475754826, %v2739
    %v2743 = vor.u32 %v2741, %v2742
    %v2744 = vshll.u32 2475754826, %v2738
    %v2745 = vshrl.u32 2131351028, %v2739
    %v2746 = vor.u32 %v2744, %v2745
    %v2747 = vshll.u32 2131351028, %v2738
    %v2748 = vshrl.u32 2102212464, %v2739
    %v2749 = vor.u32 %v2747, %v2748
    %v2750 = vshll.u32 2102212464, %v2738
    %v2751 = vshrl.u32 920167782, %v2739
    %v2752 = vor.u32 %v2750, %v2751
    %v2753 = vshll.u32 920167782, %v2738
    %v2754 = vshrl.u32 1326507024, %v2739
    %v2755 = vor.u32 %v2753, %v2754
    %vm2756 = vcmp.lt.s32.totalorder %v2737, 1
    %vm2757 = vcmp.lt.s32.totalorder %v2737, 2
    %vm2758 = vcmp.lt.s32.totalorder %v2737, 3
    %vm2759 = vcmp.lt.s32.totalorder %v2737, 4
    %v2760 = vsel %vm2756, %v2740, %v2743
    %v2761 = vsel %vm2759, %v2749, 2102212464
    %v2762 = vsel %vm2758, %v2746, %v2761
    %v2763 = vsel %vm2757, %v2760, %v2762
    %v2764 = vsel %vm2756, %v2743, %v2746
    %v2765 = vsel %vm2759, %v2752, 920167782
    %v2766 = vsel %vm2758, %v2749, %v2765
    %v2767 = vsel %vm2757, %v2764, %v2766
    %v2768 = vsel %vm2756, %v2746, %v2749
    %v2769 = vsel %vm2759, %v2755, 1326507024
    %v2770 = vsel %vm2758, %v2752, %v2769
    %v2771 = vsel %vm2757, %v2768, %v2770
    %v2772 = vshll.u32 %v2732, 8
    %v2773 = vmul.u32.u64.compose %v2772, %v2771
    %v2774 = vextract.low.u32 %v2773
    %v2775 = vextract.high.u32 %v2773
    %v2776 = vmul.u32.u64.compose %v2772, %v2767
    %v2777 = vextract.low.u32 %v2776
    %v2778 = vextract.high.u32 %v2776
    %v2779 = vmul.u32 %v2772, %v2763
    %v2780 = vadd.s32 %v2775, %v2777
    %vm2781 = vc.u32 %v2775, %v2777
    %v2782 = vadd.s32 %v2778, 1
    %v2783 = vsel %vm2781, %v2782, %v2778
    %v2784 = vadd.s32 %v2779, %v2783
    %v2785 = vadd.s32 %v2784, 536870912
    %v2786 = vshrl.u32 %v2785, 30
    %v2787 = vshll.u32 %v2786, 30
    %v2788 = vsub.s32 %v2784, %v2787
    %vm2789 = vcmp.lt.s32.totalorder %v2788, 0
    %v2790 = vsub.s32 0, %v2788
    %v2791 = vsel %vm2789, %v2790, %v2788
    %v2792 = vclz %v2791
    %v2793 = vsub.s32 %v2792, 2
    %vm2794 = vcmp.gt.s32.totalorder 0, %v2793
    %v2795 = vsel %vm2794, 0, %v2793
    %v2796 = vsub.s32 32, %v2795
    %v2797 = vshll.u32 %v2788, %v2795
    %v2798 = vshrl.u32 %v2780, %v2796
    %v2799 = vor.u32 %v2797, %v2798
    %v2800 = vsub.s32 4294967266, %v2795
    %v2801 = vadd.s32 %v2800, 127
    %v2802 = vshll.u32 %v2801, 23
    %v2803 = vor.u32 4788187, %v2802
    %v2804 = vand.u32 2147483647, %v2803
    %v2806 = vcvt.s32.f32 %v2799
    %v2807 = vmul.f32 %v2806, %v2804
    %v2808 = vxor.u32 %v2807, 2147483648
    %v2809 = vsel %vm2726, %v2808, %v2807
    %v2810 = vsub.s32 4, %v2786
    %v2811 = vsel %vm2726, %v2810, %v2786
    %v2812 = vsel %vm2725, %v529, %v2809
    %v2813 = vsel %vm2725, 0, %v2811
    %v2814 = vcosq.f32.pop %v2812
    %v2815 = vsinq.f32.pop %v2812
    %vm2816 = vweird.f32 %v529
    %v2817 = vadd.s32 %v2813, 3
    %v2818 = vand.u32 %v2817, 3
    %vm2819 = vcmp.lt.s32.totalorder %v2818, 2
    %vm2820 = vcmp.eq.s32.totalorder %v2818, 0
    %v2821 = vxor.u32 %v2815, 2147483648
    %v2822 = vsel %vm2820, %v2814, %v2821
    %vm2823 = vcmp.eq.s32.totalorder %v2818, 2
    %v2824 = vxor.u32 %v2814, 2147483648
    %v2825 = vsel %vm2823, %v2824, %v2815
    %v2826 = vsel %vm2819, %v2822, %v2825
    %v2827 = vsel %vm2816, nan, %v2826
    %v2828 = vand.u32 2147483647, %v530
    %vm2829 = vcmp.le.f32.partialorder %v2828, 0.7853982
    %vm2830 = vcmp.lt.s32.totalorder %v530, 0
    %v2831 = vand.u32 %v530, 2139095040
    %v2832 = vshrl.u32 %v2831, 23
    %v2833 = vsub.s32 %v2832, 127
    %v2834 = vand.u32 2147483647, %v530
    %v2835 = vand.u32 %v2834, 8388607
    %v2836 = vor.u32 %v2835, 8388608
    %v2837 = vsub.s32 0, %v2836
    %v2838 = vadd.s32 %v2833, 1
    %vm2839 = vcmp.gt.s32.totalorder %v2838, 0
    %v2840 = vsel %vm2839, %v2838, 0
    %v2841 = vshrl.u32 %v2840, 5
    %v2842 = vand.u32 %v2840, 31
    %v2843 = vsub.s32 32, %v2842
    %v2844 = vshrl.u32 683565275, %v2843
    %v2845 = vshll.u32 683565275, %v2842
    %v2846 = vshrl.u32 2475754826, %v2843
    %v2847 = vor.u32 %v2845, %v2846
    %v2848 = vshll.u32 2475754826, %v2842
    %v2849 = vshrl.u32 2131351028, %v2843
    %v2850 = vor.u32 %v2848, %v2849
    %v2851 = vshll.u32 2131351028, %v2842
    %v2852 = vshrl.u32 2102212464, %v2843
    %v2853 = vor.u32 %v2851, %v2852
    %v2854 = vshll.u32 2102212464, %v2842
    %v2855 = vshrl.u32 920167782, %v2843
    %v2856 = vor.u32 %v2854, %v2855
    %v2857 = vshll.u32 920167782, %v2842
    %v2858 = vshrl.u32 1326507024, %v2843
    %v2859 = vor.u32 %v2857, %v2858
    %vm2860 = vcmp.lt.s32.totalorder %v2841, 1
    %vm2861 = vcmp.lt.s32.totalorder %v2841, 2
    %vm2862 = vcmp.lt.s32.totalorder %v2841, 3
    %vm2863 = vcmp.lt.s32.totalorder %v2841, 4
    %v2864 = vsel %vm2860, %v2844, %v2847
    %v2865 = vsel %vm2863, %v2853, 2102212464
    %v2866 = vsel %vm2862, %v2850, %v2865
    %v2867 = vsel %vm2861, %v2864, %v2866
    %v2868 = vsel %vm2860, %v2847, %v2850
    %v2869 = vsel %vm2863, %v2856, 920167782
    %v2870 = vsel %vm2862, %v2853, %v2869
    %v2871 = vsel %vm2861, %v2868, %v2870
    %v2872 = vsel %vm2860, %v2850, %v2853
    %v2873 = vsel %vm2863, %v2859, 1326507024
    %v2874 = vsel %vm2862, %v2856, %v2873
    %v2875 = vsel %vm2861, %v2872, %v2874
    %v2876 = vshll.u32 %v2836, 8
    %v2877 = vmul.u32.u64.compose %v2876, %v2875
    %v2878 = vextract.low.u32 %v2877
    %v2879 = vextract.high.u32 %v2877
    %v2880 = vmul.u32.u64.compose %v2876, %v2871
    %v2881 = vextract.low.u32 %v2880
    %v2882 = vextract.high.u32 %v2880
    %v2883 = vmul.u32 %v2876, %v2867
    %v2884 = vadd.s32 %v2879, %v2881
    %vm2885 = vc.u32 %v2879, %v2881
    %v2886 = vadd.s32 %v2882, 1
    %v2887 = vsel %vm2885, %v2886, %v2882
    %v2888 = vadd.s32 %v2883, %v2887
    %v2889 = vadd.s32 %v2888, 536870912
    %v2890 = vshrl.u32 %v2889, 30
    %v2891 = vshll.u32 %v2890, 30
    %v2892 = vsub.s32 %v2888, %v2891
    %vm2893 = vcmp.lt.s32.totalorder %v2892, 0
    %v2894 = vsub.s32 0, %v2892
    %v2895 = vsel %vm2893, %v2894, %v2892
    %v2896 = vclz %v2895
    %v2897 = vsub.s32 %v2896, 2
    %vm2898 = vcmp.gt.s32.totalorder 0, %v2897
    %v2899 = vsel %vm2898, 0, %v2897
    %v2900 = vsub.s32 32, %v2899
    %v2901 = vshll.u32 %v2892, %v2899
    %v2902 = vshrl.u32 %v2884, %v2900
    %v2903 = vor.u32 %v2901, %v2902
    %v2904 = vsub.s32 4294967266, %v2899
    %v2905 = vadd.s32 %v2904, 127
    %v2906 = vshll.u32 %v2905, 23
    %v2907 = vor.u32 4788187, %v2906
    %v2908 = vand.u32 2147483647, %v2907
    %v2910 = vcvt.s32.f32 %v2903
    %v2911 = vmul.f32 %v2910, %v2908
    %v2912 = vxor.u32 %v2911, 2147483648
    %v2913 = vsel %vm2830, %v2912, %v2911
    %v2914 = vsub.s32 4, %v2890
    %v2915 = vsel %vm2830, %v2914, %v2890
    %v2916 = vsel %vm2829, %v530, %v2913
    %v2917 = vsel %vm2829, 0, %v2915
    %v2918 = vcosq.f32.pop %v2916
    %v2919 = vsinq.f32.pop %v2916
    %vm2920 = vweird.f32 %v530
    %v2921 = vadd.s32 %v2917, 3
    %v2922 = vand.u32 %v2921, 3
    %vm2923 = vcmp.lt.s32.totalorder %v2922, 2
    %vm2924 = vcmp.eq.s32.totalorder %v2922, 0
    %v2925 = vxor.u32 %v2919, 2147483648
    %v2926 = vsel %vm2924, %v2918, %v2925
    %vm2927 = vcmp.eq.s32.totalorder %v2922, 2
    %v2928 = vxor.u32 %v2918, 2147483648
    %v2929 = vsel %vm2927, %v2928, %v2919
    %v2930 = vsel %vm2923, %v2926, %v2929
    %v2931 = vsel %vm2920, nan, %v2930
    %v2932 = vand.u32 2147483647, %v531
    %vm2933 = vcmp.le.f32.partialorder %v2932, 0.7853982
    %vm2934 = vcmp.lt.s32.totalorder %v531, 0
    %v2935 = vand.u32 %v531, 2139095040
    %v2936 = vshrl.u32 %v2935, 23
    %v2937 = vsub.s32 %v2936, 127
    %v2938 = vand.u32 2147483647, %v531
    %v2939 = vand.u32 %v2938, 8388607
    %v2940 = vor.u32 %v2939, 8388608
    %v2941 = vsub.s32 0, %v2940
    %v2942 = vadd.s32 %v2937, 1
    %vm2943 = vcmp.gt.s32.totalorder %v2942, 0
    %v2944 = vsel %vm2943, %v2942, 0
    %v2945 = vshrl.u32 %v2944, 5
    %v2946 = vand.u32 %v2944, 31
    %v2947 = vsub.s32 32, %v2946
    %v2948 = vshrl.u32 683565275, %v2947
    %v2949 = vshll.u32 683565275, %v2946
    %v2950 = vshrl.u32 2475754826, %v2947
    %v2951 = vor.u32 %v2949, %v2950
    %v2952 = vshll.u32 2475754826, %v2946
    %v2953 = vshrl.u32 2131351028, %v2947
    %v2954 = vor.u32 %v2952, %v2953
    %v2955 = vshll.u32 2131351028, %v2946
    %v2956 = vshrl.u32 2102212464, %v2947
    %v2957 = vor.u32 %v2955, %v2956
    %v2958 = vshll.u32 2102212464, %v2946
    %v2959 = vshrl.u32 920167782, %v2947
    %v2960 = vor.u32 %v2958, %v2959
    %v2961 = vshll.u32 920167782, %v2946
    %v2962 = vshrl.u32 1326507024, %v2947
    %v2963 = vor.u32 %v2961, %v2962
    %vm2964 = vcmp.lt.s32.totalorder %v2945, 1
    %vm2965 = vcmp.lt.s32.totalorder %v2945, 2
    %vm2966 = vcmp.lt.s32.totalorder %v2945, 3
    %vm2967 = vcmp.lt.s32.totalorder %v2945, 4
    %v2968 = vsel %vm2964, %v2948, %v2951
    %v2969 = vsel %vm2967, %v2957, 2102212464
    %v2970 = vsel %vm2966, %v2954, %v2969
    %v2971 = vsel %vm2965, %v2968, %v2970
    %v2972 = vsel %vm2964, %v2951, %v2954
    %v2973 = vsel %vm2967, %v2960, 920167782
    %v2974 = vsel %vm2966, %v2957, %v2973
    %v2975 = vsel %vm2965, %v2972, %v2974
    %v2976 = vsel %vm2964, %v2954, %v2957
    %v2977 = vsel %vm2967, %v2963, 1326507024
    %v2978 = vsel %vm2966, %v2960, %v2977
    %v2979 = vsel %vm2965, %v2976, %v2978
    %v2980 = vshll.u32 %v2940, 8
    %v2981 = vmul.u32.u64.compose %v2980, %v2979
    %v2982 = vextract.low.u32 %v2981
    %v2983 = vextract.high.u32 %v2981
    %v2984 = vmul.u32.u64.compose %v2980, %v2975
    %v2985 = vextract.low.u32 %v2984
    %v2986 = vextract.high.u32 %v2984
    %v2987 = vmul.u32 %v2980, %v2971
    %v2988 = vadd.s32 %v2983, %v2985
    %vm2989 = vc.u32 %v2983, %v2985
    %v2990 = vadd.s32 %v2986, 1
    %v2991 = vsel %vm2989, %v2990, %v2986
    %v2992 = vadd.s32 %v2987, %v2991
    %v2993 = vadd.s32 %v2992, 536870912
    %v2994 = vshrl.u32 %v2993, 30
    %v2995 = vshll.u32 %v2994, 30
    %v2996 = vsub.s32 %v2992, %v2995
    %vm2997 = vcmp.lt.s32.totalorder %v2996, 0
    %v2998 = vsub.s32 0, %v2996
    %v2999 = vsel %vm2997, %v2998, %v2996
    %v3000 = vclz %v2999
    %v3001 = vsub.s32 %v3000, 2
    %vm3002 = vcmp.gt.s32.totalorder 0, %v3001
    %v3003 = vsel %vm3002, 0, %v3001
    %v3004 = vsub.s32 32, %v3003
    %v3005 = vshll.u32 %v2996, %v3003
    %v3006 = vshrl.u32 %v2988, %v3004
    %v3007 = vor.u32 %v3005, %v3006
    %v3008 = vsub.s32 4294967266, %v3003
    %v3009 = vadd.s32 %v3008, 127
    %v3010 = vshll.u32 %v3009, 23
    %v3011 = vor.u32 4788187, %v3010
    %v3012 = vand.u32 2147483647, %v3011
    %v3014 = vcvt.s32.f32 %v3007
    %v3015 = vmul.f32 %v3014, %v3012
    %v3016 = vxor.u32 %v3015, 2147483648
    %v3017 = vsel %vm2934, %v3016, %v3015
    %v3018 = vsub.s32 4, %v2994
    %v3019 = vsel %vm2934, %v3018, %v2994
    %v3020 = vsel %vm2933, %v531, %v3017
    %v3021 = vsel %vm2933, 0, %v3019
    %v3022 = vcosq.f32.pop %v3020
    %v3023 = vsinq.f32.pop %v3020
    %vm3024 = vweird.f32 %v531
    %v3025 = vadd.s32 %v3021, 3
    %v3026 = vand.u32 %v3025, 3
    %vm3027 = vcmp.lt.s32.totalorder %v3026, 2
    %vm3028 = vcmp.eq.s32.totalorder %v3026, 0
    %v3029 = vxor.u32 %v3023, 2147483648
    %v3030 = vsel %vm3028, %v3022, %v3029
    %vm3031 = vcmp.eq.s32.totalorder %v3026, 2
    %v3032 = vxor.u32 %v3022, 2147483648
    %v3033 = vsel %vm3031, %v3032, %v3023
    %v3034 = vsel %vm3027, %v3030, %v3033
    %v3035 = vsel %vm3024, nan, %v3034
    %v3036 = vand.u32 2147483647, %v532
    %vm3037 = vcmp.le.f32.partialorder %v3036, 0.7853982
    %vm3038 = vcmp.lt.s32.totalorder %v532, 0
    %v3039 = vand.u32 %v532, 2139095040
    %v3040 = vshrl.u32 %v3039, 23
    %v3041 = vsub.s32 %v3040, 127
    %v3042 = vand.u32 2147483647, %v532
    %v3043 = vand.u32 %v3042, 8388607
    %v3044 = vor.u32 %v3043, 8388608
    %v3045 = vsub.s32 0, %v3044
    %v3046 = vadd.s32 %v3041, 1
    %vm3047 = vcmp.gt.s32.totalorder %v3046, 0
    %v3048 = vsel %vm3047, %v3046, 0
    %v3049 = vshrl.u32 %v3048, 5
    %v3050 = vand.u32 %v3048, 31
    %v3051 = vsub.s32 32, %v3050
    %v3052 = vshrl.u32 683565275, %v3051
    %v3053 = vshll.u32 683565275, %v3050
    %v3054 = vshrl.u32 2475754826, %v3051
    %v3055 = vor.u32 %v3053, %v3054
    %v3056 = vshll.u32 2475754826, %v3050
    %v3057 = vshrl.u32 2131351028, %v3051
    %v3058 = vor.u32 %v3056, %v3057
    %v3059 = vshll.u32 2131351028, %v3050
    %v3060 = vshrl.u32 2102212464, %v3051
    %v3061 = vor.u32 %v3059, %v3060
    %v3062 = vshll.u32 2102212464, %v3050
    %v3063 = vshrl.u32 920167782, %v3051
    %v3064 = vor.u32 %v3062, %v3063
    %v3065 = vshll.u32 920167782, %v3050
    %v3066 = vshrl.u32 1326507024, %v3051
    %v3067 = vor.u32 %v3065, %v3066
    %vm3068 = vcmp.lt.s32.totalorder %v3049, 1
    %vm3069 = vcmp.lt.s32.totalorder %v3049, 2
    %vm3070 = vcmp.lt.s32.totalorder %v3049, 3
    %vm3071 = vcmp.lt.s32.totalorder %v3049, 4
    %v3072 = vsel %vm3068, %v3052, %v3055
    %v3073 = vsel %vm3071, %v3061, 2102212464
    %v3074 = vsel %vm3070, %v3058, %v3073
    %v3075 = vsel %vm3069, %v3072, %v3074
    %v3076 = vsel %vm3068, %v3055, %v3058
    %v3077 = vsel %vm3071, %v3064, 920167782
    %v3078 = vsel %vm3070, %v3061, %v3077
    %v3079 = vsel %vm3069, %v3076, %v3078
    %v3080 = vsel %vm3068, %v3058, %v3061
    %v3081 = vsel %vm3071, %v3067, 1326507024
    %v3082 = vsel %vm3070, %v3064, %v3081
    %v3083 = vsel %vm3069, %v3080, %v3082
    %v3084 = vshll.u32 %v3044, 8
    %v3085 = vmul.u32.u64.compose %v3084, %v3083
    %v3086 = vextract.low.u32 %v3085
    %v3087 = vextract.high.u32 %v3085
    %v3088 = vmul.u32.u64.compose %v3084, %v3079
    %v3089 = vextract.low.u32 %v3088
    %v3090 = vextract.high.u32 %v3088
    %v3091 = vmul.u32 %v3084, %v3075
    %v3092 = vadd.s32 %v3087, %v3089
    %vm3093 = vc.u32 %v3087, %v3089
    %v3094 = vadd.s32 %v3090, 1
    %v3095 = vsel %vm3093, %v3094, %v3090
    %v3096 = vadd.s32 %v3091, %v3095
    %v3097 = vadd.s32 %v3096, 536870912
    %v3098 = vshrl.u32 %v3097, 30
    %v3099 = vshll.u32 %v3098, 30
    %v3100 = vsub.s32 %v3096, %v3099
    %vm3101 = vcmp.lt.s32.totalorder %v3100, 0
    %v3102 = vsub.s32 0, %v3100
    %v3103 = vsel %vm3101, %v3102, %v3100
    %v3104 = vclz %v3103
    %v3105 = vsub.s32 %v3104, 2
    %vm3106 = vcmp.gt.s32.totalorder 0, %v3105
    %v3107 = vsel %vm3106, 0, %v3105
    %v3108 = vsub.s32 32, %v3107
    %v3109 = vshll.u32 %v3100, %v3107
    %v3110 = vshrl.u32 %v3092, %v3108
    %v3111 = vor.u32 %v3109, %v3110
    %v3112 = vsub.s32 4294967266, %v3107
    %v3113 = vadd.s32 %v3112, 127
    %v3114 = vshll.u32 %v3113, 23
    %v3115 = vor.u32 4788187, %v3114
    %v3116 = vand.u32 2147483647, %v3115
    %v3118 = vcvt.s32.f32 %v3111
    %v3119 = vmul.f32 %v3118, %v3116
    %v3120 = vxor.u32 %v3119, 2147483648
    %v3121 = vsel %vm3038, %v3120, %v3119
    %v3122 = vsub.s32 4, %v3098
    %v3123 = vsel %vm3038, %v3122, %v3098
    %v3124 = vsel %vm3037, %v532, %v3121
    %v3125 = vsel %vm3037, 0, %v3123
    %v3126 = vcosq.f32.pop %v3124
    %v3127 = vsinq.f32.pop %v3124
    %vm3128 = vweird.f32 %v532
    %v3129 = vadd.s32 %v3125, 3
    %v3130 = vand.u32 %v3129, 3
    %vm3131 = vcmp.lt.s32.totalorder %v3130, 2
    %vm3132 = vcmp.eq.s32.totalorder %v3130, 0
    %v3133 = vxor.u32 %v3127, 2147483648
    %v3134 = vsel %vm3132, %v3126, %v3133
    %vm3135 = vcmp.eq.s32.totalorder %v3130, 2
    %v3136 = vxor.u32 %v3126, 2147483648
    %v3137 = vsel %vm3135, %v3136, %v3127
    %v3138 = vsel %vm3131, %v3134, %v3137
    %v3139 = vsel %vm3128, nan, %v3138
    %v3140 = vand.u32 2147483647, %v533
    %vm3141 = vcmp.le.f32.partialorder %v3140, 0.7853982
    %vm3142 = vcmp.lt.s32.totalorder %v533, 0
    %v3143 = vand.u32 %v533, 2139095040
    %v3144 = vshrl.u32 %v3143, 23
    %v3145 = vsub.s32 %v3144, 127
    %v3146 = vand.u32 2147483647, %v533
    %v3147 = vand.u32 %v3146, 8388607
    %v3148 = vor.u32 %v3147, 8388608
    %v3149 = vsub.s32 0, %v3148
    %v3150 = vadd.s32 %v3145, 1
    %vm3151 = vcmp.gt.s32.totalorder %v3150, 0
    %v3152 = vsel %vm3151, %v3150, 0
    %v3153 = vshrl.u32 %v3152, 5
    %v3154 = vand.u32 %v3152, 31
    %v3155 = vsub.s32 32, %v3154
    %v3156 = vshrl.u32 683565275, %v3155
    %v3157 = vshll.u32 683565275, %v3154
    %v3158 = vshrl.u32 2475754826, %v3155
    %v3159 = vor.u32 %v3157, %v3158
    %v3160 = vshll.u32 2475754826, %v3154
    %v3161 = vshrl.u32 2131351028, %v3155
    %v3162 = vor.u32 %v3160, %v3161
    %v3163 = vshll.u32 2131351028, %v3154
    %v3164 = vshrl.u32 2102212464, %v3155
    %v3165 = vor.u32 %v3163, %v3164
    %v3166 = vshll.u32 2102212464, %v3154
    %v3167 = vshrl.u32 920167782, %v3155
    %v3168 = vor.u32 %v3166, %v3167
    %v3169 = vshll.u32 920167782, %v3154
    %v3170 = vshrl.u32 1326507024, %v3155
    %v3171 = vor.u32 %v3169, %v3170
    %vm3172 = vcmp.lt.s32.totalorder %v3153, 1
    %vm3173 = vcmp.lt.s32.totalorder %v3153, 2
    %vm3174 = vcmp.lt.s32.totalorder %v3153, 3
    %vm3175 = vcmp.lt.s32.totalorder %v3153, 4
    %v3176 = vsel %vm3172, %v3156, %v3159
    %v3177 = vsel %vm3175, %v3165, 2102212464
    %v3178 = vsel %vm3174, %v3162, %v3177
    %v3179 = vsel %vm3173, %v3176, %v3178
    %v3180 = vsel %vm3172, %v3159, %v3162
    %v3181 = vsel %vm3175, %v3168, 920167782
    %v3182 = vsel %vm3174, %v3165, %v3181
    %v3183 = vsel %vm3173, %v3180, %v3182
    %v3184 = vsel %vm3172, %v3162, %v3165
    %v3185 = vsel %vm3175, %v3171, 1326507024
    %v3186 = vsel %vm3174, %v3168, %v3185
    %v3187 = vsel %vm3173, %v3184, %v3186
    %v3188 = vshll.u32 %v3148, 8
    %v3189 = vmul.u32.u64.compose %v3188, %v3187
    %v3190 = vextract.low.u32 %v3189
    %v3191 = vextract.high.u32 %v3189
    %v3192 = vmul.u32.u64.compose %v3188, %v3183
    %v3193 = vextract.low.u32 %v3192
    %v3194 = vextract.high.u32 %v3192
    %v3195 = vmul.u32 %v3188, %v3179
    %v3196 = vadd.s32 %v3191, %v3193
    %vm3197 = vc.u32 %v3191, %v3193
    %v3198 = vadd.s32 %v3194, 1
    %v3199 = vsel %vm3197, %v3198, %v3194
    %v3200 = vadd.s32 %v3195, %v3199
    %v3201 = vadd.s32 %v3200, 536870912
    %v3202 = vshrl.u32 %v3201, 30
    %v3203 = vshll.u32 %v3202, 30
    %v3204 = vsub.s32 %v3200, %v3203
    %vm3205 = vcmp.lt.s32.totalorder %v3204, 0
    %v3206 = vsub.s32 0, %v3204
    %v3207 = vsel %vm3205, %v3206, %v3204
    %v3208 = vclz %v3207
    %v3209 = vsub.s32 %v3208, 2
    %vm3210 = vcmp.gt.s32.totalorder 0, %v3209
    %v3211 = vsel %vm3210, 0, %v3209
    %v3212 = vsub.s32 32, %v3211
    %v3213 = vshll.u32 %v3204, %v3211
    %v3214 = vshrl.u32 %v3196, %v3212
    %v3215 = vor.u32 %v3213, %v3214
    %v3216 = vsub.s32 4294967266, %v3211
    %v3217 = vadd.s32 %v3216, 127
    %v3218 = vshll.u32 %v3217, 23
    %v3219 = vor.u32 4788187, %v3218
    %v3220 = vand.u32 2147483647, %v3219
    %v3222 = vcvt.s32.f32 %v3215
    %v3223 = vmul.f32 %v3222, %v3220
    %v3224 = vxor.u32 %v3223, 2147483648
    %v3225 = vsel %vm3142, %v3224, %v3223
    %v3226 = vsub.s32 4, %v3202
    %v3227 = vsel %vm3142, %v3226, %v3202
    %v3228 = vsel %vm3141, %v533, %v3225
    %v3229 = vsel %vm3141, 0, %v3227
    %v3230 = vcosq.f32.pop %v3228
    %v3231 = vsinq.f32.pop %v3228
    %vm3232 = vweird.f32 %v533
    %v3233 = vadd.s32 %v3229, 3
    %v3234 = vand.u32 %v3233, 3
    %vm3235 = vcmp.lt.s32.totalorder %v3234, 2
    %vm3236 = vcmp.eq.s32.totalorder %v3234, 0
    %v3237 = vxor.u32 %v3231, 2147483648
    %v3238 = vsel %vm3236, %v3230, %v3237
    %vm3239 = vcmp.eq.s32.totalorder %v3234, 2
    %v3240 = vxor.u32 %v3230, 2147483648
    %v3241 = vsel %vm3239, %v3240, %v3231
    %v3242 = vsel %vm3235, %v3238, %v3241
    %v3243 = vsel %vm3232, nan, %v3242
    %v3244 = vand.u32 2147483647, %v534
    %vm3245 = vcmp.le.f32.partialorder %v3244, 0.7853982
    %vm3246 = vcmp.lt.s32.totalorder %v534, 0
    %v3247 = vand.u32 %v534, 2139095040
    %v3248 = vshrl.u32 %v3247, 23
    %v3249 = vsub.s32 %v3248, 127
    %v3250 = vand.u32 2147483647, %v534
    %v3251 = vand.u32 %v3250, 8388607
    %v3252 = vor.u32 %v3251, 8388608
    %v3253 = vsub.s32 0, %v3252
    %v3254 = vadd.s32 %v3249, 1
    %vm3255 = vcmp.gt.s32.totalorder %v3254, 0
    %v3256 = vsel %vm3255, %v3254, 0
    %v3257 = vshrl.u32 %v3256, 5
    %v3258 = vand.u32 %v3256, 31
    %v3259 = vsub.s32 32, %v3258
    %v3260 = vshrl.u32 683565275, %v3259
    %v3261 = vshll.u32 683565275, %v3258
    %v3262 = vshrl.u32 2475754826, %v3259
    %v3263 = vor.u32 %v3261, %v3262
    %v3264 = vshll.u32 2475754826, %v3258
    %v3265 = vshrl.u32 2131351028, %v3259
    %v3266 = vor.u32 %v3264, %v3265
    %v3267 = vshll.u32 2131351028, %v3258
    %v3268 = vshrl.u32 2102212464, %v3259
    %v3269 = vor.u32 %v3267, %v3268
    %v3270 = vshll.u32 2102212464, %v3258
    %v3271 = vshrl.u32 920167782, %v3259
    %v3272 = vor.u32 %v3270, %v3271
    %v3273 = vshll.u32 920167782, %v3258
    %v3274 = vshrl.u32 1326507024, %v3259
    %v3275 = vor.u32 %v3273, %v3274
    %vm3276 = vcmp.lt.s32.totalorder %v3257, 1
    %vm3277 = vcmp.lt.s32.totalorder %v3257, 2
    %vm3278 = vcmp.lt.s32.totalorder %v3257, 3
    %vm3279 = vcmp.lt.s32.totalorder %v3257, 4
    %v3280 = vsel %vm3276, %v3260, %v3263
    %v3281 = vsel %vm3279, %v3269, 2102212464
    %v3282 = vsel %vm3278, %v3266, %v3281
    %v3283 = vsel %vm3277, %v3280, %v3282
    %v3284 = vsel %vm3276, %v3263, %v3266
    %v3285 = vsel %vm3279, %v3272, 920167782
    %v3286 = vsel %vm3278, %v3269, %v3285
    %v3287 = vsel %vm3277, %v3284, %v3286
    %v3288 = vsel %vm3276, %v3266, %v3269
    %v3289 = vsel %vm3279, %v3275, 1326507024
    %v3290 = vsel %vm3278, %v3272, %v3289
    %v3291 = vsel %vm3277, %v3288, %v3290
    %v3292 = vshll.u32 %v3252, 8
    %v3293 = vmul.u32.u64.compose %v3292, %v3291
    %v3294 = vextract.low.u32 %v3293
    %v3295 = vextract.high.u32 %v3293
    %v3296 = vmul.u32.u64.compose %v3292, %v3287
    %v3297 = vextract.low.u32 %v3296
    %v3298 = vextract.high.u32 %v3296
    %v3299 = vmul.u32 %v3292, %v3283
    %v3300 = vadd.s32 %v3295, %v3297
    %vm3301 = vc.u32 %v3295, %v3297
    %v3302 = vadd.s32 %v3298, 1
    %v3303 = vsel %vm3301, %v3302, %v3298
    %v3304 = vadd.s32 %v3299, %v3303
    %v3305 = vadd.s32 %v3304, 536870912
    %v3306 = vshrl.u32 %v3305, 30
    %v3307 = vshll.u32 %v3306, 30
    %v3308 = vsub.s32 %v3304, %v3307
    %vm3309 = vcmp.lt.s32.totalorder %v3308, 0
    %v3310 = vsub.s32 0, %v3308
    %v3311 = vsel %vm3309, %v3310, %v3308
    %v3312 = vclz %v3311
    %v3313 = vsub.s32 %v3312, 2
    %vm3314 = vcmp.gt.s32.totalorder 0, %v3313
    %v3315 = vsel %vm3314, 0, %v3313
    %v3316 = vsub.s32 32, %v3315
    %v3317 = vshll.u32 %v3308, %v3315
    %v3318 = vshrl.u32 %v3300, %v3316
    %v3319 = vor.u32 %v3317, %v3318
    %v3320 = vsub.s32 4294967266, %v3315
    %v3321 = vadd.s32 %v3320, 127
    %v3322 = vshll.u32 %v3321, 23
    %v3323 = vor.u32 4788187, %v3322
    %v3324 = vand.u32 2147483647, %v3323
    %v3326 = vcvt.s32.f32 %v3319
    %v3327 = vmul.f32 %v3326, %v3324
    %v3328 = vxor.u32 %v3327, 2147483648
    %v3329 = vsel %vm3246, %v3328, %v3327
    %v3330 = vsub.s32 4, %v3306
    %v3331 = vsel %vm3246, %v3330, %v3306
    %v3332 = vsel %vm3245, %v534, %v3329
    %v3333 = vsel %vm3245, 0, %v3331
    %v3334 = vcosq.f32.pop %v3332
    %v3335 = vsinq.f32.pop %v3332
    %vm3336 = vweird.f32 %v534
    %v3337 = vadd.s32 %v3333, 3
    %v3338 = vand.u32 %v3337, 3
    %vm3339 = vcmp.lt.s32.totalorder %v3338, 2
    %vm3340 = vcmp.eq.s32.totalorder %v3338, 0
    %v3341 = vxor.u32 %v3335, 2147483648
    %v3342 = vsel %vm3340, %v3334, %v3341
    %vm3343 = vcmp.eq.s32.totalorder %v3338, 2
    %v3344 = vxor.u32 %v3334, 2147483648
    %v3345 = vsel %vm3343, %v3344, %v3335
    %v3346 = vsel %vm3339, %v3342, %v3345
    %v3347 = vsel %vm3336, nan, %v3346
    %v3348 = vand.u32 2147483647, %v535
    %vm3349 = vcmp.le.f32.partialorder %v3348, 0.7853982
    %vm3350 = vcmp.lt.s32.totalorder %v535, 0
    %v3351 = vand.u32 %v535, 2139095040
    %v3352 = vshrl.u32 %v3351, 23
    %v3353 = vsub.s32 %v3352, 127
    %v3354 = vand.u32 2147483647, %v535
    %v3355 = vand.u32 %v3354, 8388607
    %v3356 = vor.u32 %v3355, 8388608
    %v3357 = vsub.s32 0, %v3356
    %v3358 = vadd.s32 %v3353, 1
    %vm3359 = vcmp.gt.s32.totalorder %v3358, 0
    %v3360 = vsel %vm3359, %v3358, 0
    %v3361 = vshrl.u32 %v3360, 5
    %v3362 = vand.u32 %v3360, 31
    %v3363 = vsub.s32 32, %v3362
    %v3364 = vshrl.u32 683565275, %v3363
    %v3365 = vshll.u32 683565275, %v3362
    %v3366 = vshrl.u32 2475754826, %v3363
    %v3367 = vor.u32 %v3365, %v3366
    %v3368 = vshll.u32 2475754826, %v3362
    %v3369 = vshrl.u32 2131351028, %v3363
    %v3370 = vor.u32 %v3368, %v3369
    %v3371 = vshll.u32 2131351028, %v3362
    %v3372 = vshrl.u32 2102212464, %v3363
    %v3373 = vor.u32 %v3371, %v3372
    %v3374 = vshll.u32 2102212464, %v3362
    %v3375 = vshrl.u32 920167782, %v3363
    %v3376 = vor.u32 %v3374, %v3375
    %v3377 = vshll.u32 920167782, %v3362
    %v3378 = vshrl.u32 1326507024, %v3363
    %v3379 = vor.u32 %v3377, %v3378
    %vm3380 = vcmp.lt.s32.totalorder %v3361, 1
    %vm3381 = vcmp.lt.s32.totalorder %v3361, 2
    %vm3382 = vcmp.lt.s32.totalorder %v3361, 3
    %vm3383 = vcmp.lt.s32.totalorder %v3361, 4
    %v3384 = vsel %vm3380, %v3364, %v3367
    %v3385 = vsel %vm3383, %v3373, 2102212464
    %v3386 = vsel %vm3382, %v3370, %v3385
    %v3387 = vsel %vm3381, %v3384, %v3386
    %v3388 = vsel %vm3380, %v3367, %v3370
    %v3389 = vsel %vm3383, %v3376, 920167782
    %v3390 = vsel %vm3382, %v3373, %v3389
    %v3391 = vsel %vm3381, %v3388, %v3390
    %v3392 = vsel %vm3380, %v3370, %v3373
    %v3393 = vsel %vm3383, %v3379, 1326507024
    %v3394 = vsel %vm3382, %v3376, %v3393
    %v3395 = vsel %vm3381, %v3392, %v3394
    %v3396 = vshll.u32 %v3356, 8
    %v3397 = vmul.u32.u64.compose %v3396, %v3395
    %v3398 = vextract.low.u32 %v3397
    %v3399 = vextract.high.u32 %v3397
    %v3400 = vmul.u32.u64.compose %v3396, %v3391
    %v3401 = vextract.low.u32 %v3400
    %v3402 = vextract.high.u32 %v3400
    %v3403 = vmul.u32 %v3396, %v3387
    %v3404 = vadd.s32 %v3399, %v3401
    %vm3405 = vc.u32 %v3399, %v3401
    %v3406 = vadd.s32 %v3402, 1
    %v3407 = vsel %vm3405, %v3406, %v3402
    %v3408 = vadd.s32 %v3403, %v3407
    %v3409 = vadd.s32 %v3408, 536870912
    %v3410 = vshrl.u32 %v3409, 30
    %v3411 = vshll.u32 %v3410, 30
    %v3412 = vsub.s32 %v3408, %v3411
    %vm3413 = vcmp.lt.s32.totalorder %v3412, 0
    %v3414 = vsub.s32 0, %v3412
    %v3415 = vsel %vm3413, %v3414, %v3412
    %v3416 = vclz %v3415
    %v3417 = vsub.s32 %v3416, 2
    %vm3418 = vcmp.gt.s32.totalorder 0, %v3417
    %v3419 = vsel %vm3418, 0, %v3417
    %v3420 = vsub.s32 32, %v3419
    %v3421 = vshll.u32 %v3412, %v3419
    %v3422 = vshrl.u32 %v3404, %v3420
    %v3423 = vor.u32 %v3421, %v3422
    %v3424 = vsub.s32 4294967266, %v3419
    %v3425 = vadd.s32 %v3424, 127
    %v3426 = vshll.u32 %v3425, 23
    %v3427 = vor.u32 4788187, %v3426
    %v3428 = vand.u32 2147483647, %v3427
    %v3430 = vcvt.s32.f32 %v3423
    %v3431 = vmul.f32 %v3430, %v3428
    %v3432 = vxor.u32 %v3431, 2147483648
    %v3433 = vsel %vm3350, %v3432, %v3431
    %v3434 = vsub.s32 4, %v3410
    %v3435 = vsel %vm3350, %v3434, %v3410
    %v3436 = vsel %vm3349, %v535, %v3433
    %v3437 = vsel %vm3349, 0, %v3435
    %v3438 = vcosq.f32.pop %v3436
    %v3439 = vsinq.f32.pop %v3436
    %vm3440 = vweird.f32 %v535
    %v3441 = vadd.s32 %v3437, 3
    %v3442 = vand.u32 %v3441, 3
    %vm3443 = vcmp.lt.s32.totalorder %v3442, 2
    %vm3444 = vcmp.eq.s32.totalorder %v3442, 0
    %v3445 = vxor.u32 %v3439, 2147483648
    %v3446 = vsel %vm3444, %v3438, %v3445
    %vm3447 = vcmp.eq.s32.totalorder %v3442, 2
    %v3448 = vxor.u32 %v3438, 2147483648
    %v3449 = vsel %vm3447, %v3448, %v3439
    %v3450 = vsel %vm3443, %v3446, %v3449
    %v3451 = vsel %vm3440, nan, %v3450
    %v3452 = vand.u32 2147483647, %v536
    %vm3453 = vcmp.le.f32.partialorder %v3452, 0.7853982
    %vm3454 = vcmp.lt.s32.totalorder %v536, 0
    %v3455 = vand.u32 %v536, 2139095040
    %v3456 = vshrl.u32 %v3455, 23
    %v3457 = vsub.s32 %v3456, 127
    %v3458 = vand.u32 2147483647, %v536
    %v3459 = vand.u32 %v3458, 8388607
    %v3460 = vor.u32 %v3459, 8388608
    %v3461 = vsub.s32 0, %v3460
    %v3462 = vadd.s32 %v3457, 1
    %vm3463 = vcmp.gt.s32.totalorder %v3462, 0
    %v3464 = vsel %vm3463, %v3462, 0
    %v3465 = vshrl.u32 %v3464, 5
    %v3466 = vand.u32 %v3464, 31
    %v3467 = vsub.s32 32, %v3466
    %v3468 = vshrl.u32 683565275, %v3467
    %v3469 = vshll.u32 683565275, %v3466
    %v3470 = vshrl.u32 2475754826, %v3467
    %v3471 = vor.u32 %v3469, %v3470
    %v3472 = vshll.u32 2475754826, %v3466
    %v3473 = vshrl.u32 2131351028, %v3467
    %v3474 = vor.u32 %v3472, %v3473
    %v3475 = vshll.u32 2131351028, %v3466
    %v3476 = vshrl.u32 2102212464, %v3467
    %v3477 = vor.u32 %v3475, %v3476
    %v3478 = vshll.u32 2102212464, %v3466
    %v3479 = vshrl.u32 920167782, %v3467
    %v3480 = vor.u32 %v3478, %v3479
    %v3481 = vshll.u32 920167782, %v3466
    %v3482 = vshrl.u32 1326507024, %v3467
    %v3483 = vor.u32 %v3481, %v3482
    %vm3484 = vcmp.lt.s32.totalorder %v3465, 1
    %vm3485 = vcmp.lt.s32.totalorder %v3465, 2
    %vm3486 = vcmp.lt.s32.totalorder %v3465, 3
    %vm3487 = vcmp.lt.s32.totalorder %v3465, 4
    %v3488 = vsel %vm3484, %v3468, %v3471
    %v3489 = vsel %vm3487, %v3477, 2102212464
    %v3490 = vsel %vm3486, %v3474, %v3489
    %v3491 = vsel %vm3485, %v3488, %v3490
    %v3492 = vsel %vm3484, %v3471, %v3474
    %v3493 = vsel %vm3487, %v3480, 920167782
    %v3494 = vsel %vm3486, %v3477, %v3493
    %v3495 = vsel %vm3485, %v3492, %v3494
    %v3496 = vsel %vm3484, %v3474, %v3477
    %v3497 = vsel %vm3487, %v3483, 1326507024
    %v3498 = vsel %vm3486, %v3480, %v3497
    %v3499 = vsel %vm3485, %v3496, %v3498
    %v3500 = vshll.u32 %v3460, 8
    %v3501 = vmul.u32.u64.compose %v3500, %v3499
    %v3502 = vextract.low.u32 %v3501
    %v3503 = vextract.high.u32 %v3501
    %v3504 = vmul.u32.u64.compose %v3500, %v3495
    %v3505 = vextract.low.u32 %v3504
    %v3506 = vextract.high.u32 %v3504
    %v3507 = vmul.u32 %v3500, %v3491
    %v3508 = vadd.s32 %v3503, %v3505
    %vm3509 = vc.u32 %v3503, %v3505
    %v3510 = vadd.s32 %v3506, 1
    %v3511 = vsel %vm3509, %v3510, %v3506
    %v3512 = vadd.s32 %v3507, %v3511
    %v3513 = vadd.s32 %v3512, 536870912
    %v3514 = vshrl.u32 %v3513, 30
    %v3515 = vshll.u32 %v3514, 30
    %v3516 = vsub.s32 %v3512, %v3515
    %vm3517 = vcmp.lt.s32.totalorder %v3516, 0
    %v3518 = vsub.s32 0, %v3516
    %v3519 = vsel %vm3517, %v3518, %v3516
    %v3520 = vclz %v3519
    %v3521 = vsub.s32 %v3520, 2
    %vm3522 = vcmp.gt.s32.totalorder 0, %v3521
    %v3523 = vsel %vm3522, 0, %v3521
    %v3524 = vsub.s32 32, %v3523
    %v3525 = vshll.u32 %v3516, %v3523
    %v3526 = vshrl.u32 %v3508, %v3524
    %v3527 = vor.u32 %v3525, %v3526
    %v3528 = vsub.s32 4294967266, %v3523
    %v3529 = vadd.s32 %v3528, 127
    %v3530 = vshll.u32 %v3529, 23
    %v3531 = vor.u32 4788187, %v3530
    %v3532 = vand.u32 2147483647, %v3531
    %v3534 = vcvt.s32.f32 %v3527
    %v3535 = vmul.f32 %v3534, %v3532
    %v3536 = vxor.u32 %v3535, 2147483648
    %v3537 = vsel %vm3454, %v3536, %v3535
    %v3538 = vsub.s32 4, %v3514
    %v3539 = vsel %vm3454, %v3538, %v3514
    %v3540 = vsel %vm3453, %v536, %v3537
    %v3541 = vsel %vm3453, 0, %v3539
    %v3542 = vcosq.f32.pop %v3540
    %v3543 = vsinq.f32.pop %v3540
    %vm3544 = vweird.f32 %v536
    %v3545 = vadd.s32 %v3541, 3
    %v3546 = vand.u32 %v3545, 3
    %vm3547 = vcmp.lt.s32.totalorder %v3546, 2
    %vm3548 = vcmp.eq.s32.totalorder %v3546, 0
    %v3549 = vxor.u32 %v3543, 2147483648
    %v3550 = vsel %vm3548, %v3542, %v3549
    %vm3551 = vcmp.eq.s32.totalorder %v3546, 2
    %v3552 = vxor.u32 %v3542, 2147483648
    %v3553 = vsel %vm3551, %v3552, %v3543
    %v3554 = vsel %vm3547, %v3550, %v3553
    %v3555 = vsel %vm3544, nan, %v3554
    %v3556 = vand.u32 2147483647, %v537
    %vm3557 = vcmp.le.f32.partialorder %v3556, 0.7853982
    %vm3558 = vcmp.lt.s32.totalorder %v537, 0
    %v3559 = vand.u32 %v537, 2139095040
    %v3560 = vshrl.u32 %v3559, 23
    %v3561 = vsub.s32 %v3560, 127
    %v3562 = vand.u32 2147483647, %v537
    %v3563 = vand.u32 %v3562, 8388607
    %v3564 = vor.u32 %v3563, 8388608
    %v3565 = vsub.s32 0, %v3564
    %v3566 = vadd.s32 %v3561, 1
    %vm3567 = vcmp.gt.s32.totalorder %v3566, 0
    %v3568 = vsel %vm3567, %v3566, 0
    %v3569 = vshrl.u32 %v3568, 5
    %v3570 = vand.u32 %v3568, 31
    %v3571 = vsub.s32 32, %v3570
    %v3572 = vshrl.u32 683565275, %v3571
    %v3573 = vshll.u32 683565275, %v3570
    %v3574 = vshrl.u32 2475754826, %v3571
    %v3575 = vor.u32 %v3573, %v3574
    %v3576 = vshll.u32 2475754826, %v3570
    %v3577 = vshrl.u32 2131351028, %v3571
    %v3578 = vor.u32 %v3576, %v3577
    %v3579 = vshll.u32 2131351028, %v3570
    %v3580 = vshrl.u32 2102212464, %v3571
    %v3581 = vor.u32 %v3579, %v3580
    %v3582 = vshll.u32 2102212464, %v3570
    %v3583 = vshrl.u32 920167782, %v3571
    %v3584 = vor.u32 %v3582, %v3583
    %v3585 = vshll.u32 920167782, %v3570
    %v3586 = vshrl.u32 1326507024, %v3571
    %v3587 = vor.u32 %v3585, %v3586
    %vm3588 = vcmp.lt.s32.totalorder %v3569, 1
    %vm3589 = vcmp.lt.s32.totalorder %v3569, 2
    %vm3590 = vcmp.lt.s32.totalorder %v3569, 3
    %vm3591 = vcmp.lt.s32.totalorder %v3569, 4
    %v3592 = vsel %vm3588, %v3572, %v3575
    %v3593 = vsel %vm3591, %v3581, 2102212464
    %v3594 = vsel %vm3590, %v3578, %v3593
    %v3595 = vsel %vm3589, %v3592, %v3594
    %v3596 = vsel %vm3588, %v3575, %v3578
    %v3597 = vsel %vm3591, %v3584, 920167782
    %v3598 = vsel %vm3590, %v3581, %v3597
    %v3599 = vsel %vm3589, %v3596, %v3598
    %v3600 = vsel %vm3588, %v3578, %v3581
    %v3601 = vsel %vm3591, %v3587, 1326507024
    %v3602 = vsel %vm3590, %v3584, %v3601
    %v3603 = vsel %vm3589, %v3600, %v3602
    %v3604 = vshll.u32 %v3564, 8
    %v3605 = vmul.u32.u64.compose %v3604, %v3603
    %v3606 = vextract.low.u32 %v3605
    %v3607 = vextract.high.u32 %v3605
    %v3608 = vmul.u32.u64.compose %v3604, %v3599
    %v3609 = vextract.low.u32 %v3608
    %v3610 = vextract.high.u32 %v3608
    %v3611 = vmul.u32 %v3604, %v3595
    %v3612 = vadd.s32 %v3607, %v3609
    %vm3613 = vc.u32 %v3607, %v3609
    %v3614 = vadd.s32 %v3610, 1
    %v3615 = vsel %vm3613, %v3614, %v3610
    %v3616 = vadd.s32 %v3611, %v3615
    %v3617 = vadd.s32 %v3616, 536870912
    %v3618 = vshrl.u32 %v3617, 30
    %v3619 = vshll.u32 %v3618, 30
    %v3620 = vsub.s32 %v3616, %v3619
    %vm3621 = vcmp.lt.s32.totalorder %v3620, 0
    %v3622 = vsub.s32 0, %v3620
    %v3623 = vsel %vm3621, %v3622, %v3620
    %v3624 = vclz %v3623
    %v3625 = vsub.s32 %v3624, 2
    %vm3626 = vcmp.gt.s32.totalorder 0, %v3625
    %v3627 = vsel %vm3626, 0, %v3625
    %v3628 = vsub.s32 32, %v3627
    %v3629 = vshll.u32 %v3620, %v3627
    %v3630 = vshrl.u32 %v3612, %v3628
    %v3631 = vor.u32 %v3629, %v3630
    %v3632 = vsub.s32 4294967266, %v3627
    %v3633 = vadd.s32 %v3632, 127
    %v3634 = vshll.u32 %v3633, 23
    %v3635 = vor.u32 4788187, %v3634
    %v3636 = vand.u32 2147483647, %v3635
    %v3638 = vcvt.s32.f32 %v3631
    %v3639 = vmul.f32 %v3638, %v3636
    %v3640 = vxor.u32 %v3639, 2147483648
    %v3641 = vsel %vm3558, %v3640, %v3639
    %v3642 = vsub.s32 4, %v3618
    %v3643 = vsel %vm3558, %v3642, %v3618
    %v3644 = vsel %vm3557, %v537, %v3641
    %v3645 = vsel %vm3557, 0, %v3643
    %v3646 = vcosq.f32.pop %v3644
    %v3647 = vsinq.f32.pop %v3644
    %vm3648 = vweird.f32 %v537
    %v3649 = vadd.s32 %v3645, 3
    %v3650 = vand.u32 %v3649, 3
    %vm3651 = vcmp.lt.s32.totalorder %v3650, 2
    %vm3652 = vcmp.eq.s32.totalorder %v3650, 0
    %v3653 = vxor.u32 %v3647, 2147483648
    %v3654 = vsel %vm3652, %v3646, %v3653
    %vm3655 = vcmp.eq.s32.totalorder %v3650, 2
    %v3656 = vxor.u32 %v3646, 2147483648
    %v3657 = vsel %vm3655, %v3656, %v3647
    %v3658 = vsel %vm3651, %v3654, %v3657
    %v3659 = vsel %vm3648, nan, %v3658
    %v3660 = vand.u32 2147483647, %v538
    %vm3661 = vcmp.le.f32.partialorder %v3660, 0.7853982
    %vm3662 = vcmp.lt.s32.totalorder %v538, 0
    %v3663 = vand.u32 %v538, 2139095040
    %v3664 = vshrl.u32 %v3663, 23
    %v3665 = vsub.s32 %v3664, 127
    %v3666 = vand.u32 2147483647, %v538
    %v3667 = vand.u32 %v3666, 8388607
    %v3668 = vor.u32 %v3667, 8388608
    %v3669 = vsub.s32 0, %v3668
    %v3670 = vadd.s32 %v3665, 1
    %vm3671 = vcmp.gt.s32.totalorder %v3670, 0
    %v3672 = vsel %vm3671, %v3670, 0
    %v3673 = vshrl.u32 %v3672, 5
    %v3674 = vand.u32 %v3672, 31
    %v3675 = vsub.s32 32, %v3674
    %v3676 = vshrl.u32 683565275, %v3675
    %v3677 = vshll.u32 683565275, %v3674
    %v3678 = vshrl.u32 2475754826, %v3675
    %v3679 = vor.u32 %v3677, %v3678
    %v3680 = vshll.u32 2475754826, %v3674
    %v3681 = vshrl.u32 2131351028, %v3675
    %v3682 = vor.u32 %v3680, %v3681
    %v3683 = vshll.u32 2131351028, %v3674
    %v3684 = vshrl.u32 2102212464, %v3675
    %v3685 = vor.u32 %v3683, %v3684
    %v3686 = vshll.u32 2102212464, %v3674
    %v3687 = vshrl.u32 920167782, %v3675
    %v3688 = vor.u32 %v3686, %v3687
    %v3689 = vshll.u32 920167782, %v3674
    %v3690 = vshrl.u32 1326507024, %v3675
    %v3691 = vor.u32 %v3689, %v3690
    %vm3692 = vcmp.lt.s32.totalorder %v3673, 1
    %vm3693 = vcmp.lt.s32.totalorder %v3673, 2
    %vm3694 = vcmp.lt.s32.totalorder %v3673, 3
    %vm3695 = vcmp.lt.s32.totalorder %v3673, 4
    %v3696 = vsel %vm3692, %v3676, %v3679
    %v3697 = vsel %vm3695, %v3685, 2102212464
    %v3698 = vsel %vm3694, %v3682, %v3697
    %v3699 = vsel %vm3693, %v3696, %v3698
    %v3700 = vsel %vm3692, %v3679, %v3682
    %v3701 = vsel %vm3695, %v3688, 920167782
    %v3702 = vsel %vm3694, %v3685, %v3701
    %v3703 = vsel %vm3693, %v3700, %v3702
    %v3704 = vsel %vm3692, %v3682, %v3685
    %v3705 = vsel %vm3695, %v3691, 1326507024
    %v3706 = vsel %vm3694, %v3688, %v3705
    %v3707 = vsel %vm3693, %v3704, %v3706
    %v3708 = vshll.u32 %v3668, 8
    %v3709 = vmul.u32.u64.compose %v3708, %v3707
    %v3710 = vextract.low.u32 %v3709
    %v3711 = vextract.high.u32 %v3709
    %v3712 = vmul.u32.u64.compose %v3708, %v3703
    %v3713 = vextract.low.u32 %v3712
    %v3714 = vextract.high.u32 %v3712
    %v3715 = vmul.u32 %v3708, %v3699
    %v3716 = vadd.s32 %v3711, %v3713
    %vm3717 = vc.u32 %v3711, %v3713
    %v3718 = vadd.s32 %v3714, 1
    %v3719 = vsel %vm3717, %v3718, %v3714
    %v3720 = vadd.s32 %v3715, %v3719
    %v3721 = vadd.s32 %v3720, 536870912
    %v3722 = vshrl.u32 %v3721, 30
    %v3723 = vshll.u32 %v3722, 30
    %v3724 = vsub.s32 %v3720, %v3723
    %vm3725 = vcmp.lt.s32.totalorder %v3724, 0
    %v3726 = vsub.s32 0, %v3724
    %v3727 = vsel %vm3725, %v3726, %v3724
    %v3728 = vclz %v3727
    %v3729 = vsub.s32 %v3728, 2
    %vm3730 = vcmp.gt.s32.totalorder 0, %v3729
    %v3731 = vsel %vm3730, 0, %v3729
    %v3732 = vsub.s32 32, %v3731
    %v3733 = vshll.u32 %v3724, %v3731
    %v3734 = vshrl.u32 %v3716, %v3732
    %v3735 = vor.u32 %v3733, %v3734
    %v3736 = vsub.s32 4294967266, %v3731
    %v3737 = vadd.s32 %v3736, 127
    %v3738 = vshll.u32 %v3737, 23
    %v3739 = vor.u32 4788187, %v3738
    %v3740 = vand.u32 2147483647, %v3739
    %v3742 = vcvt.s32.f32 %v3735
    %v3743 = vmul.f32 %v3742, %v3740
    %v3744 = vxor.u32 %v3743, 2147483648
    %v3745 = vsel %vm3662, %v3744, %v3743
    %v3746 = vsub.s32 4, %v3722
    %v3747 = vsel %vm3662, %v3746, %v3722
    %v3748 = vsel %vm3661, %v538, %v3745
    %v3749 = vsel %vm3661, 0, %v3747
    %v3750 = vcosq.f32.pop %v3748
    %v3751 = vsinq.f32.pop %v3748
    %vm3752 = vweird.f32 %v538
    %v3753 = vadd.s32 %v3749, 3
    %v3754 = vand.u32 %v3753, 3
    %vm3755 = vcmp.lt.s32.totalorder %v3754, 2
    %vm3756 = vcmp.eq.s32.totalorder %v3754, 0
    %v3757 = vxor.u32 %v3751, 2147483648
    %v3758 = vsel %vm3756, %v3750, %v3757
    %vm3759 = vcmp.eq.s32.totalorder %v3754, 2
    %v3760 = vxor.u32 %v3750, 2147483648
    %v3761 = vsel %vm3759, %v3760, %v3751
    %v3762 = vsel %vm3755, %v3758, %v3761
    %v3763 = vsel %vm3752, nan, %v3762
    %v3764 = vand.u32 2147483647, %v539
    %vm3765 = vcmp.le.f32.partialorder %v3764, 0.7853982
    %vm3766 = vcmp.lt.s32.totalorder %v539, 0
    %v3767 = vand.u32 %v539, 2139095040
    %v3768 = vshrl.u32 %v3767, 23
    %v3769 = vsub.s32 %v3768, 127
    %v3770 = vand.u32 2147483647, %v539
    %v3771 = vand.u32 %v3770, 8388607
    %v3772 = vor.u32 %v3771, 8388608
    %v3773 = vsub.s32 0, %v3772
    %v3774 = vadd.s32 %v3769, 1
    %vm3775 = vcmp.gt.s32.totalorder %v3774, 0
    %v3776 = vsel %vm3775, %v3774, 0
    %v3777 = vshrl.u32 %v3776, 5
    %v3778 = vand.u32 %v3776, 31
    %v3779 = vsub.s32 32, %v3778
    %v3780 = vshrl.u32 683565275, %v3779
    %v3781 = vshll.u32 683565275, %v3778
    %v3782 = vshrl.u32 2475754826, %v3779
    %v3783 = vor.u32 %v3781, %v3782
    %v3784 = vshll.u32 2475754826, %v3778
    %v3785 = vshrl.u32 2131351028, %v3779
    %v3786 = vor.u32 %v3784, %v3785
    %v3787 = vshll.u32 2131351028, %v3778
    %v3788 = vshrl.u32 2102212464, %v3779
    %v3789 = vor.u32 %v3787, %v3788
    %v3790 = vshll.u32 2102212464, %v3778
    %v3791 = vshrl.u32 920167782, %v3779
    %v3792 = vor.u32 %v3790, %v3791
    %v3793 = vshll.u32 920167782, %v3778
    %v3794 = vshrl.u32 1326507024, %v3779
    %v3795 = vor.u32 %v3793, %v3794
    %vm3796 = vcmp.lt.s32.totalorder %v3777, 1
    %vm3797 = vcmp.lt.s32.totalorder %v3777, 2
    %vm3798 = vcmp.lt.s32.totalorder %v3777, 3
    %vm3799 = vcmp.lt.s32.totalorder %v3777, 4
    %v3800 = vsel %vm3796, %v3780, %v3783
    %v3801 = vsel %vm3799, %v3789, 2102212464
    %v3802 = vsel %vm3798, %v3786, %v3801
    %v3803 = vsel %vm3797, %v3800, %v3802
    %v3804 = vsel %vm3796, %v3783, %v3786
    %v3805 = vsel %vm3799, %v3792, 920167782
    %v3806 = vsel %vm3798, %v3789, %v3805
    %v3807 = vsel %vm3797, %v3804, %v3806
    %v3808 = vsel %vm3796, %v3786, %v3789
    %v3809 = vsel %vm3799, %v3795, 1326507024
    %v3810 = vsel %vm3798, %v3792, %v3809
    %v3811 = vsel %vm3797, %v3808, %v3810
    %v3812 = vshll.u32 %v3772, 8
    %v3813 = vmul.u32.u64.compose %v3812, %v3811
    %v3814 = vextract.low.u32 %v3813
    %v3815 = vextract.high.u32 %v3813
    %v3816 = vmul.u32.u64.compose %v3812, %v3807
    %v3817 = vextract.low.u32 %v3816
    %v3818 = vextract.high.u32 %v3816
    %v3819 = vmul.u32 %v3812, %v3803
    %v3820 = vadd.s32 %v3815, %v3817
    %vm3821 = vc.u32 %v3815, %v3817
    %v3822 = vadd.s32 %v3818, 1
    %v3823 = vsel %vm3821, %v3822, %v3818
    %v3824 = vadd.s32 %v3819, %v3823
    %v3825 = vadd.s32 %v3824, 536870912
    %v3826 = vshrl.u32 %v3825, 30
    %v3827 = vshll.u32 %v3826, 30
    %v3828 = vsub.s32 %v3824, %v3827
    %vm3829 = vcmp.lt.s32.totalorder %v3828, 0
    %v3830 = vsub.s32 0, %v3828
    %v3831 = vsel %vm3829, %v3830, %v3828
    %v3832 = vclz %v3831
    %v3833 = vsub.s32 %v3832, 2
    %vm3834 = vcmp.gt.s32.totalorder 0, %v3833
    %v3835 = vsel %vm3834, 0, %v3833
    %v3836 = vsub.s32 32, %v3835
    %v3837 = vshll.u32 %v3828, %v3835
    %v3838 = vshrl.u32 %v3820, %v3836
    %v3839 = vor.u32 %v3837, %v3838
    %v3840 = vsub.s32 4294967266, %v3835
    %v3841 = vadd.s32 %v3840, 127
    %v3842 = vshll.u32 %v3841, 23
    %v3843 = vor.u32 4788187, %v3842
    %v3844 = vand.u32 2147483647, %v3843
    %v3846 = vcvt.s32.f32 %v3839
    %v3847 = vmul.f32 %v3846, %v3844
    %v3848 = vxor.u32 %v3847, 2147483648
    %v3849 = vsel %vm3766, %v3848, %v3847
    %v3850 = vsub.s32 4, %v3826
    %v3851 = vsel %vm3766, %v3850, %v3826
    %v3852 = vsel %vm3765, %v539, %v3849
    %v3853 = vsel %vm3765, 0, %v3851
    %v3854 = vcosq.f32.pop %v3852
    %v3855 = vsinq.f32.pop %v3852
    %vm3856 = vweird.f32 %v539
    %v3857 = vadd.s32 %v3853, 3
    %v3858 = vand.u32 %v3857, 3
    %vm3859 = vcmp.lt.s32.totalorder %v3858, 2
    %vm3860 = vcmp.eq.s32.totalorder %v3858, 0
    %v3861 = vxor.u32 %v3855, 2147483648
    %v3862 = vsel %vm3860, %v3854, %v3861
    %vm3863 = vcmp.eq.s32.totalorder %v3858, 2
    %v3864 = vxor.u32 %v3854, 2147483648
    %v3865 = vsel %vm3863, %v3864, %v3855
    %v3866 = vsel %vm3859, %v3862, %v3865
    %v3867 = vsel %vm3856, nan, %v3866
    %3868 = vst [vmem:[#allocation2] sm:$0xff] %v643
    %3869 = vst [vmem:[#allocation2 + $0x8] sm:$0xff] %v747
    %3870 = vst [vmem:[#allocation2 + $0x10] sm:$0xff] %v851
    %3871 = vst [vmem:[#allocation2 + $0x18] sm:$0xff] %v955
    %3872 = vst [vmem:[#allocation2 + $0x20] sm:$0xff] %v1059
    %3873 = vst [vmem:[#allocation2 + $0x28] sm:$0xff] %v1163
    %3874 = vst [vmem:[#allocation2 + $0x30] sm:$0xff] %v1267
    %3875 = vst [vmem:[#allocation2 + $0x38] sm:$0xff] %v1371
    %3876 = vst [vmem:[#allocation2 + $0x40] sm:$0xff] %v1475
    %3877 = vst [vmem:[#allocation2 + $0x48] sm:$0xff] %v1579
    %3878 = vst [vmem:[#allocation2 + $0x50] sm:$0xff] %v1683
    %3879 = vst [vmem:[#allocation2 + $0x58] sm:$0xff] %v1787
    %3880 = vst [vmem:[#allocation2 + $0x60] sm:$0xff] %v1891
    %3881 = vst [vmem:[#allocation2 + $0x68] sm:$0xff] %v1995
    %3882 = vst [vmem:[#allocation2 + $0x70] sm:$0xff] %v2099
    %3883 = vst [vmem:[#allocation2 + $0x78] sm:$0xff] %v2203
    %3884 = vst [vmem:[#allocation2 + $0x80] sm:$0xff] %v2307
    %3885 = vst [vmem:[#allocation2 + $0x88] sm:$0xff] %v2411
    %3886 = vst [vmem:[#allocation2 + $0x90] sm:$0xff] %v2515
    %3887 = vst [vmem:[#allocation2 + $0x98] sm:$0xff] %v2619
    %3888 = vst [vmem:[#allocation2 + $0xa0] sm:$0xff] %v2723
    %3889 = vst [vmem:[#allocation2 + $0xa8] sm:$0xff] %v2827
    %3890 = vst [vmem:[#allocation2 + $0xb0] sm:$0xff] %v2931
    %3891 = vst [vmem:[#allocation2 + $0xb8] sm:$0xff] %v3035
    %3892 = vst [vmem:[#allocation2 + $0xc0] sm:$0xff] %v3139
    %3893 = vst [vmem:[#allocation2 + $0xc8] sm:$0xff] %v3243
    %3894 = vst [vmem:[#allocation2 + $0xd0] sm:$0xff] %v3347
    %3895 = vst [vmem:[#allocation2 + $0xd8] sm:$0xff] %v3451
    %3896 = vst [vmem:[#allocation2 + $0xe0] sm:$0xff] %v3555
    %3897 = vst [vmem:[#allocation2 + $0xe8] sm:$0xff] %v3659
    %3898 = vst [vmem:[#allocation2 + $0xf0] sm:$0xff] %v3763
    %3899 = vst [vmem:[#allocation2 + $0xf8] sm:$0xff] %v3867
    // Predicated region
    $region14: #{tpu_custom_call.1} parent=1 // pred_check
      _
    $region15: #{tpu_custom_call.1} parent=1 // pred_check_branch
      %3901 = sbr.rel (0) target = $region17
    $region16: #{tpu_custom_call.1} parent=1 // pred_region
      %s3903 = ssub.s32 4096, 4096
      %3904 = vsyncadd [#allocation3], %s3903
      %s3905 = sshll.u32 [#allocation2], 4
      %s3906 = int_to_ptr.vmem [resolvable:$true] %s3905
      %3911 = dma.vmem_to_hbm [thread:$0]  %s3906, 4096, %s3, [#allocation3], 128, 128, 8
    $region17: #{tpu_custom_call.1} parent=1 // pred_fallthru
      _
    // Predicated region
    $region18: #{tpu_custom_call.1} parent=1 // pred_check
      _
    $region19: #{tpu_custom_call.1} parent=1 // pred_check_branch
      %3913 = sbr.rel (0) target = $region21
    $region20: #{tpu_custom_call.1} parent=1 // pred_region
      %3914 = dma.done [#allocation3], 4096
    $region21: #{tpu_custom_call.1} parent=1 // pred_fallthru
      _
    %3915 = vsyncpa [#allocation3], 1

</llo_original>
